<compile_context>
chip_gen: v5e
topology: v5e:2x2
jax: 0.10.0
libtpu: 0.0.40
codegen_flags: <defaults>
</compile_context>

<pallas_src>
import math

import jax
import jax.numpy as jnp
from jax import lax
from jax.experimental import pallas as pl
from jax.experimental.pallas import tpu as pltpu

_OUT_PAD = 128          # lane-dense padded logit width (true #classes = 2)
_INV_SQRT2 = 1.0 / math.sqrt(2.0)


def _gelu(x):
    # exact (erf) GELU, matching torch.nn.GELU() default
    return 0.5 * x * (1.0 + lax.erf(x * _INV_SQRT2))


def _predictor_lg_kernel(x_ref, policy_ref,
                         ln_g_ref, ln_b_ref,
                         w0l_ref, w0g_ref, b0l_ref, b0g_ref,
                         w1l_ref, w1g_ref, b1_ref,
                         w2_ref, b2_ref,
                         w3_ref, b3_ref,
                         out_ref):
    bt, n, c = x_ref.shape
    rows = bt * n
    half = c // 2

    x = x_ref[...].reshape(rows, c).astype(jnp.float32)      # (rows, C)
    policy = policy_ref[...].astype(jnp.float32)              # (bt, n, 1)

    # ---- in_conv: LayerNorm (f32) -> Linear (bf16 MXU) -> GELU (f32) ----
    mu = jnp.mean(x, axis=-1, keepdims=True)
    xc = x - mu
    var = jnp.mean(xc * xc, axis=-1, keepdims=True)
    xn = xc * lax.rsqrt(var + 1e-5) * ln_g_ref[...] + ln_b_ref[...]
    xn_bf = xn.astype(jnp.bfloat16)

    # w0 pre-split by output half: avoids slicing h across the lane axis.
    h_local = _gelu(
        jnp.dot(xn_bf, w0l_ref[...], preferred_element_type=jnp.float32)
        + b0l_ref[...])                                       # (rows, C/2)
    h_global = _gelu(
        jnp.dot(xn_bf, w0g_ref[...], preferred_element_type=jnp.float32)
        + b0g_ref[...])                                       # (rows, C/2)

    # ---- policy-weighted global pooling (per batch element) ----
    hg_w = h_global.reshape(bt, n, half) * policy             # (bt, n, C/2)
    num = jnp.sum(hg_w, axis=1, keepdims=True)                # (bt, 1, C/2)
    den = jnp.sum(policy, axis=1, keepdims=True)              # (bt, 1, 1)
    global_x = num * pl.reciprocal(den, approx=True)          # (bt, 1, C/2)
    global_b = jnp.broadcast_to(
        global_x.astype(jnp.bfloat16), (bt, n, half)).reshape(rows, half)

    # ---- out_conv head ----
    # cat([local, global]) @ W1 == local @ W1_local + global @ W1_global
    y1 = _gelu(
        jnp.dot(h_local.astype(jnp.bfloat16), w1l_ref[...],
                preferred_element_type=jnp.float32)
        + jnp.dot(global_b, w1g_ref[...],
                  preferred_element_type=jnp.float32)
        + b1_ref[...])                                        # (rows, C/2)

    y2 = _gelu(
        jnp.dot(y1.astype(jnp.bfloat16), w2_ref[...],
                preferred_element_type=jnp.float32)
        + b2_ref[...])                                        # (rows, C/4)

    y3 = (jnp.dot(y2.astype(jnp.bfloat16), w3_ref[...],
                  preferred_element_type=jnp.float32)
          + b3_ref[...])                                      # (rows, 128)

    # ---- LogSoftmax over the 2 real classes; padded lanes masked out ----
    lane = lax.broadcasted_iota(jnp.int32, y3.shape, 1)
    y3 = jnp.where(lane < 2, y3, jnp.float32(-1e30))
    m = jnp.max(y3, axis=-1, keepdims=True)
    z = y3 - m
    lse = jnp.log(jnp.sum(jnp.exp(z), axis=-1, keepdims=True))
    out = z - lse

    out_ref[...] = out.reshape(bt, n, _OUT_PAD).astype(out_ref.dtype)


def _pick_block_b(batch, n_tokens):
    """Batch elements per grid step: aim for >=256 matmul rows, keep >=2 steps."""
    bt = max(1, min(batch, max(1, 256 // max(n_tokens, 1))))
    while batch % bt:
        bt -= 1
    if bt == batch and batch >= 2:
        for cand in range(batch // 2, 0, -1):
            if batch % cand == 0:
                bt = cand
                break
    return bt


def predictor_lg(x, policy, params, block_b=None):
    B, N, C = x.shape
    half, quarter = C // 2, C // 4
    (ln_g, ln_b, w0, b0, w1, b1, w2, b2, w3, b3) = params

    bt = block_b if block_b is not None else _pick_block_b(B, N)
    assert B % bt == 0, "batch must be divisible by the batch tile"
    grid = (B // bt,)

    bf16, f32 = jnp.bfloat16, jnp.float32

    # Pre-split / pad / cast weights once in the wrapper (no lane-crossing
    # slices inside the kernel; bf16 halves weight DMA bytes).
    w0l = w0[:, :half].astype(bf16)
    w0g = w0[:, half:].astype(bf16)
    b0l = b0[:, :half].astype(f32)
    b0g = b0[:, half:].astype(f32)
    w1l = w1[:half, :].astype(bf16)
    w1g = w1[half:, :].astype(bf16)
    w2b = w2.astype(bf16)
    w3p = jnp.zeros((quarter, _OUT_PAD), f32).at[:, :2].set(w3).astype(bf16)
    b3p = jnp.zeros((1, _OUT_PAD), f32).at[:, :2].set(b3)

    weights = (ln_g.astype(f32), ln_b.astype(f32),
               w0l, w0g, b0l, b0g,
               w1l, w1g, b1.astype(f32),
               w2b, b2.astype(f32),
               w3p, b3p)

    def rep_spec(arr):
        # full-array block, replicated (fetched once) across the batch grid
        nd = arr.ndim
        return pl.BlockSpec(arr.shape, lambda g, _nd=nd: (0,) * _nd)

    grid_spec = pl.GridSpec(
        grid=grid,
        in_specs=[
            pl.BlockSpec((bt, N, C), lambda g: (g, 0, 0)),        # x
            pl.BlockSpec((bt, N, 1), lambda g: (g, 0, 0)),        # policy
            *[rep_spec(w) for w in weights],
        ],
        out_specs=pl.BlockSpec((bt, N, _OUT_PAD), lambda g: (g, 0, 0)),
    )

    out_padded = pl.pallas_call(
        _predictor_lg_kernel,
        out_shape=jax.ShapeDtypeStruct((B, N, _OUT_PAD), jnp.float32),
        grid_spec=grid_spec,
        compiler_params=pltpu.CompilerParams(
            dimension_semantics=("parallel",),
            vmem_limit_bytes=32 * 1024 * 1024),
    )(x.astype(f32), policy.astype(f32), *weights)

    return out_padded[..., :2]


def init_params(key, embed_dim):
    C = embed_dim
    ks = jax.random.split(key, 8)

    def lin(k, fan_in, fan_out):
        # weight stored transposed relative to torch (so kernel does x @ W)
        w = jax.random.normal(k, (fan_in, fan_out), jnp.float32) * 0.02
        b = jnp.zeros((1, fan_out), jnp.float32)
        return w, b

    ln_g = jnp.ones((1, C), jnp.float32)
    ln_b = jnp.zeros((1, C), jnp.float32)
    w0, b0 = lin(ks[0], C, C)
    w1, b1 = lin(ks[1], C, C // 2)
    w2, b2 = lin(ks[2], C // 2, C // 4)
    w3, b3 = lin(ks[3], C // 4, 2)
    # nonzero biases to make the test less trivial
    b0 = 0.01 * jax.random.normal(ks[4], b0.shape, jnp.float32)
    b1 = 0.01 * jax.random.normal(ks[5], b1.shape, jnp.float32)
    b2 = 0.01 * jax.random.normal(ks[6], b2.shape, jnp.float32)
    b3 = 0.01 * jax.random.normal(ks[7], b3.shape, jnp.float32)
    return (ln_g, ln_b, w0, b0, w1, b1, w2, b2, w3, b3)


def predictor_lg_ref(x, policy, params):
    """Pure-JAX f32 reference mirroring the PyTorch forward exactly."""
    (ln_g, ln_b, w0, b0, w1, b1, w2, b2, w3, b3) = params
    mu = jnp.mean(x, -1, keepdims=True)
    var = jnp.mean((x - mu) ** 2, -1, keepdims=True)
    xn = (x - mu) / jnp.sqrt(var + 1e-5) * ln_g[0] + ln_b[0]
    h = jax.nn.gelu(xn @ w0 + b0[0], approximate=False)
    B, N, C = h.shape
    local_x = h[:, :, :C // 2]
    global_x = jnp.sum(h[:, :, C // 2:] * policy, axis=1, keepdims=True) / \
        jnp.sum(policy, axis=1, keepdims=True)
    cat = jnp.concatenate(
        [local_x, jnp.broadcast_to(global_x, (B, N, C // 2))], axis=-1)
    y = jax.nn.gelu(cat @ w1 + b1[0], approximate=False)
    y = jax.nn.gelu(y @ w2 + b2[0], approximate=False)
    y = y @ w3 + b3[0]
    return jax.nn.log_softmax(y, axis=-1)


if __name__ == "__main__":
    key = jax.random.PRNGKey(0)
    k_x, k_p, k_w = jax.random.split(key, 3)

    B, N, C = 4, 64, 128
    x = jax.random.normal(k_x, (B, N, C), jnp.float32)
    policy = (jax.random.uniform(k_p, (B, N, 1)) > 0.3).astype(jnp.float32)
    policy = policy.at[:, 0, :].set(1.0)  # guarantee non-zero denominator

    params = init_params(k_w, C)

    out = predictor_lg(x, policy, params)
    out = jax.block_until_ready(out)

    ref = predictor_lg_ref(x, policy, params)
    assert out.shape == (B, N, 2)
    err = jnp.max(jnp.abs(out - ref))
    # bf16 MXU operands (f32 accumulation) -> compare at bf16-level tolerance
    assert jnp.allclose(out, ref, atol=2e-2, rtol=2e-2), f"max err {err}"
    print("KERNEL_OK")
</pallas_src>

<mosaic_0001>
module attributes {stable_mosaic.version = 11 : i64} {
  func.func @_predictor_lg_kernel(%arg0: i32, %arg1: memref<2x64x128xf32, #tpu.memory_space<vmem>>, %arg2: memref<2x64x1xf32, #tpu.memory_space<vmem>>, %arg3: memref<1x128xf32, #tpu.memory_space<vmem>>, %arg4: memref<1x128xf32, #tpu.memory_space<vmem>>, %arg5: memref<128x64xbf16, #tpu.memory_space<vmem>>, %arg6: memref<128x64xbf16, #tpu.memory_space<vmem>>, %arg7: memref<1x64xf32, #tpu.memory_space<vmem>>, %arg8: memref<1x64xf32, #tpu.memory_space<vmem>>, %arg9: memref<64x64xbf16, #tpu.memory_space<vmem>>, %arg10: memref<64x64xbf16, #tpu.memory_space<vmem>>, %arg11: memref<1x64xf32, #tpu.memory_space<vmem>>, %arg12: memref<64x32xbf16, #tpu.memory_space<vmem>>, %arg13: memref<1x32xf32, #tpu.memory_space<vmem>>, %arg14: memref<32x128xbf16, #tpu.memory_space<vmem>>, %arg15: memref<1x128xf32, #tpu.memory_space<vmem>>, %arg16: memref<2x64x128xf32, #tpu.memory_space<vmem>>) attributes {dimension_semantics = [#tpu.dimension_semantics<parallel>], iteration_bounds = array<i64: 2>, scalar_prefetch = 0 : i64, scratch_operands = 0 : i64, tpu.core_type = #tpu.core_type<tc>, window_params = [{transform_indices = @transform_0, window_bounds = array<i64: 2, 64, 128>}, {transform_indices = @transform_1, window_bounds = array<i64: 2, 64, 1>}, {pipeline_mode = #tpu.pipeline_mode<synchronous>, transform_indices = @transform_2, window_bounds = array<i64: 1, 128>}, {pipeline_mode = #tpu.pipeline_mode<synchronous>, transform_indices = @transform_3, window_bounds = array<i64: 1, 128>}, {pipeline_mode = #tpu.pipeline_mode<synchronous>, transform_indices = @transform_4, window_bounds = array<i64: 128, 64>}, {pipeline_mode = #tpu.pipeline_mode<synchronous>, transform_indices = @transform_5, window_bounds = array<i64: 128, 64>}, {pipeline_mode = #tpu.pipeline_mode<synchronous>, transform_indices = @transform_6, window_bounds = array<i64: 1, 64>}, {pipeline_mode = #tpu.pipeline_mode<synchronous>, transform_indices = @transform_7, window_bounds = array<i64: 1, 64>}, {pipeline_mode = #tpu.pipeline_mode<synchronous>, transform_indices = @transform_8, window_bounds = array<i64: 64, 64>}, {pipeline_mode = #tpu.pipeline_mode<synchronous>, transform_indices = @transform_9, window_bounds = array<i64: 64, 64>}, {pipeline_mode = #tpu.pipeline_mode<synchronous>, transform_indices = @transform_10, window_bounds = array<i64: 1, 64>}, {pipeline_mode = #tpu.pipeline_mode<synchronous>, transform_indices = @transform_11, window_bounds = array<i64: 64, 32>}, {pipeline_mode = #tpu.pipeline_mode<synchronous>, transform_indices = @transform_12, window_bounds = array<i64: 1, 32>}, {pipeline_mode = #tpu.pipeline_mode<synchronous>, transform_indices = @transform_13, window_bounds = array<i64: 32, 128>}, {pipeline_mode = #tpu.pipeline_mode<synchronous>, transform_indices = @transform_14, window_bounds = array<i64: 1, 128>}, {transform_indices = @transform_15, window_bounds = array<i64: 2, 64, 128>}]} {
    %c0 = arith.constant 0 : index
    %c0_0 = arith.constant 0 : index
    %c0_1 = arith.constant 0 : index
    %0 = vector.load %arg1[%c0, %c0_0, %c0_1] : memref<2x64x128xf32, #tpu.memory_space<vmem>>, vector<2x64x128xf32>
    %1 = vector.shape_cast %0 : vector<2x64x128xf32> to vector<128x128xf32>
    %c0_2 = arith.constant 0 : index
    %c0_3 = arith.constant 0 : index
    %c0_4 = arith.constant 0 : index
    %2 = vector.load %arg2[%c0_2, %c0_3, %c0_4] : memref<2x64x1xf32, #tpu.memory_space<vmem>>, vector<2x64x1xf32>
    %cst = arith.constant dense<0.000000e+00> : vector<128xf32>
    %3 = vector.multi_reduction <add>, %1, %cst [1] : vector<128x128xf32> to vector<128xf32>
    %4 = vector.shape_cast %3 : vector<128xf32> to vector<128x1xf32>
    %cst_5 = arith.constant 1.280000e+02 : f32
    %5 = vector.broadcast %cst_5 : f32 to vector<128x1xf32>
    %6 = arith.divf %4, %5 : vector<128x1xf32>
    %7 = vector.broadcast %6 : vector<128x1xf32> to vector<128x128xf32>
    %8 = arith.subf %1, %7 : vector<128x128xf32>
    %9 = arith.mulf %8, %8 : vector<128x128xf32>
    %cst_6 = arith.constant dense<0.000000e+00> : vector<128xf32>
    %10 = vector.multi_reduction <add>, %9, %cst_6 [1] : vector<128x128xf32> to vector<128xf32>
    %11 = vector.shape_cast %10 : vector<128xf32> to vector<128x1xf32>
    %cst_7 = arith.constant 1.280000e+02 : f32
    %12 = vector.broadcast %cst_7 : f32 to vector<128x1xf32>
    %13 = arith.divf %11, %12 : vector<128x1xf32>
    %cst_8 = arith.constant 9.99999974E-6 : f32
    %14 = vector.broadcast %cst_8 : f32 to vector<128x1xf32>
    %15 = arith.addf %13, %14 : vector<128x1xf32>
    %16 = math.rsqrt %15 : vector<128x1xf32>
    %17 = vector.broadcast %16 : vector<128x1xf32> to vector<128x128xf32>
    %18 = arith.mulf %8, %17 : vector<128x128xf32>
    %c0_9 = arith.constant 0 : index
    %c0_10 = arith.constant 0 : index
    %19 = vector.load %arg3[%c0_9, %c0_10] : memref<1x128xf32, #tpu.memory_space<vmem>>, vector<1x128xf32>
    %20 = vector.broadcast %19 : vector<1x128xf32> to vector<128x128xf32>
    %21 = arith.mulf %18, %20 : vector<128x128xf32>
    %c0_11 = arith.constant 0 : index
    %c0_12 = arith.constant 0 : index
    %22 = vector.load %arg4[%c0_11, %c0_12] : memref<1x128xf32, #tpu.memory_space<vmem>>, vector<1x128xf32>
    %23 = vector.broadcast %22 : vector<1x128xf32> to vector<128x128xf32>
    %24 = arith.addf %21, %23 : vector<128x128xf32>
    %25 = arith.truncf %24 : vector<128x128xf32> to vector<128x128xbf16>
    %c0_13 = arith.constant 0 : index
    %c0_14 = arith.constant 0 : index
    %26 = vector.load %arg5[%c0_13, %c0_14] : memref<128x64xbf16, #tpu.memory_space<vmem>>, vector<128x64xbf16>
    %cst_15 = arith.constant dense<0.000000e+00> : vector<128x64xf32>
    %27 = tpu.matmul %25, %26, %cst_15 {dimension_numbers = #tpu.dot_dimension_numbers<[1], [0], [0], [1], [0, 0, 1, 1], [], []>} : vector<128x128xbf16>, vector<128x64xbf16>, vector<128x64xf32> -> vector<128x64xf32>
    %c0_16 = arith.constant 0 : index
    %c0_17 = arith.constant 0 : index
    %28 = vector.load %arg7[%c0_16, %c0_17] : memref<1x64xf32, #tpu.memory_space<vmem>>, vector<1x64xf32>
    %29 = vector.broadcast %28 : vector<1x64xf32> to vector<128x64xf32>
    %30 = arith.addf %27, %29 : vector<128x64xf32>
    %cst_18 = arith.constant 5.000000e-01 : f32
    %31 = vector.broadcast %cst_18 : f32 to vector<128x64xf32>
    %32 = arith.mulf %31, %30 : vector<128x64xf32>
    %cst_19 = arith.constant 0.707106769 : f32
    %33 = vector.broadcast %cst_19 : f32 to vector<128x64xf32>
    %34 = arith.mulf %30, %33 : vector<128x64xf32>
    %35 = math.erf %34 : vector<128x64xf32>
    %cst_20 = arith.constant 1.000000e+00 : f32
    %36 = vector.broadcast %cst_20 : f32 to vector<128x64xf32>
    %37 = arith.addf %36, %35 : vector<128x64xf32>
    %38 = arith.mulf %32, %37 : vector<128x64xf32>
    %c0_21 = arith.constant 0 : index
    %c0_22 = arith.constant 0 : index
    %39 = vector.load %arg6[%c0_21, %c0_22] : memref<128x64xbf16, #tpu.memory_space<vmem>>, vector<128x64xbf16>
    %cst_23 = arith.constant dense<0.000000e+00> : vector<128x64xf32>
    %40 = tpu.matmul %25, %39, %cst_23 {dimension_numbers = #tpu.dot_dimension_numbers<[1], [0], [0], [1], [0, 0, 1, 1], [], []>} : vector<128x128xbf16>, vector<128x64xbf16>, vector<128x64xf32> -> vector<128x64xf32>
    %c0_24 = arith.constant 0 : index
    %c0_25 = arith.constant 0 : index
    %41 = vector.load %arg8[%c0_24, %c0_25] : memref<1x64xf32, #tpu.memory_space<vmem>>, vector<1x64xf32>
    %42 = vector.broadcast %41 : vector<1x64xf32> to vector<128x64xf32>
    %43 = arith.addf %40, %42 : vector<128x64xf32>
    %cst_26 = arith.constant 5.000000e-01 : f32
    %44 = vector.broadcast %cst_26 : f32 to vector<128x64xf32>
    %45 = arith.mulf %44, %43 : vector<128x64xf32>
    %cst_27 = arith.constant 0.707106769 : f32
    %46 = vector.broadcast %cst_27 : f32 to vector<128x64xf32>
    %47 = arith.mulf %43, %46 : vector<128x64xf32>
    %48 = math.erf %47 : vector<128x64xf32>
    %cst_28 = arith.constant 1.000000e+00 : f32
    %49 = vector.broadcast %cst_28 : f32 to vector<128x64xf32>
    %50 = arith.addf %49, %48 : vector<128x64xf32>
    %51 = arith.mulf %45, %50 : vector<128x64xf32>
    %52 = vector.shape_cast %51 : vector<128x64xf32> to vector<2x64x64xf32>
    %53 = vector.broadcast %2 : vector<2x64x1xf32> to vector<2x64x64xf32>
    %54 = arith.mulf %52, %53 : vector<2x64x64xf32>
    %cst_29 = arith.constant dense<0.000000e+00> : vector<2x64xf32>
    %55 = vector.multi_reduction <add>, %54, %cst_29 [1] : vector<2x64x64xf32> to vector<2x64xf32>
    %56 = vector.shape_cast %55 : vector<2x64xf32> to vector<2x1x64xf32>
    %cst_30 = arith.constant dense<0.000000e+00> : vector<2x1xf32>
    %57 = vector.multi_reduction <add>, %2, %cst_30 [1] : vector<2x64x1xf32> to vector<2x1xf32>
    %58 = vector.shape_cast %57 : vector<2x1xf32> to vector<2x1x1xf32>
    %59 = tpu.reciprocal %58 {approx = true} : vector<2x1x1xf32> -> vector<2x1x1xf32>
    %60 = vector.broadcast %59 : vector<2x1x1xf32> to vector<2x1x64xf32>
    %61 = arith.mulf %56, %60 : vector<2x1x64xf32>
    %62 = arith.truncf %61 : vector<2x1x64xf32> to vector<2x1x64xbf16>
    %63 = vector.shape_cast %62 : vector<2x1x64xbf16> to vector<2x1x64xbf16>
    %64 = vector.broadcast %63 : vector<2x1x64xbf16> to vector<2x64x64xbf16>
    %65 = vector.shape_cast %64 : vector<2x64x64xbf16> to vector<128x64xbf16>
    %66 = arith.truncf %38 : vector<128x64xf32> to vector<128x64xbf16>
    %c0_31 = arith.constant 0 : index
    %c0_32 = arith.constant 0 : index
    %67 = vector.load %arg9[%c0_31, %c0_32] : memref<64x64xbf16, #tpu.memory_space<vmem>>, vector<64x64xbf16>
    %cst_33 = arith.constant dense<0.000000e+00> : vector<128x64xf32>
    %68 = tpu.matmul %66, %67, %cst_33 {dimension_numbers = #tpu.dot_dimension_numbers<[1], [0], [0], [1], [0, 0, 1, 1], [], []>} : vector<128x64xbf16>, vector<64x64xbf16>, vector<128x64xf32> -> vector<128x64xf32>
    %c0_34 = arith.constant 0 : index
    %c0_35 = arith.constant 0 : index
    %69 = vector.load %arg10[%c0_34, %c0_35] : memref<64x64xbf16, #tpu.memory_space<vmem>>, vector<64x64xbf16>
    %cst_36 = arith.constant dense<0.000000e+00> : vector<128x64xf32>
    %70 = tpu.matmul %65, %69, %cst_36 {dimension_numbers = #tpu.dot_dimension_numbers<[1], [0], [0], [1], [0, 0, 1, 1], [], []>} : vector<128x64xbf16>, vector<64x64xbf16>, vector<128x64xf32> -> vector<128x64xf32>
    %71 = arith.addf %68, %70 : vector<128x64xf32>
    %c0_37 = arith.constant 0 : index
    %c0_38 = arith.constant 0 : index
    %72 = vector.load %arg11[%c0_37, %c0_38] : memref<1x64xf32, #tpu.memory_space<vmem>>, vector<1x64xf32>
    %73 = vector.broadcast %72 : vector<1x64xf32> to vector<128x64xf32>
    %74 = arith.addf %71, %73 : vector<128x64xf32>
    %cst_39 = arith.constant 5.000000e-01 : f32
    %75 = vector.broadcast %cst_39 : f32 to vector<128x64xf32>
    %76 = arith.mulf %75, %74 : vector<128x64xf32>
    %cst_40 = arith.constant 0.707106769 : f32
    %77 = vector.broadcast %cst_40 : f32 to vector<128x64xf32>
    %78 = arith.mulf %74, %77 : vector<128x64xf32>
    %79 = math.erf %78 : vector<128x64xf32>
    %cst_41 = arith.constant 1.000000e+00 : f32
    %80 = vector.broadcast %cst_41 : f32 to vector<128x64xf32>
    %81 = arith.addf %80, %79 : vector<128x64xf32>
    %82 = arith.mulf %76, %81 : vector<128x64xf32>
    %83 = arith.truncf %82 : vector<128x64xf32> to vector<128x64xbf16>
    %c0_42 = arith.constant 0 : index
    %c0_43 = arith.constant 0 : index
    %84 = vector.load %arg12[%c0_42, %c0_43] : memref<64x32xbf16, #tpu.memory_space<vmem>>, vector<64x32xbf16>
    %cst_44 = arith.constant dense<0.000000e+00> : vector<128x32xf32>
    %85 = tpu.matmul %83, %84, %cst_44 {dimension_numbers = #tpu.dot_dimension_numbers<[1], [0], [0], [1], [0, 0, 1, 1], [], []>} : vector<128x64xbf16>, vector<64x32xbf16>, vector<128x32xf32> -> vector<128x32xf32>
    %c0_45 = arith.constant 0 : index
    %c0_46 = arith.constant 0 : index
    %86 = vector.load %arg13[%c0_45, %c0_46] : memref<1x32xf32, #tpu.memory_space<vmem>>, vector<1x32xf32>
    %87 = vector.broadcast %86 : vector<1x32xf32> to vector<128x32xf32>
    %88 = arith.addf %85, %87 : vector<128x32xf32>
    %cst_47 = arith.constant 5.000000e-01 : f32
    %89 = vector.broadcast %cst_47 : f32 to vector<128x32xf32>
    %90 = arith.mulf %89, %88 : vector<128x32xf32>
    %cst_48 = arith.constant 0.707106769 : f32
    %91 = vector.broadcast %cst_48 : f32 to vector<128x32xf32>
    %92 = arith.mulf %88, %91 : vector<128x32xf32>
    %93 = math.erf %92 : vector<128x32xf32>
    %cst_49 = arith.constant 1.000000e+00 : f32
    %94 = vector.broadcast %cst_49 : f32 to vector<128x32xf32>
    %95 = arith.addf %94, %93 : vector<128x32xf32>
    %96 = arith.mulf %90, %95 : vector<128x32xf32>
    %97 = arith.truncf %96 : vector<128x32xf32> to vector<128x32xbf16>
    %c0_50 = arith.constant 0 : index
    %c0_51 = arith.constant 0 : index
    %98 = vector.load %arg14[%c0_50, %c0_51] : memref<32x128xbf16, #tpu.memory_space<vmem>>, vector<32x128xbf16>
    %cst_52 = arith.constant dense<0.000000e+00> : vector<128x128xf32>
    %99 = tpu.matmul %97, %98, %cst_52 {dimension_numbers = #tpu.dot_dimension_numbers<[1], [0], [0], [1], [0, 0, 1, 1], [], []>} : vector<128x32xbf16>, vector<32x128xbf16>, vector<128x128xf32> -> vector<128x128xf32>
    %c0_53 = arith.constant 0 : index
    %c0_54 = arith.constant 0 : index
    %100 = vector.load %arg15[%c0_53, %c0_54] : memref<1x128xf32, #tpu.memory_space<vmem>>, vector<1x128xf32>
    %101 = vector.broadcast %100 : vector<1x128xf32> to vector<128x128xf32>
    %102 = arith.addf %99, %101 : vector<128x128xf32>
    %103 = tpu.iota {dimensions = array<i32: 1>} : vector<128x128xi32>
    %c2_i32 = arith.constant 2 : i32
    %104 = vector.broadcast %c2_i32 : i32 to vector<128x128xi32>
    %105 = arith.cmpi slt, %103, %104 : vector<128x128xi32>
    %cst_55 = arith.constant -1.000000e+30 : f32
    %106 = vector.broadcast %cst_55 : f32 to vector<128x128xf32>
    %107 = arith.select %105, %102, %106 : vector<128x128xi1>, vector<128x128xf32>
    %cst_56 = arith.constant dense<0xFF800000> : vector<128xf32>
    %108 = vector.multi_reduction <maximumf>, %107, %cst_56 [1] : vector<128x128xf32> to vector<128xf32>
    %109 = vector.shape_cast %108 : vector<128xf32> to vector<128x1xf32>
    %110 = vector.broadcast %109 : vector<128x1xf32> to vector<128x128xf32>
    %111 = arith.subf %107, %110 : vector<128x128xf32>
    %112 = math.exp %111 : vector<128x128xf32>
    %cst_57 = arith.constant dense<0.000000e+00> : vector<128xf32>
    %113 = vector.multi_reduction <add>, %112, %cst_57 [1] : vector<128x128xf32> to vector<128xf32>
    %114 = vector.shape_cast %113 : vector<128xf32> to vector<128x1xf32>
    %115 = math.log %114 : vector<128x1xf32>
    %116 = vector.broadcast %115 : vector<128x1xf32> to vector<128x128xf32>
    %117 = arith.subf %111, %116 : vector<128x128xf32>
    %118 = vector.shape_cast %117 : vector<128x128xf32> to vector<2x64x128xf32>
    %c0_58 = arith.constant 0 : index
    %c0_59 = arith.constant 0 : index
    %c0_60 = arith.constant 0 : index
    %119 = vector.load %arg16[%c0_58, %c0_59, %c0_60] : memref<2x64x128xf32, #tpu.memory_space<vmem>>, vector<2x64x128xf32>
    tpu.vector_store %arg16[%c0_58, %c0_59, %c0_60], %118 {strides = array<i32>} : memref<2x64x128xf32, #tpu.memory_space<vmem>>, vector<2x64x128xf32>,
    return
  }
  func.func @transform_0(%arg0: i32) -> (i32, i32, i32) {
    %c0_i32 = arith.constant 0 : i32
    %c0_i32_0 = arith.constant 0 : i32
    %c0_i32_1 = arith.constant 0 : i32
    return %arg0, %c0_i32, %c0_i32_0 : i32, i32, i32
  }
  func.func @transform_1(%arg0: i32) -> (i32, i32, i32) {
    %c0_i32 = arith.constant 0 : i32
    %c0_i32_0 = arith.constant 0 : i32
    %c0_i32_1 = arith.constant 0 : i32
    return %arg0, %c0_i32, %c0_i32_0 : i32, i32, i32
  }
  func.func @transform_2(%arg0: i32) -> (i32, i32) {
    %c0_i32 = arith.constant 0 : i32
    %c0_i32_0 = arith.constant 0 : i32
    %c0_i32_1 = arith.constant 0 : i32
    return %c0_i32, %c0_i32_0 : i32, i32
  }
  func.func @transform_3(%arg0: i32) -> (i32, i32) {
    %c0_i32 = arith.constant 0 : i32
    %c0_i32_0 = arith.constant 0 : i32
    %c0_i32_1 = arith.constant 0 : i32
    return %c0_i32, %c0_i32_0 : i32, i32
  }
  func.func @transform_4(%arg0: i32) -> (i32, i32) {
    %c0_i32 = arith.constant 0 : i32
    %c0_i32_0 = arith.constant 0 : i32
    %c0_i32_1 = arith.constant 0 : i32
    return %c0_i32, %c0_i32_0 : i32, i32
  }
  func.func @transform_5(%arg0: i32) -> (i32, i32) {
    %c0_i32 = arith.constant 0 : i32
    %c0_i32_0 = arith.constant 0 : i32
    %c0_i32_1 = arith.constant 0 : i32
    return %c0_i32, %c0_i32_0 : i32, i32
  }
  func.func @transform_6(%arg0: i32) -> (i32, i32) {
    %c0_i32 = arith.constant 0 : i32
    %c0_i32_0 = arith.constant 0 : i32
    %c0_i32_1 = arith.constant 0 : i32
    return %c0_i32, %c0_i32_0 : i32, i32
  }
  func.func @transform_7(%arg0: i32) -> (i32, i32) {
    %c0_i32 = arith.constant 0 : i32
    %c0_i32_0 = arith.constant 0 : i32
    %c0_i32_1 = arith.constant 0 : i32
    return %c0_i32, %c0_i32_0 : i32, i32
  }
  func.func @transform_8(%arg0: i32) -> (i32, i32) {
    %c0_i32 = arith.constant 0 : i32
    %c0_i32_0 = arith.constant 0 : i32
    %c0_i32_1 = arith.constant 0 : i32
    return %c0_i32, %c0_i32_0 : i32, i32
  }
  func.func @transform_9(%arg0: i32) -> (i32, i32) {
    %c0_i32 = arith.constant 0 : i32
    %c0_i32_0 = arith.constant 0 : i32
    %c0_i32_1 = arith.constant 0 : i32
    return %c0_i32, %c0_i32_0 : i32, i32
  }
  func.func @transform_10(%arg0: i32) -> (i32, i32) {
    %c0_i32 = arith.constant 0 : i32
    %c0_i32_0 = arith.constant 0 : i32
    %c0_i32_1 = arith.constant 0 : i32
    return %c0_i32, %c0_i32_0 : i32, i32
  }
  func.func @transform_11(%arg0: i32) -> (i32, i32) {
    %c0_i32 = arith.constant 0 : i32
    %c0_i32_0 = arith.constant 0 : i32
    %c0_i32_1 = arith.constant 0 : i32
    return %c0_i32, %c0_i32_0 : i32, i32
  }
  func.func @transform_12(%arg0: i32) -> (i32, i32) {
    %c0_i32 = arith.constant 0 : i32
    %c0_i32_0 = arith.constant 0 : i32
    %c0_i32_1 = arith.constant 0 : i32
    return %c0_i32, %c0_i32_0 : i32, i32
  }
  func.func @transform_13(%arg0: i32) -> (i32, i32) {
    %c0_i32 = arith.constant 0 : i32
    %c0_i32_0 = arith.constant 0 : i32
    %c0_i32_1 = arith.constant 0 : i32
    return %c0_i32, %c0_i32_0 : i32, i32
  }
  func.func @transform_14(%arg0: i32) -> (i32, i32) {
    %c0_i32 = arith.constant 0 : i32
    %c0_i32_0 = arith.constant 0 : i32
    %c0_i32_1 = arith.constant 0 : i32
    return %c0_i32, %c0_i32_0 : i32, i32
  }
  func.func @transform_15(%arg0: i32) -> (i32, i32, i32) {
    %c0_i32 = arith.constant 0 : i32
    %c0_i32_0 = arith.constant 0 : i32
    %c0_i32_1 = arith.constant 0 : i32
    return %arg0, %c0_i32, %c0_i32_0 : i32, i32, i32
  }
}

</mosaic_0001>

<llo_original>
// kernel: tpu_custom_call.1
$region0: #{tpu_custom_call.1}
  #allocation0 [shape = 'u32[]', space=smem, size = 0x4, offset = 0x4, fixed_abs, tag = 'smem constant byte address 0x4 - core index']
  #allocation1 [shape = 'u32[72,128]{1,0:T(1,128)}', space=vmem, size = 0x9000, scoped, tag = 'internal scratch']
  %s0 = inlined_call_operand.vmem [shape: f32[4,64,128], index: 0, kind: input, shape index: {}]
  %s1 = inlined_call_operand.vmem [shape: f32[4,64,1], index: 1, kind: input, shape index: {}]
  %s2 = inlined_call_operand.vmem [shape: f32[1,128], index: 2, kind: input, shape index: {}]
  %s3 = inlined_call_operand.vmem [shape: f32[1,128], index: 3, kind: input, shape index: {}]
  %s4 = inlined_call_operand.vmem [shape: bf16[128,64], index: 4, kind: input, shape index: {}]
  %s5 = inlined_call_operand.vmem [shape: bf16[128,64], index: 5, kind: input, shape index: {}]
  %s6 = inlined_call_operand.vmem [shape: f32[1,64], index: 6, kind: input, shape index: {}]
  %s7 = inlined_call_operand.vmem [shape: f32[1,64], index: 7, kind: input, shape index: {}]
  %s8 = inlined_call_operand.vmem [shape: bf16[64,64], index: 8, kind: input, shape index: {}]
  %s9 = inlined_call_operand.vmem [shape: bf16[64,64], index: 9, kind: input, shape index: {}]
  %s10 = inlined_call_operand.vmem [shape: f32[1,64], index: 10, kind: input, shape index: {}]
  %s11 = inlined_call_operand.vmem [shape: bf16[64,32], index: 11, kind: input, shape index: {}]
  %s12 = inlined_call_operand.vmem [shape: f32[1,32], index: 12, kind: input, shape index: {}]
  %s13 = inlined_call_operand.vmem [shape: bf16[32,128], index: 13, kind: input, shape index: {}]
  %s14 = inlined_call_operand.vmem [shape: f32[1,128], index: 14, kind: input, shape index: {}]
  %s15 = inlined_call_operand.hbm [shape: f32[4,64,128], index: 15, kind: output, shape index: {}]
  %s16 = sld [smem:[#allocation0]]
  $region93: #{tpu_custom_call.1} parent=0
    _
  %s18 = ssub.s32 1, %s16
  %s19 = scalar_select 0, %s18, %s16
  $region1: #{tpu_custom_call.1} parent=0
    #allocation2 [shape = 'u8[131072]{0}', space=vmem, size = 0x20000, scoped, tag = 'output window, operand 0']
    #allocation3 [shape = 's32[2]{0}', space=sflag, size = 0x8, scoped, tag = 'scoped memory for tpu_custom_call.1']
    %20 = vsyncpa [#allocation3], 0
    %s21 = scalar_lea.sflag [#allocation3], 1
    %22 = vsyncpa %s21, 0
    loop: start=0, step=1, limit=4
    $region2: #{tpu_custom_call.1} parent=1 // loop_pre_header
      _
    $region3: #{tpu_custom_call.1} parent=1 // loop_header
      %s24 = sphi 0, %s28
      %p25 = scmp.ge.s32.totalorder %s24, 4
      %s34 = sphi 0, %s36
      %s37 = sphi 0, %s34
      %s38 = sphi 0, %s37
      %s54 = sphi 0, %s38
      %s60 = sphi 0, %s62
      %s63 = sphi 0, %s60
      %s64 = sphi 0, %s63
      %s80 = sphi 0, %s64
      %s84 = sphi 0, %s84
      %s86 = sphi 0, %s84
      %s87 = sphi 0, %s86
      %s101 = sphi 0, %s87
      %s105 = sphi 0, %s105
      %s107 = sphi 0, %s105
      %s108 = sphi 0, %s107
      %s122 = sphi 0, %s108
      %s126 = sphi 0, %s126
      %s128 = sphi 0, %s126
      %s129 = sphi 0, %s128
      %s143 = sphi 0, %s129
      %s147 = sphi 0, %s147
      %s149 = sphi 0, %s147
      %s150 = sphi 0, %s149
      %s164 = sphi 0, %s150
      %s168 = sphi 0, %s168
      %s170 = sphi 0, %s168
      %s171 = sphi 0, %s170
      %s185 = sphi 0, %s171
      %s189 = sphi 0, %s189
      %s191 = sphi 0, %s189
      %s192 = sphi 0, %s191
      %s206 = sphi 0, %s192
      %s210 = sphi 0, %s210
      %s212 = sphi 0, %s210
      %s213 = sphi 0, %s212
      %s227 = sphi 0, %s213
      %s231 = sphi 0, %s231
      %s233 = sphi 0, %s231
      %s234 = sphi 0, %s233
      %s248 = sphi 0, %s234
      %s252 = sphi 0, %s252
      %s254 = sphi 0, %s252
      %s255 = sphi 0, %s254
      %s269 = sphi 0, %s255
      %s273 = sphi 0, %s273
      %s275 = sphi 0, %s273
      %s276 = sphi 0, %s275
      %s290 = sphi 0, %s276
      %s294 = sphi 0, %s294
      %s296 = sphi 0, %s294
      %s297 = sphi 0, %s296
      %s311 = sphi 0, %s297
      %s315 = sphi 0, %s315
      %s317 = sphi 0, %s315
      %s318 = sphi 0, %s317
      %s332 = sphi 0, %s318
      %s336 = sphi 0, %s336
      %s338 = sphi 0, %s336
      %s339 = sphi 0, %s338
      %s353 = sphi 0, %s339
      %s359 = sphi 0, %s361
      %s362 = sphi 0, %s359
      %s363 = sphi 0, %s362
      %s379 = sphi 0, %s363
    $region4: #{tpu_custom_call.1} parent=1 // loop_header_branch
      %27 = sbr.rel (%p25) target = $region8
    $region5: #{tpu_custom_call.1} parent=1 // loop_body
      %s29 = ssub.s32 %s24, 1
      %s30 = ssub.s32 %s24, 2
      %s31 = sadd.s32 %s24, 1
      %s32 = ssub.s32 %s24, %s31
      %p33 = scmp.eq.s32.totalorder %s32, 0
      %s35 = sadd.s32 %s34, 1
      %s36 = scalar_select %p33, %s34, %s35
      %p39 = pneg %p33
      %p40 = scmp.eq.s32.totalorder %s24, 1
      %p41 = por %p39, %p40
      %p42 = scmp.ne.s32.totalorder %s34, %s37
      %p43 = scmp.eq.s32.totalorder %s24, 0
      %p44 = por %p42, %p43
      %p45 = scmp.ne.s32.totalorder %s34, %s37
      %p46 = scmp.eq.s32.totalorder %s29, 1
      %p47 = por %p45, %p46
      %p48 = scmp.ne.s32.totalorder %s37, %s38
      %p49 = scmp.eq.s32.totalorder %s29, 0
      %p50 = por %p48, %p49
      %p51 = scmp.ne.s32.totalorder %s37, %s38
      %p52 = scmp.eq.s32.totalorder %s30, 1
      %p53 = por %p51, %p52
      %p55 = scmp.ne.s32.totalorder %s38, %s54
      %p56 = scmp.eq.s32.totalorder %s30, 0
      %p57 = por %p55, %p56
      %s58 = ssub.s32 %s24, %s31
      %p59 = scmp.eq.s32.totalorder %s58, 0
      %s61 = sadd.s32 %s60, 1
      %s62 = scalar_select %p59, %s60, %s61
      %p65 = pneg %p59
      %p66 = scmp.eq.s32.totalorder %s24, 1
      %p67 = por %p65, %p66
      %p68 = scmp.ne.s32.totalorder %s60, %s63
      %p69 = scmp.eq.s32.totalorder %s24, 0
      %p70 = por %p68, %p69
      %p71 = scmp.ne.s32.totalorder %s60, %s63
      %p72 = scmp.eq.s32.totalorder %s29, 1
      %p73 = por %p71, %p72
      %p74 = scmp.ne.s32.totalorder %s63, %s64
      %p75 = scmp.eq.s32.totalorder %s29, 0
      %p76 = por %p74, %p75
      %p77 = scmp.ne.s32.totalorder %s63, %s64
      %p78 = scmp.eq.s32.totalorder %s30, 1
      %p79 = por %p77, %p78
      %p81 = scmp.ne.s32.totalorder %s64, %s80
      %p82 = scmp.eq.s32.totalorder %s30, 0
      %p83 = por %p81, %p82
      %s85 = sadd.s32 %s84, 1
      %p88 = scmp.eq.s32.totalorder %s24, 1
      %p89 = scmp.ne.s32.totalorder %s84, %s86
      %p90 = scmp.eq.s32.totalorder %s24, 0
      %p91 = por %p89, %p90
      %p92 = scmp.ne.s32.totalorder %s84, %s86
      %p93 = scmp.eq.s32.totalorder %s29, 1
      %p94 = por %p92, %p93
      %p95 = scmp.ne.s32.totalorder %s86, %s87
      %p96 = scmp.eq.s32.totalorder %s29, 0
      %p97 = por %p95, %p96
      %p98 = scmp.ne.s32.totalorder %s86, %s87
      %p99 = scmp.eq.s32.totalorder %s30, 1
      %p100 = por %p98, %p99
      %p102 = scmp.ne.s32.totalorder %s87, %s101
      %p103 = scmp.eq.s32.totalorder %s30, 0
      %p104 = por %p102, %p103
      %s106 = sadd.s32 %s105, 1
      %p109 = scmp.eq.s32.totalorder %s24, 1
      %p110 = scmp.ne.s32.totalorder %s105, %s107
      %p111 = scmp.eq.s32.totalorder %s24, 0
      %p112 = por %p110, %p111
      %p113 = scmp.ne.s32.totalorder %s105, %s107
      %p114 = scmp.eq.s32.totalorder %s29, 1
      %p115 = por %p113, %p114
      %p116 = scmp.ne.s32.totalorder %s107, %s108
      %p117 = scmp.eq.s32.totalorder %s29, 0
      %p118 = por %p116, %p117
      %p119 = scmp.ne.s32.totalorder %s107, %s108
      %p120 = scmp.eq.s32.totalorder %s30, 1
      %p121 = por %p119, %p120
      %p123 = scmp.ne.s32.totalorder %s108, %s122
      %p124 = scmp.eq.s32.totalorder %s30, 0
      %p125 = por %p123, %p124
      %s127 = sadd.s32 %s126, 1
      %p130 = scmp.eq.s32.totalorder %s24, 1
      %p131 = scmp.ne.s32.totalorder %s126, %s128
      %p132 = scmp.eq.s32.totalorder %s24, 0
      %p133 = por %p131, %p132
      %p134 = scmp.ne.s32.totalorder %s126, %s128
      %p135 = scmp.eq.s32.totalorder %s29, 1
      %p136 = por %p134, %p135
      %p137 = scmp.ne.s32.totalorder %s128, %s129
      %p138 = scmp.eq.s32.totalorder %s29, 0
      %p139 = por %p137, %p138
      %p140 = scmp.ne.s32.totalorder %s128, %s129
      %p141 = scmp.eq.s32.totalorder %s30, 1
      %p142 = por %p140, %p141
      %p144 = scmp.ne.s32.totalorder %s129, %s143
      %p145 = scmp.eq.s32.totalorder %s30, 0
      %p146 = por %p144, %p145
      %s148 = sadd.s32 %s147, 1
      %p151 = scmp.eq.s32.totalorder %s24, 1
      %p152 = scmp.ne.s32.totalorder %s147, %s149
      %p153 = scmp.eq.s32.totalorder %s24, 0
      %p154 = por %p152, %p153
      %p155 = scmp.ne.s32.totalorder %s147, %s149
      %p156 = scmp.eq.s32.totalorder %s29, 1
      %p157 = por %p155, %p156
      %p158 = scmp.ne.s32.totalorder %s149, %s150
      %p159 = scmp.eq.s32.totalorder %s29, 0
      %p160 = por %p158, %p159
      %p161 = scmp.ne.s32.totalorder %s149, %s150
      %p162 = scmp.eq.s32.totalorder %s30, 1
      %p163 = por %p161, %p162
      %p165 = scmp.ne.s32.totalorder %s150, %s164
      %p166 = scmp.eq.s32.totalorder %s30, 0
      %p167 = por %p165, %p166
      %s169 = sadd.s32 %s168, 1
      %p172 = scmp.eq.s32.totalorder %s24, 1
      %p173 = scmp.ne.s32.totalorder %s168, %s170
      %p174 = scmp.eq.s32.totalorder %s24, 0
      %p175 = por %p173, %p174
      %p176 = scmp.ne.s32.totalorder %s168, %s170
      %p177 = scmp.eq.s32.totalorder %s29, 1
      %p178 = por %p176, %p177
      %p179 = scmp.ne.s32.totalorder %s170, %s171
      %p180 = scmp.eq.s32.totalorder %s29, 0
      %p181 = por %p179, %p180
      %p182 = scmp.ne.s32.totalorder %s170, %s171
      %p183 = scmp.eq.s32.totalorder %s30, 1
      %p184 = por %p182, %p183
      %p186 = scmp.ne.s32.totalorder %s171, %s185
      %p187 = scmp.eq.s32.totalorder %s30, 0
      %p188 = por %p186, %p187
      %s190 = sadd.s32 %s189, 1
      %p193 = scmp.eq.s32.totalorder %s24, 1
      %p194 = scmp.ne.s32.totalorder %s189, %s191
      %p195 = scmp.eq.s32.totalorder %s24, 0
      %p196 = por %p194, %p195
      %p197 = scmp.ne.s32.totalorder %s189, %s191
      %p198 = scmp.eq.s32.totalorder %s29, 1
      %p199 = por %p197, %p198
      %p200 = scmp.ne.s32.totalorder %s191, %s192
      %p201 = scmp.eq.s32.totalorder %s29, 0
      %p202 = por %p200, %p201
      %p203 = scmp.ne.s32.totalorder %s191, %s192
      %p204 = scmp.eq.s32.totalorder %s30, 1
      %p205 = por %p203, %p204
      %p207 = scmp.ne.s32.totalorder %s192, %s206
      %p208 = scmp.eq.s32.totalorder %s30, 0
      %p209 = por %p207, %p208
      %s211 = sadd.s32 %s210, 1
      %p214 = scmp.eq.s32.totalorder %s24, 1
      %p215 = scmp.ne.s32.totalorder %s210, %s212
      %p216 = scmp.eq.s32.totalorder %s24, 0
      %p217 = por %p215, %p216
      %p218 = scmp.ne.s32.totalorder %s210, %s212
      %p219 = scmp.eq.s32.totalorder %s29, 1
      %p220 = por %p218, %p219
      %p221 = scmp.ne.s32.totalorder %s212, %s213
      %p222 = scmp.eq.s32.totalorder %s29, 0
      %p223 = por %p221, %p222
      %p224 = scmp.ne.s32.totalorder %s212, %s213
      %p225 = scmp.eq.s32.totalorder %s30, 1
      %p226 = por %p224, %p225
      %p228 = scmp.ne.s32.totalorder %s213, %s227
      %p229 = scmp.eq.s32.totalorder %s30, 0
      %p230 = por %p228, %p229
      %s232 = sadd.s32 %s231, 1
      %p235 = scmp.eq.s32.totalorder %s24, 1
      %p236 = scmp.ne.s32.totalorder %s231, %s233
      %p237 = scmp.eq.s32.totalorder %s24, 0
      %p238 = por %p236, %p237
      %p239 = scmp.ne.s32.totalorder %s231, %s233
      %p240 = scmp.eq.s32.totalorder %s29, 1
      %p241 = por %p239, %p240
      %p242 = scmp.ne.s32.totalorder %s233, %s234
      %p243 = scmp.eq.s32.totalorder %s29, 0
      %p244 = por %p242, %p243
      %p245 = scmp.ne.s32.totalorder %s233, %s234
      %p246 = scmp.eq.s32.totalorder %s30, 1
      %p247 = por %p245, %p246
      %p249 = scmp.ne.s32.totalorder %s234, %s248
      %p250 = scmp.eq.s32.totalorder %s30, 0
      %p251 = por %p249, %p250
      %s253 = sadd.s32 %s252, 1
      %p256 = scmp.eq.s32.totalorder %s24, 1
      %p257 = scmp.ne.s32.totalorder %s252, %s254
      %p258 = scmp.eq.s32.totalorder %s24, 0
      %p259 = por %p257, %p258
      %p260 = scmp.ne.s32.totalorder %s252, %s254
      %p261 = scmp.eq.s32.totalorder %s29, 1
      %p262 = por %p260, %p261
      %p263 = scmp.ne.s32.totalorder %s254, %s255
      %p264 = scmp.eq.s32.totalorder %s29, 0
      %p265 = por %p263, %p264
      %p266 = scmp.ne.s32.totalorder %s254, %s255
      %p267 = scmp.eq.s32.totalorder %s30, 1
      %p268 = por %p266, %p267
      %p270 = scmp.ne.s32.totalorder %s255, %s269
      %p271 = scmp.eq.s32.totalorder %s30, 0
      %p272 = por %p270, %p271
      %s274 = sadd.s32 %s273, 1
      %p277 = scmp.eq.s32.totalorder %s24, 1
      %p278 = scmp.ne.s32.totalorder %s273, %s275
      %p279 = scmp.eq.s32.totalorder %s24, 0
      %p280 = por %p278, %p279
      %p281 = scmp.ne.s32.totalorder %s273, %s275
      %p282 = scmp.eq.s32.totalorder %s29, 1
      %p283 = por %p281, %p282
      %p284 = scmp.ne.s32.totalorder %s275, %s276
      %p285 = scmp.eq.s32.totalorder %s29, 0
      %p286 = por %p284, %p285
      %p287 = scmp.ne.s32.totalorder %s275, %s276
      %p288 = scmp.eq.s32.totalorder %s30, 1
      %p289 = por %p287, %p288
      %p291 = scmp.ne.s32.totalorder %s276, %s290
      %p292 = scmp.eq.s32.totalorder %s30, 0
      %p293 = por %p291, %p292
      %s295 = sadd.s32 %s294, 1
      %p298 = scmp.eq.s32.totalorder %s24, 1
      %p299 = scmp.ne.s32.totalorder %s294, %s296
      %p300 = scmp.eq.s32.totalorder %s24, 0
      %p301 = por %p299, %p300
      %p302 = scmp.ne.s32.totalorder %s294, %s296
      %p303 = scmp.eq.s32.totalorder %s29, 1
      %p304 = por %p302, %p303
      %p305 = scmp.ne.s32.totalorder %s296, %s297
      %p306 = scmp.eq.s32.totalorder %s29, 0
      %p307 = por %p305, %p306
      %p308 = scmp.ne.s32.totalorder %s296, %s297
      %p309 = scmp.eq.s32.totalorder %s30, 1
      %p310 = por %p308, %p309
      %p312 = scmp.ne.s32.totalorder %s297, %s311
      %p313 = scmp.eq.s32.totalorder %s30, 0
      %p314 = por %p312, %p313
      %s316 = sadd.s32 %s315, 1
      %p319 = scmp.eq.s32.totalorder %s24, 1
      %p320 = scmp.ne.s32.totalorder %s315, %s317
      %p321 = scmp.eq.s32.totalorder %s24, 0
      %p322 = por %p320, %p321
      %p323 = scmp.ne.s32.totalorder %s315, %s317
      %p324 = scmp.eq.s32.totalorder %s29, 1
      %p325 = por %p323, %p324
      %p326 = scmp.ne.s32.totalorder %s317, %s318
      %p327 = scmp.eq.s32.totalorder %s29, 0
      %p328 = por %p326, %p327
      %p329 = scmp.ne.s32.totalorder %s317, %s318
      %p330 = scmp.eq.s32.totalorder %s30, 1
      %p331 = por %p329, %p330
      %p333 = scmp.ne.s32.totalorder %s318, %s332
      %p334 = scmp.eq.s32.totalorder %s30, 0
      %p335 = por %p333, %p334
      %s337 = sadd.s32 %s336, 1
      %p340 = scmp.eq.s32.totalorder %s24, 1
      %p341 = scmp.ne.s32.totalorder %s336, %s338
      %p342 = scmp.eq.s32.totalorder %s24, 0
      %p343 = por %p341, %p342
      %p344 = scmp.ne.s32.totalorder %s336, %s338
      %p345 = scmp.eq.s32.totalorder %s29, 1
      %p346 = por %p344, %p345
      %p347 = scmp.ne.s32.totalorder %s338, %s339
      %p348 = scmp.eq.s32.totalorder %s29, 0
      %p349 = por %p347, %p348
      %p350 = scmp.ne.s32.totalorder %s338, %s339
      %p351 = scmp.eq.s32.totalorder %s30, 1
      %p352 = por %p350, %p351
      %p354 = scmp.ne.s32.totalorder %s339, %s353
      %p355 = scmp.eq.s32.totalorder %s30, 0
      %p356 = por %p354, %p355
      %s357 = ssub.s32 %s24, %s31
      %p358 = scmp.eq.s32.totalorder %s357, 0
      %s360 = sadd.s32 %s359, 1
      %s361 = scalar_select %p358, %s359, %s360
      %p364 = pneg %p358
      %p365 = scmp.eq.s32.totalorder %s24, 1
      %p366 = por %p364, %p365
      %p367 = scmp.ne.s32.totalorder %s359, %s362
      %p368 = scmp.eq.s32.totalorder %s24, 0
      %p369 = por %p367, %p368
      %p370 = scmp.ne.s32.totalorder %s359, %s362
      %p371 = scmp.eq.s32.totalorder %s29, 1
      %p372 = por %p370, %p371
      %p373 = scmp.ne.s32.totalorder %s362, %s363
      %p374 = scmp.eq.s32.totalorder %s29, 0
      %p375 = por %p373, %p374
      %p376 = scmp.ne.s32.totalorder %s362, %s363
      %p377 = scmp.eq.s32.totalorder %s30, 1
      %p378 = por %p376, %p377
      %p380 = scmp.ne.s32.totalorder %s363, %s379
      %p381 = scmp.eq.s32.totalorder %s30, 0
      %p382 = por %p380, %p381
      %p383 = scmp.le.s32.totalorder 1, %s24
      %p384 = scmp.lt.s32.totalorder %s24, 3
      %p385 = pnand %p383, %p384
      %p386 = pneg %p385
      // Predicated region
      $region9: #{tpu_custom_call.1} parent=5 // pred_check
        _
      $region10: #{tpu_custom_call.1} parent=5 // pred_check_branch
        %388 = sbr.rel (%p385) target = $region12
      $region11: #{tpu_custom_call.1} parent=5 // pred_region
        %s389 = ssub.s32 %s24, 1
        // Predicated region
        $region13: #{tpu_custom_call.1} parent=11 // pred_check
          %p390 = pneg %p97
        $region14: #{tpu_custom_call.1} parent=11 // pred_check_branch
          %392 = sbr.rel (%p390) target = $region16
        $region15: #{tpu_custom_call.1} parent=11 // pred_region
          _
        $region16: #{tpu_custom_call.1} parent=11 // pred_fallthru
          _
        // Predicated region
        $region17: #{tpu_custom_call.1} parent=11 // pred_check
          %p393 = pneg %p118
        $region18: #{tpu_custom_call.1} parent=11 // pred_check_branch
          %395 = sbr.rel (%p393) target = $region20
        $region19: #{tpu_custom_call.1} parent=11 // pred_region
          _
        $region20: #{tpu_custom_call.1} parent=11 // pred_fallthru
          _
        // Predicated region
        $region21: #{tpu_custom_call.1} parent=11 // pred_check
          %p396 = pneg %p139
        $region22: #{tpu_custom_call.1} parent=11 // pred_check_branch
          %398 = sbr.rel (%p396) target = $region24
        $region23: #{tpu_custom_call.1} parent=11 // pred_region
          _
        $region24: #{tpu_custom_call.1} parent=11 // pred_fallthru
          _
        // Predicated region
        $region25: #{tpu_custom_call.1} parent=11 // pred_check
          %p399 = pneg %p160
        $region26: #{tpu_custom_call.1} parent=11 // pred_check_branch
          %401 = sbr.rel (%p399) target = $region28
        $region27: #{tpu_custom_call.1} parent=11 // pred_region
          _
        $region28: #{tpu_custom_call.1} parent=11 // pred_fallthru
          _
        // Predicated region
        $region29: #{tpu_custom_call.1} parent=11 // pred_check
          %p402 = pneg %p181
        $region30: #{tpu_custom_call.1} parent=11 // pred_check_branch
          %404 = sbr.rel (%p402) target = $region32
        $region31: #{tpu_custom_call.1} parent=11 // pred_region
          _
        $region32: #{tpu_custom_call.1} parent=11 // pred_fallthru
          _
        // Predicated region
        $region33: #{tpu_custom_call.1} parent=11 // pred_check
          %p405 = pneg %p202
        $region34: #{tpu_custom_call.1} parent=11 // pred_check_branch
          %407 = sbr.rel (%p405) target = $region36
        $region35: #{tpu_custom_call.1} parent=11 // pred_region
          _
        $region36: #{tpu_custom_call.1} parent=11 // pred_fallthru
          _
        // Predicated region
        $region37: #{tpu_custom_call.1} parent=11 // pred_check
          %p408 = pneg %p223
        $region38: #{tpu_custom_call.1} parent=11 // pred_check_branch
          %410 = sbr.rel (%p408) target = $region40
        $region39: #{tpu_custom_call.1} parent=11 // pred_region
          _
        $region40: #{tpu_custom_call.1} parent=11 // pred_fallthru
          _
        // Predicated region
        $region41: #{tpu_custom_call.1} parent=11 // pred_check
          %p411 = pneg %p244
        $region42: #{tpu_custom_call.1} parent=11 // pred_check_branch
          %413 = sbr.rel (%p411) target = $region44
        $region43: #{tpu_custom_call.1} parent=11 // pred_region
          _
        $region44: #{tpu_custom_call.1} parent=11 // pred_fallthru
          _
        // Predicated region
        $region45: #{tpu_custom_call.1} parent=11 // pred_check
          %p414 = pneg %p265
        $region46: #{tpu_custom_call.1} parent=11 // pred_check_branch
          %416 = sbr.rel (%p414) target = $region48
        $region47: #{tpu_custom_call.1} parent=11 // pred_region
          _
        $region48: #{tpu_custom_call.1} parent=11 // pred_fallthru
          _
        // Predicated region
        $region49: #{tpu_custom_call.1} parent=11 // pred_check
          %p417 = pneg %p286
        $region50: #{tpu_custom_call.1} parent=11 // pred_check_branch
          %419 = sbr.rel (%p417) target = $region52
        $region51: #{tpu_custom_call.1} parent=11 // pred_region
          _
        $region52: #{tpu_custom_call.1} parent=11 // pred_fallthru
          _
        // Predicated region
        $region53: #{tpu_custom_call.1} parent=11 // pred_check
          %p420 = pneg %p307
        $region54: #{tpu_custom_call.1} parent=11 // pred_check_branch
          %422 = sbr.rel (%p420) target = $region56
        $region55: #{tpu_custom_call.1} parent=11 // pred_region
          _
        $region56: #{tpu_custom_call.1} parent=11 // pred_fallthru
          _
        // Predicated region
        $region57: #{tpu_custom_call.1} parent=11 // pred_check
          %p423 = pneg %p328
        $region58: #{tpu_custom_call.1} parent=11 // pred_check_branch
          %425 = sbr.rel (%p423) target = $region60
        $region59: #{tpu_custom_call.1} parent=11 // pred_region
          _
        $region60: #{tpu_custom_call.1} parent=11 // pred_fallthru
          _
        // Predicated region
        $region61: #{tpu_custom_call.1} parent=11 // pred_check
          %p426 = pneg %p349
        $region62: #{tpu_custom_call.1} parent=11 // pred_check_branch
          %428 = sbr.rel (%p426) target = $region64
        $region63: #{tpu_custom_call.1} parent=11 // pred_region
          _
        $region64: #{tpu_custom_call.1} parent=11 // pred_fallthru
          _
      $region12: #{tpu_custom_call.1} parent=5 // pred_fallthru
        _
      %p429 = scmp.lt.s32.totalorder %s24, 2
      // Predicated region
      $region65: #{tpu_custom_call.1} parent=5 // pred_check
        %p430 = pneg %p429
      $region66: #{tpu_custom_call.1} parent=5 // pred_check_branch
        %432 = sbr.rel (%p430) target = $region68
      $region67: #{tpu_custom_call.1} parent=5 // pred_region
        // Predicated region
        $region69: #{tpu_custom_call.1} parent=67 // pred_check
          %p433 = pneg %p44
        $region70: #{tpu_custom_call.1} parent=67 // pred_check_branch
          %435 = sbr.rel (%p433) target = $region72
        $region71: #{tpu_custom_call.1} parent=67 // pred_region
          %s436 = smul.u32 2, %s24
          %p437 = scmp.lt.s32.totalorder %s436, 3
          %s438 = scalar_select %p437, %s436, 3
          %s439 = smul.addr %s438, 8
          %s440 = smul.addr %s439, 8
          %s441 = scalar_lea.vmem %s0, %s440
          %s442 = smul.u32 2, %s24
        $region72: #{tpu_custom_call.1} parent=67 // pred_fallthru
          _
        // Predicated region
        $region73: #{tpu_custom_call.1} parent=67 // pred_check
          %p443 = pneg %p70
        $region74: #{tpu_custom_call.1} parent=67 // pred_check_branch
          %445 = sbr.rel (%p443) target = $region76
        $region75: #{tpu_custom_call.1} parent=67 // pred_region
          %s446 = smul.u32 2, %s24
          %p447 = scmp.lt.s32.totalorder %s446, 3
          %s448 = scalar_select %p447, %s446, 3
          %s449 = smul.addr %s448, 8
          %s450 = smul.addr %s449, 8
          %s451 = scalar_lea.vmem %s1, %s450
          %s452 = smul.u32 2, %s24
        $region76: #{tpu_custom_call.1} parent=67 // pred_fallthru
          _
      $region68: #{tpu_custom_call.1} parent=5 // pred_fallthru
        _
      %p453 = scmp.le.s32.totalorder 1, %s24
      %p454 = scmp.lt.s32.totalorder %s24, 3
      %p455 = pnand %p453, %p454
      %p456 = pneg %p455
      // Predicated region
      $region77: #{tpu_custom_call.1} parent=5 // pred_check
        _
      $region78: #{tpu_custom_call.1} parent=5 // pred_check_branch
        %458 = sbr.rel (%p455) target = $region80
      $region79: #{tpu_custom_call.1} parent=5 // pred_region
        %s459 = ssub.s32 %s24, 1
        %s460 = smul.u32 2, %s29
        %p461 = scmp.lt.s32.totalorder %s460, 3
        %s462 = scalar_select %p461, %s460, 3
        %s463 = smul.addr %s462, 8
        %s464 = smul.addr %s463, 8
        %s465 = scalar_lea.vmem %s0, %s464
        %p466 = pneg %p50
        %p467 = pneg %p47
        %s468 = smul.u32 2, %s29
        %p469 = scmp.lt.s32.totalorder %s468, 3
        %s470 = scalar_select %p469, %s468, 3
        %s471 = smul.addr %s470, 8
        %s472 = smul.addr %s471, 8
        %s473 = scalar_lea.vmem %s1, %s472
        %p474 = pneg %p76
        %p475 = pneg %p73
        %p476 = pneg %p97
        %p477 = pneg %p94
        %p478 = pneg %p118
        %p479 = pneg %p115
        %p480 = pneg %p139
        %p481 = pneg %p136
        %p482 = pneg %p160
        %p483 = pneg %p157
        %p484 = pneg %p181
        %p485 = pneg %p178
        %p486 = pneg %p202
        %p487 = pneg %p199
        %p488 = pneg %p223
        %p489 = pneg %p220
        %p490 = pneg %p244
        %p491 = pneg %p241
        %p492 = pneg %p265
        %p493 = pneg %p262
        %p494 = pneg %p286
        %p495 = pneg %p283
        %p496 = pneg %p307
        %p497 = pneg %p304
        %p498 = pneg %p328
        %p499 = pneg %p325
        %p500 = pneg %p349
        %p501 = pneg %p346
        %p502 = pneg %p375
        %p503 = pneg %p372
        %s504 = sand.u32 %s362, 1
        %s505 = scalar_lea.sflag [#allocation3], %s504
        %s506 = sand.u32 %s362, 1
        %s507 = smul.addr %s506, 128
        %s508 = scalar_lea.vmem [#allocation2], %s507
        %s509 = smul.u32 2, %s29
        %p510 = scmp.lt.s32.totalorder %s509, 3
        %s511 = scalar_select %p510, %s509, 3
        %s512 = smul.addr %s511, 8
        %s513 = smul.addr %s512, 8
        %s514 = scalar_lea.vmem %s0, %s513
        %s515 = smul.u32 2, %s29
        %s516 = smul.u32 2, %s29
        %p517 = scmp.lt.s32.totalorder %s516, 3
        %s518 = scalar_select %p517, %s516, 3
        %s519 = smul.addr %s518, 8
        %s520 = smul.addr %s519, 8
        %s521 = scalar_lea.vmem %s1, %s520
        %s522 = smul.u32 2, %s29
        %s523 = smul.u32 2, %s29
        %v525 = vld [vmem:[%s514] sm:$0xff]
        %v526 = vld [vmem:[%s514 + $0x8] sm:$0xff]
        %v527 = vld [vmem:[%s514 + $0x10] sm:$0xff]
        %v528 = vld [vmem:[%s514 + $0x18] sm:$0xff]
        %v529 = vld [vmem:[%s514 + $0x20] sm:$0xff]
        %v530 = vld [vmem:[%s514 + $0x28] sm:$0xff]
        %v531 = vld [vmem:[%s514 + $0x30] sm:$0xff]
        %v532 = vld [vmem:[%s514 + $0x38] sm:$0xff]
        %v533 = vld [vmem:[%s514 + $0x40] sm:$0xff]
        %v534 = vld [vmem:[%s514 + $0x48] sm:$0xff]
        %v535 = vld [vmem:[%s514 + $0x50] sm:$0xff]
        %v536 = vld [vmem:[%s514 + $0x58] sm:$0xff]
        %v537 = vld [vmem:[%s514 + $0x60] sm:$0xff]
        %v538 = vld [vmem:[%s514 + $0x68] sm:$0xff]
        %v539 = vld [vmem:[%s514 + $0x70] sm:$0xff]
        %v540 = vld [vmem:[%s514 + $0x78] sm:$0xff]
        %v541 = vld [vmem:[%s521] sm:$0xff]
        %v542 = vld [vmem:[%s521 + $0x8] sm:$0xff]
        %v543 = vld [vmem:[%s521 + $0x10] sm:$0xff]
        %v544 = vld [vmem:[%s521 + $0x18] sm:$0xff]
        %v545 = vld [vmem:[%s521 + $0x20] sm:$0xff]
        %v546 = vld [vmem:[%s521 + $0x28] sm:$0xff]
        %v547 = vld [vmem:[%s521 + $0x30] sm:$0xff]
        %v548 = vld [vmem:[%s521 + $0x38] sm:$0xff]
        %v549 = vld [vmem:[%s521 + $0x40] sm:$0xff]
        %v550 = vld [vmem:[%s521 + $0x48] sm:$0xff]
        %v551 = vld [vmem:[%s521 + $0x50] sm:$0xff]
        %v552 = vld [vmem:[%s521 + $0x58] sm:$0xff]
        %v553 = vld [vmem:[%s521 + $0x60] sm:$0xff]
        %v554 = vld [vmem:[%s521 + $0x68] sm:$0xff]
        %v555 = vld [vmem:[%s521 + $0x70] sm:$0xff]
        %v556 = vld [vmem:[%s521 + $0x78] sm:$0xff]
        %557 = vadd.xlane.f32.xlu0 %v525
        %v558 = vpop.xlane.xlu0 %557
        %559 = vadd.xlane.f32.xlu0 %v526
        %v560 = vpop.xlane.xlu0 %559
        %561 = vadd.xlane.f32.xlu0 %v527
        %v562 = vpop.xlane.xlu0 %561
        %563 = vadd.xlane.f32.xlu0 %v528
        %v564 = vpop.xlane.xlu0 %563
        %565 = vadd.xlane.f32.xlu0 %v529
        %v566 = vpop.xlane.xlu0 %565
        %567 = vadd.xlane.f32.xlu0 %v530
        %v568 = vpop.xlane.xlu0 %567
        %569 = vadd.xlane.f32.xlu0 %v531
        %v570 = vpop.xlane.xlu0 %569
        %571 = vadd.xlane.f32.xlu0 %v532
        %v572 = vpop.xlane.xlu0 %571
        %573 = vadd.xlane.f32.xlu0 %v533
        %v574 = vpop.xlane.xlu0 %573
        %575 = vadd.xlane.f32.xlu0 %v534
        %v576 = vpop.xlane.xlu0 %575
        %577 = vadd.xlane.f32.xlu0 %v535
        %v578 = vpop.xlane.xlu0 %577
        %579 = vadd.xlane.f32.xlu0 %v536
        %v580 = vpop.xlane.xlu0 %579
        %581 = vadd.xlane.f32.xlu0 %v537
        %v582 = vpop.xlane.xlu0 %581
        %583 = vadd.xlane.f32.xlu0 %v538
        %v584 = vpop.xlane.xlu0 %583
        %585 = vadd.xlane.f32.xlu0 %v539
        %v586 = vpop.xlane.xlu0 %585
        %587 = vadd.xlane.f32.xlu0 %v540
        %v588 = vpop.xlane.xlu0 %587
        %v589 = vrcp.pop 128.0
        %v590 = vmul.f32 128.0, %v589
        %v591 = vsub.f32 1.0, %v590
        %v592 = vmul.f32 %v589, %v591
        %v593 = vadd.f32 %v589, %v592
        %vm594 = vweird.f32 %v589
        %v595 = vsel %vm594, %v589, %v593
        %v596 = vmul.f32 %v558, %v595
        %v597 = vmul.f32 %v560, %v595
        %v598 = vmul.f32 %v562, %v595
        %v599 = vmul.f32 %v564, %v595
        %v600 = vmul.f32 %v566, %v595
        %v601 = vmul.f32 %v568, %v595
        %v602 = vmul.f32 %v570, %v595
        %v603 = vmul.f32 %v572, %v595
        %v604 = vmul.f32 %v574, %v595
        %v605 = vmul.f32 %v576, %v595
        %v606 = vmul.f32 %v578, %v595
        %v607 = vmul.f32 %v580, %v595
        %v608 = vmul.f32 %v582, %v595
        %v609 = vmul.f32 %v584, %v595
        %v610 = vmul.f32 %v586, %v595
        %v611 = vmul.f32 %v588, %v595
        %v612 = vsub.f32 %v525, %v596
        %v613 = vsub.f32 %v526, %v597
        %v614 = vsub.f32 %v527, %v598
        %v615 = vsub.f32 %v528, %v599
        %v616 = vsub.f32 %v529, %v600
        %v617 = vsub.f32 %v530, %v601
        %v618 = vsub.f32 %v531, %v602
        %v619 = vsub.f32 %v532, %v603
        %v620 = vsub.f32 %v533, %v604
        %v621 = vsub.f32 %v534, %v605
        %v622 = vsub.f32 %v535, %v606
        %v623 = vsub.f32 %v536, %v607
        %v624 = vsub.f32 %v537, %v608
        %v625 = vsub.f32 %v538, %v609
        %v626 = vsub.f32 %v539, %v610
        %v627 = vsub.f32 %v540, %v611
        %v628 = vmul.f32 %v612, %v612
        %v629 = vmul.f32 %v613, %v613
        %v630 = vmul.f32 %v614, %v614
        %v631 = vmul.f32 %v615, %v615
        %v632 = vmul.f32 %v616, %v616
        %v633 = vmul.f32 %v617, %v617
        %v634 = vmul.f32 %v618, %v618
        %v635 = vmul.f32 %v619, %v619
        %v636 = vmul.f32 %v620, %v620
        %v637 = vmul.f32 %v621, %v621
        %v638 = vmul.f32 %v622, %v622
        %v639 = vmul.f32 %v623, %v623
        %v640 = vmul.f32 %v624, %v624
        %v641 = vmul.f32 %v625, %v625
        %v642 = vmul.f32 %v626, %v626
        %v643 = vmul.f32 %v627, %v627
        %644 = vadd.xlane.f32.xlu0 %v628
        %v645 = vpop.xlane.xlu0 %644
        %646 = vadd.xlane.f32.xlu0 %v629
        %v647 = vpop.xlane.xlu0 %646
        %648 = vadd.xlane.f32.xlu0 %v630
        %v649 = vpop.xlane.xlu0 %648
        %650 = vadd.xlane.f32.xlu0 %v631
        %v651 = vpop.xlane.xlu0 %650
        %652 = vadd.xlane.f32.xlu0 %v632
        %v653 = vpop.xlane.xlu0 %652
        %654 = vadd.xlane.f32.xlu0 %v633
        %v655 = vpop.xlane.xlu0 %654
        %656 = vadd.xlane.f32.xlu0 %v634
        %v657 = vpop.xlane.xlu0 %656
        %658 = vadd.xlane.f32.xlu0 %v635
        %v659 = vpop.xlane.xlu0 %658
        %660 = vadd.xlane.f32.xlu0 %v636
        %v661 = vpop.xlane.xlu0 %660
        %662 = vadd.xlane.f32.xlu0 %v637
        %v663 = vpop.xlane.xlu0 %662
        %664 = vadd.xlane.f32.xlu0 %v638
        %v665 = vpop.xlane.xlu0 %664
        %666 = vadd.xlane.f32.xlu0 %v639
        %v667 = vpop.xlane.xlu0 %666
        %668 = vadd.xlane.f32.xlu0 %v640
        %v669 = vpop.xlane.xlu0 %668
        %670 = vadd.xlane.f32.xlu0 %v641
        %v671 = vpop.xlane.xlu0 %670
        %672 = vadd.xlane.f32.xlu0 %v642
        %v673 = vpop.xlane.xlu0 %672
        %674 = vadd.xlane.f32.xlu0 %v643
        %v675 = vpop.xlane.xlu0 %674
        %v676 = vmul.f32 %v645, %v595
        %v677 = vmul.f32 %v647, %v595
        %v678 = vmul.f32 %v649, %v595
        %v679 = vmul.f32 %v651, %v595
        %v680 = vmul.f32 %v653, %v595
        %v681 = vmul.f32 %v655, %v595
        %v682 = vmul.f32 %v657, %v595
        %v683 = vmul.f32 %v659, %v595
        %v684 = vmul.f32 %v661, %v595
        %v685 = vmul.f32 %v663, %v595
        %v686 = vmul.f32 %v665, %v595
        %v687 = vmul.f32 %v667, %v595
        %v688 = vmul.f32 %v669, %v595
        %v689 = vmul.f32 %v671, %v595
        %v690 = vmul.f32 %v673, %v595
        %v691 = vmul.f32 %v675, %v595
        %v692 = vadd.f32 %v676, 1e-05
        %v693 = vadd.f32 %v677, 1e-05
        %v694 = vadd.f32 %v678, 1e-05
        %v695 = vadd.f32 %v679, 1e-05
        %v696 = vadd.f32 %v680, 1e-05
        %v697 = vadd.f32 %v681, 1e-05
        %v698 = vadd.f32 %v682, 1e-05
        %v699 = vadd.f32 %v683, 1e-05
        %v700 = vadd.f32 %v684, 1e-05
        %v701 = vadd.f32 %v685, 1e-05
        %v702 = vadd.f32 %v686, 1e-05
        %v703 = vadd.f32 %v687, 1e-05
        %v704 = vadd.f32 %v688, 1e-05
        %v705 = vadd.f32 %v689, 1e-05
        %v706 = vadd.f32 %v690, 1e-05
        %v707 = vadd.f32 %v691, 1e-05
        %v708 = vrsqrt.pop %v692
        %v709 = vmul.f32 %v708, %v692
        %v710 = vmul.f32 %v709, %v708
        %v711 = vmul.f32 0.5, %v710
        %v712 = vsub.f32 1.5, %v711
        %v713 = vmul.f32 %v708, %v712
        %vm714 = vweird.f32 %v692
        %vm715 = vweird.f32 %v708
        %vm716 = vmor %vm714, %vm715
        %v717 = vsel %vm716, %v708, %v713
        %v718 = vrsqrt.pop %v693
        %v719 = vmul.f32 %v718, %v693
        %v720 = vmul.f32 %v719, %v718
        %v721 = vmul.f32 0.5, %v720
        %v722 = vsub.f32 1.5, %v721
        %v723 = vmul.f32 %v718, %v722
        %vm724 = vweird.f32 %v693
        %vm725 = vweird.f32 %v718
        %vm726 = vmor %vm724, %vm725
        %v727 = vsel %vm726, %v718, %v723
        %v728 = vrsqrt.pop %v694
        %v729 = vmul.f32 %v728, %v694
        %v730 = vmul.f32 %v729, %v728
        %v731 = vmul.f32 0.5, %v730
        %v732 = vsub.f32 1.5, %v731
        %v733 = vmul.f32 %v728, %v732
        %vm734 = vweird.f32 %v694
        %vm735 = vweird.f32 %v728
        %vm736 = vmor %vm734, %vm735
        %v737 = vsel %vm736, %v728, %v733
        %v738 = vrsqrt.pop %v695
        %v739 = vmul.f32 %v738, %v695
        %v740 = vmul.f32 %v739, %v738
        %v741 = vmul.f32 0.5, %v740
        %v742 = vsub.f32 1.5, %v741
        %v743 = vmul.f32 %v738, %v742
        %vm744 = vweird.f32 %v695
        %vm745 = vweird.f32 %v738
        %vm746 = vmor %vm744, %vm745
        %v747 = vsel %vm746, %v738, %v743
        %v748 = vrsqrt.pop %v696
        %v749 = vmul.f32 %v748, %v696
        %v750 = vmul.f32 %v749, %v748
        %v751 = vmul.f32 0.5, %v750
        %v752 = vsub.f32 1.5, %v751
        %v753 = vmul.f32 %v748, %v752
        %vm754 = vweird.f32 %v696
        %vm755 = vweird.f32 %v748
        %vm756 = vmor %vm754, %vm755
        %v757 = vsel %vm756, %v748, %v753
        %v758 = vrsqrt.pop %v697
        %v759 = vmul.f32 %v758, %v697
        %v760 = vmul.f32 %v759, %v758
        %v761 = vmul.f32 0.5, %v760
        %v762 = vsub.f32 1.5, %v761
        %v763 = vmul.f32 %v758, %v762
        %vm764 = vweird.f32 %v697
        %vm765 = vweird.f32 %v758
        %vm766 = vmor %vm764, %vm765
        %v767 = vsel %vm766, %v758, %v763
        %v768 = vrsqrt.pop %v698
        %v769 = vmul.f32 %v768, %v698
        %v770 = vmul.f32 %v769, %v768
        %v771 = vmul.f32 0.5, %v770
        %v772 = vsub.f32 1.5, %v771
        %v773 = vmul.f32 %v768, %v772
        %vm774 = vweird.f32 %v698
        %vm775 = vweird.f32 %v768
        %vm776 = vmor %vm774, %vm775
        %v777 = vsel %vm776, %v768, %v773
        %v778 = vrsqrt.pop %v699
        %v779 = vmul.f32 %v778, %v699
        %v780 = vmul.f32 %v779, %v778
        %v781 = vmul.f32 0.5, %v780
        %v782 = vsub.f32 1.5, %v781
        %v783 = vmul.f32 %v778, %v782
        %vm784 = vweird.f32 %v699
        %vm785 = vweird.f32 %v778
        %vm786 = vmor %vm784, %vm785
        %v787 = vsel %vm786, %v778, %v783
        %v788 = vrsqrt.pop %v700
        %v789 = vmul.f32 %v788, %v700
        %v790 = vmul.f32 %v789, %v788
        %v791 = vmul.f32 0.5, %v790
        %v792 = vsub.f32 1.5, %v791
        %v793 = vmul.f32 %v788, %v792
        %vm794 = vweird.f32 %v700
        %vm795 = vweird.f32 %v788
        %vm796 = vmor %vm794, %vm795
        %v797 = vsel %vm796, %v788, %v793
        %v798 = vrsqrt.pop %v701
        %v799 = vmul.f32 %v798, %v701
        %v800 = vmul.f32 %v799, %v798
        %v801 = vmul.f32 0.5, %v800
        %v802 = vsub.f32 1.5, %v801
        %v803 = vmul.f32 %v798, %v802
        %vm804 = vweird.f32 %v701
        %vm805 = vweird.f32 %v798
        %vm806 = vmor %vm804, %vm805
        %v807 = vsel %vm806, %v798, %v803
        %v808 = vrsqrt.pop %v702
        %v809 = vmul.f32 %v808, %v702
        %v810 = vmul.f32 %v809, %v808
        %v811 = vmul.f32 0.5, %v810
        %v812 = vsub.f32 1.5, %v811
        %v813 = vmul.f32 %v808, %v812
        %vm814 = vweird.f32 %v702
        %vm815 = vweird.f32 %v808
        %vm816 = vmor %vm814, %vm815
        %v817 = vsel %vm816, %v808, %v813
        %v818 = vrsqrt.pop %v703
        %v819 = vmul.f32 %v818, %v703
        %v820 = vmul.f32 %v819, %v818
        %v821 = vmul.f32 0.5, %v820
        %v822 = vsub.f32 1.5, %v821
        %v823 = vmul.f32 %v818, %v822
        %vm824 = vweird.f32 %v703
        %vm825 = vweird.f32 %v818
        %vm826 = vmor %vm824, %vm825
        %v827 = vsel %vm826, %v818, %v823
        %v828 = vrsqrt.pop %v704
        %v829 = vmul.f32 %v828, %v704
        %v830 = vmul.f32 %v829, %v828
        %v831 = vmul.f32 0.5, %v830
        %v832 = vsub.f32 1.5, %v831
        %v833 = vmul.f32 %v828, %v832
        %vm834 = vweird.f32 %v704
        %vm835 = vweird.f32 %v828
        %vm836 = vmor %vm834, %vm835
        %v837 = vsel %vm836, %v828, %v833
        %v838 = vrsqrt.pop %v705
        %v839 = vmul.f32 %v838, %v705
        %v840 = vmul.f32 %v839, %v838
        %v841 = vmul.f32 0.5, %v840
        %v842 = vsub.f32 1.5, %v841
        %v843 = vmul.f32 %v838, %v842
        %vm844 = vweird.f32 %v705
        %vm845 = vweird.f32 %v838
        %vm846 = vmor %vm844, %vm845
        %v847 = vsel %vm846, %v838, %v843
        %v848 = vrsqrt.pop %v706
        %v849 = vmul.f32 %v848, %v706
        %v850 = vmul.f32 %v849, %v848
        %v851 = vmul.f32 0.5, %v850
        %v852 = vsub.f32 1.5, %v851
        %v853 = vmul.f32 %v848, %v852
        %vm854 = vweird.f32 %v706
        %vm855 = vweird.f32 %v848
        %vm856 = vmor %vm854, %vm855
        %v857 = vsel %vm856, %v848, %v853
        %v858 = vrsqrt.pop %v707
        %v859 = vmul.f32 %v858, %v707
        %v860 = vmul.f32 %v859, %v858
        %v861 = vmul.f32 0.5, %v860
        %v862 = vsub.f32 1.5, %v861
        %v863 = vmul.f32 %v858, %v862
        %vm864 = vweird.f32 %v707
        %vm865 = vweird.f32 %v858
        %vm866 = vmor %vm864, %vm865
        %v867 = vsel %vm866, %v858, %v863
        %v868 = vmul.f32 %v612, %v717
        %v869 = vmul.f32 %v613, %v727
        %v870 = vmul.f32 %v614, %v737
        %v871 = vmul.f32 %v615, %v747
        %v872 = vmul.f32 %v616, %v757
        %v873 = vmul.f32 %v617, %v767
        %v874 = vmul.f32 %v618, %v777
        %v875 = vmul.f32 %v619, %v787
        %v876 = vmul.f32 %v620, %v797
        %v877 = vmul.f32 %v621, %v807
        %v878 = vmul.f32 %v622, %v817
        %v879 = vmul.f32 %v623, %v827
        %v880 = vmul.f32 %v624, %v837
        %v881 = vmul.f32 %v625, %v847
        %v882 = vmul.f32 %v626, %v857
        %v883 = vmul.f32 %v627, %v867
        %v884 = vld [vmem:[%s2] sm:$0x1]
        %v886 = vperm.slane %v884, 0
        %v888 = vmul.f32 %v868, %v886
        %v889 = vmul.f32 %v869, %v886
        %v890 = vmul.f32 %v870, %v886
        %v891 = vmul.f32 %v871, %v886
        %v892 = vmul.f32 %v872, %v886
        %v893 = vmul.f32 %v873, %v886
        %v894 = vmul.f32 %v874, %v886
        %v895 = vmul.f32 %v875, %v886
        %v896 = vmul.f32 %v876, %v886
        %v897 = vmul.f32 %v877, %v886
        %v898 = vmul.f32 %v878, %v886
        %v899 = vmul.f32 %v879, %v886
        %v900 = vmul.f32 %v880, %v886
        %v901 = vmul.f32 %v881, %v886
        %v902 = vmul.f32 %v882, %v886
        %v903 = vmul.f32 %v883, %v886
        %v904 = vld [vmem:[%s3] sm:$0x1]
        %v906 = vperm.slane %v904, 0
        %v908 = vadd.f32 %v888, %v906
        %v909 = vadd.f32 %v889, %v906
        %v910 = vadd.f32 %v890, %v906
        %v911 = vadd.f32 %v891, %v906
        %v912 = vadd.f32 %v892, %v906
        %v913 = vadd.f32 %v893, %v906
        %v914 = vadd.f32 %v894, %v906
        %v915 = vadd.f32 %v895, %v906
        %v916 = vadd.f32 %v896, %v906
        %v917 = vadd.f32 %v897, %v906
        %v918 = vadd.f32 %v898, %v906
        %v919 = vadd.f32 %v899, %v906
        %v920 = vadd.f32 %v900, %v906
        %v921 = vadd.f32 %v901, %v906
        %v922 = vadd.f32 %v902, %v906
        %v923 = vadd.f32 %v903, %v906
        %v924 = vpack.c.bf16 %v909, %v908
        %v925 = vpack.c.bf16 %v911, %v910
        %v926 = vpack.c.bf16 %v913, %v912
        %v927 = vpack.c.bf16 %v915, %v914
        %v928 = vpack.c.bf16 %v917, %v916
        %v929 = vpack.c.bf16 %v919, %v918
        %v930 = vpack.c.bf16 %v921, %v920
        %v931 = vpack.c.bf16 %v923, %v922
        %v932 = vld [vmem:[%s4] sm:$0xf]
        %v933 = vld [vmem:[%s4 + $0x4] sm:$0xf]
        %v934 = vld [vmem:[%s4 + $0x8] sm:$0xf]
        %v935 = vld [vmem:[%s4 + $0xc] sm:$0xf]
        %v936 = vld [vmem:[%s4 + $0x10] sm:$0xf]
        %v937 = vld [vmem:[%s4 + $0x14] sm:$0xf]
        %v938 = vld [vmem:[%s4 + $0x18] sm:$0xf]
        %v939 = vld [vmem:[%s4 + $0x1c] sm:$0xf]
        %v940 = vld [vmem:[%s4 + $0x20] sm:$0xf]
        %v941 = vld [vmem:[%s4 + $0x24] sm:$0xf]
        %v942 = vld [vmem:[%s4 + $0x28] sm:$0xf]
        %v943 = vld [vmem:[%s4 + $0x2c] sm:$0xf]
        %v944 = vld [vmem:[%s4 + $0x30] sm:$0xf]
        %v945 = vld [vmem:[%s4 + $0x34] sm:$0xf]
        %v946 = vld [vmem:[%s4 + $0x38] sm:$0xf]
        %v947 = vld [vmem:[%s4 + $0x3c] sm:$0xf]
        %v948 = vld [vmem:[%s6] sm:$0x1]
        %v950 = vperm.slane %v948, 0
        %v968 = vunpack.c.l.b16 %v932
        %v969 = vunpack.c.l.b16 %v933
        %v970 = vunpack.c.l.b16 %v934
        %v971 = vunpack.c.l.b16 %v935
        %v972 = vunpack.c.l.b16 %v936
        %v973 = vunpack.c.l.b16 %v937
        %v974 = vunpack.c.l.b16 %v938
        %v975 = vunpack.c.l.b16 %v939
        %v976 = vunpack.c.l.b16 %v940
        %v977 = vunpack.c.l.b16 %v941
        %v978 = vunpack.c.l.b16 %v942
        %v979 = vunpack.c.l.b16 %v943
        %v980 = vunpack.c.l.b16 %v944
        %v981 = vunpack.c.l.b16 %v945
        %v982 = vunpack.c.l.b16 %v946
        %v983 = vunpack.c.l.b16 %v947
        %v984 = vpack.c.b16 %v969, %v968
        %v985 = vpack.c.b16 %v971, %v970
        %v986 = vpack.c.b16 %v973, %v972
        %v987 = vpack.c.b16 %v975, %v974
        %v988 = vpack.c.b16 %v977, %v976
        %v989 = vpack.c.b16 %v979, %v978
        %v990 = vpack.c.b16 %v981, %v980
        %v991 = vpack.c.b16 %v983, %v982
        %1000 = vmatpush.bf16.msra.mxu0 %v991
        %1001 = vmatpush.bf16.msra.mxu0 %v990
        %1002 = vmatpush.bf16.msra.mxu0 %v989
        %1003 = vmatpush.bf16.msra.mxu0 %v988
        %1004 = vmatpush.bf16.msra.mxu0 %v987
        %1005 = vmatpush.bf16.msra.mxu0 %v986
        %1006 = vmatpush.bf16.msra.mxu0 %v985
        %1007 = vmatpush.bf16.msra.mxu0 %v984
        %1008 = vmatmul.bf16.gmra.mxu0 %v924
        %v1009 = vpop.f32.mrf.mxu0
        %v1010 = vadd.f32 %v950, %v1009
        %v1011 = vpop.f32.mrf.mxu0
        %v1012 = vadd.f32 %v950, %v1011
        %1013 = vmatmul.bf16.gmra.mxu0 %v925
        %v1014 = vpop.f32.mrf.mxu0
        %v1015 = vadd.f32 %v950, %v1014
        %v1016 = vpop.f32.mrf.mxu0
        %v1017 = vadd.f32 %v950, %v1016
        %1018 = vmatmul.bf16.gmra.mxu0 %v926
        %v1019 = vpop.f32.mrf.mxu0
        %v1020 = vadd.f32 %v950, %v1019
        %v1021 = vpop.f32.mrf.mxu0
        %v1022 = vadd.f32 %v950, %v1021
        %1023 = vmatmul.bf16.gmra.mxu0 %v927
        %v1024 = vpop.f32.mrf.mxu0
        %v1025 = vadd.f32 %v950, %v1024
        %v1026 = vpop.f32.mrf.mxu0
        %v1027 = vadd.f32 %v950, %v1026
        %1028 = vmatmul.bf16.gmra.mxu0 %v928
        %v1029 = vpop.f32.mrf.mxu0
        %v1030 = vadd.f32 %v950, %v1029
        %v1031 = vpop.f32.mrf.mxu0
        %v1032 = vadd.f32 %v950, %v1031
        %1033 = vmatmul.bf16.gmra.mxu0 %v929
        %v1034 = vpop.f32.mrf.mxu0
        %v1035 = vadd.f32 %v950, %v1034
        %v1036 = vpop.f32.mrf.mxu0
        %v1037 = vadd.f32 %v950, %v1036
        %1038 = vmatmul.bf16.gmra.mxu0 %v930
        %v1039 = vpop.f32.mrf.mxu0
        %v1040 = vadd.f32 %v950, %v1039
        %v1041 = vpop.f32.mrf.mxu0
        %v1042 = vadd.f32 %v950, %v1041
        %1043 = vmatmul.bf16.gmra.mxu0 %v931
        %v1044 = vpop.f32.mrf.mxu0
        %v1045 = vadd.f32 %v950, %v1044
        %v1046 = vpop.f32.mrf.mxu0
        %v1047 = vadd.f32 %v950, %v1046
        %1048 = vdwg.mxu0
        %v1049 = vmul.f32 %v1010, 0.5
        %v1050 = vmul.f32 %v1012, 0.5
        %v1051 = vmul.f32 %v1015, 0.5
        %v1052 = vmul.f32 %v1017, 0.5
        %v1053 = vmul.f32 %v1020, 0.5
        %v1054 = vmul.f32 %v1022, 0.5
        %v1055 = vmul.f32 %v1025, 0.5
        %v1056 = vmul.f32 %v1027, 0.5
        %v1057 = vmul.f32 %v1030, 0.5
        %v1058 = vmul.f32 %v1032, 0.5
        %v1059 = vmul.f32 %v1035, 0.5
        %v1060 = vmul.f32 %v1037, 0.5
        %v1061 = vmul.f32 %v1040, 0.5
        %v1062 = vmul.f32 %v1042, 0.5
        %v1063 = vmul.f32 %v1045, 0.5
        %v1064 = vmul.f32 %v1047, 0.5
        %v1065 = vmul.f32 %v1010, 0.70710677
        %v1066 = vmul.f32 %v1012, 0.70710677
        %v1067 = vmul.f32 %v1015, 0.70710677
        %v1068 = vmul.f32 %v1017, 0.70710677
        %v1069 = vmul.f32 %v1020, 0.70710677
        %v1070 = vmul.f32 %v1022, 0.70710677
        %v1071 = vmul.f32 %v1025, 0.70710677
        %v1072 = vmul.f32 %v1027, 0.70710677
        %v1073 = vmul.f32 %v1030, 0.70710677
        %v1074 = vmul.f32 %v1032, 0.70710677
        %v1075 = vmul.f32 %v1035, 0.70710677
        %v1076 = vmul.f32 %v1037, 0.70710677
        %v1077 = vmul.f32 %v1040, 0.70710677
        %v1078 = vmul.f32 %v1042, 0.70710677
        %v1079 = vmul.f32 %v1045, 0.70710677
        %v1080 = vmul.f32 %v1047, 0.70710677
        %v1081 = vmul.f32 %v1065, %v1065
        %v1082 = vmin.f32 16.0, %v1081
        %v1083 = vmul.f32 %v1082, 2.1237322e-06
        %v1084 = vadd.f32 %v1083, 0.00028619796
        %v1085 = vmul.f32 %v1082, %v1084
        %v1086 = vadd.f32 %v1085, 0.0036580483
        %v1087 = vmul.f32 %v1082, %v1086
        %v1088 = vadd.f32 %v1087, 0.05243302
        %v1089 = vmul.f32 %v1082, %v1088
        %v1090 = vadd.f32 %v1089, 0.18741608
        %v1091 = vmul.f32 %v1082, %v1090
        %v1092 = vadd.f32 %v1091, 1.1283791
        %v1093 = vmul.f32 %v1065, %v1092
        %v1094 = vmul.f32 %v1082, 3.8918573e-05
        %v1095 = vadd.f32 %v1094, 0.001143296
        %v1096 = vmul.f32 %v1082, %v1095
        %v1097 = vadd.f32 %v1096, 0.014752088
        %v1098 = vmul.f32 %v1082, %v1097
        %v1099 = vadd.f32 %v1098, 0.112945676
        %v1100 = vmul.f32 %v1082, %v1099
        %v1101 = vadd.f32 %v1100, 0.4994258
        %v1102 = vmul.f32 %v1082, %v1101
        %v1103 = vadd.f32 %v1102, 1.0
        %v1104 = vrcp.pop %v1103
        %v1105 = vmul.f32 %v1103, %v1104
        %v1106 = vsub.f32 1.0, %v1105
        %v1107 = vmul.f32 %v1104, %v1106
        %v1108 = vadd.f32 %v1104, %v1107
        %vm1109 = vweird.f32 %v1103
        %vm1110 = vweird.f32 %v1104
        %vm1111 = vmor %vm1109, %vm1110
        %v1112 = vsel %vm1111, %v1104, %v1108
        %v1113 = vand.u32 2147483647, %v1103
        %vm1114 = vcmp.eq.f32.partialorder %v1113, 8.507059e+37
        %v1115 = vand.u32 %v1103, 2147483648
        %v1116 = vor.u32 1.1754944e-38, %v1115
        %v1117 = vsel %vm1114, %v1116, %v1112
        %v1118 = vmul.f32 %v1093, %v1117
        %v1119 = vmin.f32 %v1118, 1.0
        %v1120 = vmax.f32 %v1119, -1.0
        %v1121 = vmul.f32 %v1066, %v1066
        %v1122 = vmin.f32 16.0, %v1121
        %v1123 = vmul.f32 %v1122, 2.1237322e-06
        %v1124 = vadd.f32 %v1123, 0.00028619796
        %v1125 = vmul.f32 %v1122, %v1124
        %v1126 = vadd.f32 %v1125, 0.0036580483
        %v1127 = vmul.f32 %v1122, %v1126
        %v1128 = vadd.f32 %v1127, 0.05243302
        %v1129 = vmul.f32 %v1122, %v1128
        %v1130 = vadd.f32 %v1129, 0.18741608
        %v1131 = vmul.f32 %v1122, %v1130
        %v1132 = vadd.f32 %v1131, 1.1283791
        %v1133 = vmul.f32 %v1066, %v1132
        %v1134 = vmul.f32 %v1122, 3.8918573e-05
        %v1135 = vadd.f32 %v1134, 0.001143296
        %v1136 = vmul.f32 %v1122, %v1135
        %v1137 = vadd.f32 %v1136, 0.014752088
        %v1138 = vmul.f32 %v1122, %v1137
        %v1139 = vadd.f32 %v1138, 0.112945676
        %v1140 = vmul.f32 %v1122, %v1139
        %v1141 = vadd.f32 %v1140, 0.4994258
        %v1142 = vmul.f32 %v1122, %v1141
        %v1143 = vadd.f32 %v1142, 1.0
        %v1144 = vrcp.pop %v1143
        %v1145 = vmul.f32 %v1143, %v1144
        %v1146 = vsub.f32 1.0, %v1145
        %v1147 = vmul.f32 %v1144, %v1146
        %v1148 = vadd.f32 %v1144, %v1147
        %vm1149 = vweird.f32 %v1143
        %vm1150 = vweird.f32 %v1144
        %vm1151 = vmor %vm1149, %vm1150
        %v1152 = vsel %vm1151, %v1144, %v1148
        %v1153 = vand.u32 2147483647, %v1143
        %vm1154 = vcmp.eq.f32.partialorder %v1153, 8.507059e+37
        %v1155 = vand.u32 %v1143, 2147483648
        %v1156 = vor.u32 1.1754944e-38, %v1155
        %v1157 = vsel %vm1154, %v1156, %v1152
        %v1158 = vmul.f32 %v1133, %v1157
        %v1159 = vmin.f32 %v1158, 1.0
        %v1160 = vmax.f32 %v1159, -1.0
        %v1161 = vmul.f32 %v1067, %v1067
        %v1162 = vmin.f32 16.0, %v1161
        %v1163 = vmul.f32 %v1162, 2.1237322e-06
        %v1164 = vadd.f32 %v1163, 0.00028619796
        %v1165 = vmul.f32 %v1162, %v1164
        %v1166 = vadd.f32 %v1165, 0.0036580483
        %v1167 = vmul.f32 %v1162, %v1166
        %v1168 = vadd.f32 %v1167, 0.05243302
        %v1169 = vmul.f32 %v1162, %v1168
        %v1170 = vadd.f32 %v1169, 0.18741608
        %v1171 = vmul.f32 %v1162, %v1170
        %v1172 = vadd.f32 %v1171, 1.1283791
        %v1173 = vmul.f32 %v1067, %v1172
        %v1174 = vmul.f32 %v1162, 3.8918573e-05
        %v1175 = vadd.f32 %v1174, 0.001143296
        %v1176 = vmul.f32 %v1162, %v1175
        %v1177 = vadd.f32 %v1176, 0.014752088
        %v1178 = vmul.f32 %v1162, %v1177
        %v1179 = vadd.f32 %v1178, 0.112945676
        %v1180 = vmul.f32 %v1162, %v1179
        %v1181 = vadd.f32 %v1180, 0.4994258
        %v1182 = vmul.f32 %v1162, %v1181
        %v1183 = vadd.f32 %v1182, 1.0
        %v1184 = vrcp.pop %v1183
        %v1185 = vmul.f32 %v1183, %v1184
        %v1186 = vsub.f32 1.0, %v1185
        %v1187 = vmul.f32 %v1184, %v1186
        %v1188 = vadd.f32 %v1184, %v1187
        %vm1189 = vweird.f32 %v1183
        %vm1190 = vweird.f32 %v1184
        %vm1191 = vmor %vm1189, %vm1190
        %v1192 = vsel %vm1191, %v1184, %v1188
        %v1193 = vand.u32 2147483647, %v1183
        %vm1194 = vcmp.eq.f32.partialorder %v1193, 8.507059e+37
        %v1195 = vand.u32 %v1183, 2147483648
        %v1196 = vor.u32 1.1754944e-38, %v1195
        %v1197 = vsel %vm1194, %v1196, %v1192
        %v1198 = vmul.f32 %v1173, %v1197
        %v1199 = vmin.f32 %v1198, 1.0
        %v1200 = vmax.f32 %v1199, -1.0
        %v1201 = vmul.f32 %v1068, %v1068
        %v1202 = vmin.f32 16.0, %v1201
        %v1203 = vmul.f32 %v1202, 2.1237322e-06
        %v1204 = vadd.f32 %v1203, 0.00028619796
        %v1205 = vmul.f32 %v1202, %v1204
        %v1206 = vadd.f32 %v1205, 0.0036580483
        %v1207 = vmul.f32 %v1202, %v1206
        %v1208 = vadd.f32 %v1207, 0.05243302
        %v1209 = vmul.f32 %v1202, %v1208
        %v1210 = vadd.f32 %v1209, 0.18741608
        %v1211 = vmul.f32 %v1202, %v1210
        %v1212 = vadd.f32 %v1211, 1.1283791
        %v1213 = vmul.f32 %v1068, %v1212
        %v1214 = vmul.f32 %v1202, 3.8918573e-05
        %v1215 = vadd.f32 %v1214, 0.001143296
        %v1216 = vmul.f32 %v1202, %v1215
        %v1217 = vadd.f32 %v1216, 0.014752088
        %v1218 = vmul.f32 %v1202, %v1217
        %v1219 = vadd.f32 %v1218, 0.112945676
        %v1220 = vmul.f32 %v1202, %v1219
        %v1221 = vadd.f32 %v1220, 0.4994258
        %v1222 = vmul.f32 %v1202, %v1221
        %v1223 = vadd.f32 %v1222, 1.0
        %v1224 = vrcp.pop %v1223
        %v1225 = vmul.f32 %v1223, %v1224
        %v1226 = vsub.f32 1.0, %v1225
        %v1227 = vmul.f32 %v1224, %v1226
        %v1228 = vadd.f32 %v1224, %v1227
        %vm1229 = vweird.f32 %v1223
        %vm1230 = vweird.f32 %v1224
        %vm1231 = vmor %vm1229, %vm1230
        %v1232 = vsel %vm1231, %v1224, %v1228
        %v1233 = vand.u32 2147483647, %v1223
        %vm1234 = vcmp.eq.f32.partialorder %v1233, 8.507059e+37
        %v1235 = vand.u32 %v1223, 2147483648
        %v1236 = vor.u32 1.1754944e-38, %v1235
        %v1237 = vsel %vm1234, %v1236, %v1232
        %v1238 = vmul.f32 %v1213, %v1237
        %v1239 = vmin.f32 %v1238, 1.0
        %v1240 = vmax.f32 %v1239, -1.0
        %v1241 = vmul.f32 %v1069, %v1069
        %v1242 = vmin.f32 16.0, %v1241
        %v1243 = vmul.f32 %v1242, 2.1237322e-06
        %v1244 = vadd.f32 %v1243, 0.00028619796
        %v1245 = vmul.f32 %v1242, %v1244
        %v1246 = vadd.f32 %v1245, 0.0036580483
        %v1247 = vmul.f32 %v1242, %v1246
        %v1248 = vadd.f32 %v1247, 0.05243302
        %v1249 = vmul.f32 %v1242, %v1248
        %v1250 = vadd.f32 %v1249, 0.18741608
        %v1251 = vmul.f32 %v1242, %v1250
        %v1252 = vadd.f32 %v1251, 1.1283791
        %v1253 = vmul.f32 %v1069, %v1252
        %v1254 = vmul.f32 %v1242, 3.8918573e-05
        %v1255 = vadd.f32 %v1254, 0.001143296
        %v1256 = vmul.f32 %v1242, %v1255
        %v1257 = vadd.f32 %v1256, 0.014752088
        %v1258 = vmul.f32 %v1242, %v1257
        %v1259 = vadd.f32 %v1258, 0.112945676
        %v1260 = vmul.f32 %v1242, %v1259
        %v1261 = vadd.f32 %v1260, 0.4994258
        %v1262 = vmul.f32 %v1242, %v1261
        %v1263 = vadd.f32 %v1262, 1.0
        %v1264 = vrcp.pop %v1263
        %v1265 = vmul.f32 %v1263, %v1264
        %v1266 = vsub.f32 1.0, %v1265
        %v1267 = vmul.f32 %v1264, %v1266
        %v1268 = vadd.f32 %v1264, %v1267
        %vm1269 = vweird.f32 %v1263
        %vm1270 = vweird.f32 %v1264
        %vm1271 = vmor %vm1269, %vm1270
        %v1272 = vsel %vm1271, %v1264, %v1268
        %v1273 = vand.u32 2147483647, %v1263
        %vm1274 = vcmp.eq.f32.partialorder %v1273, 8.507059e+37
        %v1275 = vand.u32 %v1263, 2147483648
        %v1276 = vor.u32 1.1754944e-38, %v1275
        %v1277 = vsel %vm1274, %v1276, %v1272
        %v1278 = vmul.f32 %v1253, %v1277
        %v1279 = vmin.f32 %v1278, 1.0
        %v1280 = vmax.f32 %v1279, -1.0
        %v1281 = vmul.f32 %v1070, %v1070
        %v1282 = vmin.f32 16.0, %v1281
        %v1283 = vmul.f32 %v1282, 2.1237322e-06
        %v1284 = vadd.f32 %v1283, 0.00028619796
        %v1285 = vmul.f32 %v1282, %v1284
        %v1286 = vadd.f32 %v1285, 0.0036580483
        %v1287 = vmul.f32 %v1282, %v1286
        %v1288 = vadd.f32 %v1287, 0.05243302
        %v1289 = vmul.f32 %v1282, %v1288
        %v1290 = vadd.f32 %v1289, 0.18741608
        %v1291 = vmul.f32 %v1282, %v1290
        %v1292 = vadd.f32 %v1291, 1.1283791
        %v1293 = vmul.f32 %v1070, %v1292
        %v1294 = vmul.f32 %v1282, 3.8918573e-05
        %v1295 = vadd.f32 %v1294, 0.001143296
        %v1296 = vmul.f32 %v1282, %v1295
        %v1297 = vadd.f32 %v1296, 0.014752088
        %v1298 = vmul.f32 %v1282, %v1297
        %v1299 = vadd.f32 %v1298, 0.112945676
        %v1300 = vmul.f32 %v1282, %v1299
        %v1301 = vadd.f32 %v1300, 0.4994258
        %v1302 = vmul.f32 %v1282, %v1301
        %v1303 = vadd.f32 %v1302, 1.0
        %v1304 = vrcp.pop %v1303
        %v1305 = vmul.f32 %v1303, %v1304
        %v1306 = vsub.f32 1.0, %v1305
        %v1307 = vmul.f32 %v1304, %v1306
        %v1308 = vadd.f32 %v1304, %v1307
        %vm1309 = vweird.f32 %v1303
        %vm1310 = vweird.f32 %v1304
        %vm1311 = vmor %vm1309, %vm1310
        %v1312 = vsel %vm1311, %v1304, %v1308
        %v1313 = vand.u32 2147483647, %v1303
        %vm1314 = vcmp.eq.f32.partialorder %v1313, 8.507059e+37
        %v1315 = vand.u32 %v1303, 2147483648
        %v1316 = vor.u32 1.1754944e-38, %v1315
        %v1317 = vsel %vm1314, %v1316, %v1312
        %v1318 = vmul.f32 %v1293, %v1317
        %v1319 = vmin.f32 %v1318, 1.0
        %v1320 = vmax.f32 %v1319, -1.0
        %v1321 = vmul.f32 %v1071, %v1071
        %v1322 = vmin.f32 16.0, %v1321
        %v1323 = vmul.f32 %v1322, 2.1237322e-06
        %v1324 = vadd.f32 %v1323, 0.00028619796
        %v1325 = vmul.f32 %v1322, %v1324
        %v1326 = vadd.f32 %v1325, 0.0036580483
        %v1327 = vmul.f32 %v1322, %v1326
        %v1328 = vadd.f32 %v1327, 0.05243302
        %v1329 = vmul.f32 %v1322, %v1328
        %v1330 = vadd.f32 %v1329, 0.18741608
        %v1331 = vmul.f32 %v1322, %v1330
        %v1332 = vadd.f32 %v1331, 1.1283791
        %v1333 = vmul.f32 %v1071, %v1332
        %v1334 = vmul.f32 %v1322, 3.8918573e-05
        %v1335 = vadd.f32 %v1334, 0.001143296
        %v1336 = vmul.f32 %v1322, %v1335
        %v1337 = vadd.f32 %v1336, 0.014752088
        %v1338 = vmul.f32 %v1322, %v1337
        %v1339 = vadd.f32 %v1338, 0.112945676
        %v1340 = vmul.f32 %v1322, %v1339
        %v1341 = vadd.f32 %v1340, 0.4994258
        %v1342 = vmul.f32 %v1322, %v1341
        %v1343 = vadd.f32 %v1342, 1.0
        %v1344 = vrcp.pop %v1343
        %v1345 = vmul.f32 %v1343, %v1344
        %v1346 = vsub.f32 1.0, %v1345
        %v1347 = vmul.f32 %v1344, %v1346
        %v1348 = vadd.f32 %v1344, %v1347
        %vm1349 = vweird.f32 %v1343
        %vm1350 = vweird.f32 %v1344
        %vm1351 = vmor %vm1349, %vm1350
        %v1352 = vsel %vm1351, %v1344, %v1348
        %v1353 = vand.u32 2147483647, %v1343
        %vm1354 = vcmp.eq.f32.partialorder %v1353, 8.507059e+37
        %v1355 = vand.u32 %v1343, 2147483648
        %v1356 = vor.u32 1.1754944e-38, %v1355
        %v1357 = vsel %vm1354, %v1356, %v1352
        %v1358 = vmul.f32 %v1333, %v1357
        %v1359 = vmin.f32 %v1358, 1.0
        %v1360 = vmax.f32 %v1359, -1.0
        %v1361 = vmul.f32 %v1072, %v1072
        %v1362 = vmin.f32 16.0, %v1361
        %v1363 = vmul.f32 %v1362, 2.1237322e-06
        %v1364 = vadd.f32 %v1363, 0.00028619796
        %v1365 = vmul.f32 %v1362, %v1364
        %v1366 = vadd.f32 %v1365, 0.0036580483
        %v1367 = vmul.f32 %v1362, %v1366
        %v1368 = vadd.f32 %v1367, 0.05243302
        %v1369 = vmul.f32 %v1362, %v1368
        %v1370 = vadd.f32 %v1369, 0.18741608
        %v1371 = vmul.f32 %v1362, %v1370
        %v1372 = vadd.f32 %v1371, 1.1283791
        %v1373 = vmul.f32 %v1072, %v1372
        %v1374 = vmul.f32 %v1362, 3.8918573e-05
        %v1375 = vadd.f32 %v1374, 0.001143296
        %v1376 = vmul.f32 %v1362, %v1375
        %v1377 = vadd.f32 %v1376, 0.014752088
        %v1378 = vmul.f32 %v1362, %v1377
        %v1379 = vadd.f32 %v1378, 0.112945676
        %v1380 = vmul.f32 %v1362, %v1379
        %v1381 = vadd.f32 %v1380, 0.4994258
        %v1382 = vmul.f32 %v1362, %v1381
        %v1383 = vadd.f32 %v1382, 1.0
        %v1384 = vrcp.pop %v1383
        %v1385 = vmul.f32 %v1383, %v1384
        %v1386 = vsub.f32 1.0, %v1385
        %v1387 = vmul.f32 %v1384, %v1386
        %v1388 = vadd.f32 %v1384, %v1387
        %vm1389 = vweird.f32 %v1383
        %vm1390 = vweird.f32 %v1384
        %vm1391 = vmor %vm1389, %vm1390
        %v1392 = vsel %vm1391, %v1384, %v1388
        %v1393 = vand.u32 2147483647, %v1383
        %vm1394 = vcmp.eq.f32.partialorder %v1393, 8.507059e+37
        %v1395 = vand.u32 %v1383, 2147483648
        %v1396 = vor.u32 1.1754944e-38, %v1395
        %v1397 = vsel %vm1394, %v1396, %v1392
        %v1398 = vmul.f32 %v1373, %v1397
        %v1399 = vmin.f32 %v1398, 1.0
        %v1400 = vmax.f32 %v1399, -1.0
        %v1401 = vmul.f32 %v1073, %v1073
        %v1402 = vmin.f32 16.0, %v1401
        %v1403 = vmul.f32 %v1402, 2.1237322e-06
        %v1404 = vadd.f32 %v1403, 0.00028619796
        %v1405 = vmul.f32 %v1402, %v1404
        %v1406 = vadd.f32 %v1405, 0.0036580483
        %v1407 = vmul.f32 %v1402, %v1406
        %v1408 = vadd.f32 %v1407, 0.05243302
        %v1409 = vmul.f32 %v1402, %v1408
        %v1410 = vadd.f32 %v1409, 0.18741608
        %v1411 = vmul.f32 %v1402, %v1410
        %v1412 = vadd.f32 %v1411, 1.1283791
        %v1413 = vmul.f32 %v1073, %v1412
        %v1414 = vmul.f32 %v1402, 3.8918573e-05
        %v1415 = vadd.f32 %v1414, 0.001143296
        %v1416 = vmul.f32 %v1402, %v1415
        %v1417 = vadd.f32 %v1416, 0.014752088
        %v1418 = vmul.f32 %v1402, %v1417
        %v1419 = vadd.f32 %v1418, 0.112945676
        %v1420 = vmul.f32 %v1402, %v1419
        %v1421 = vadd.f32 %v1420, 0.4994258
        %v1422 = vmul.f32 %v1402, %v1421
        %v1423 = vadd.f32 %v1422, 1.0
        %v1424 = vrcp.pop %v1423
        %v1425 = vmul.f32 %v1423, %v1424
        %v1426 = vsub.f32 1.0, %v1425
        %v1427 = vmul.f32 %v1424, %v1426
        %v1428 = vadd.f32 %v1424, %v1427
        %vm1429 = vweird.f32 %v1423
        %vm1430 = vweird.f32 %v1424
        %vm1431 = vmor %vm1429, %vm1430
        %v1432 = vsel %vm1431, %v1424, %v1428
        %v1433 = vand.u32 2147483647, %v1423
        %vm1434 = vcmp.eq.f32.partialorder %v1433, 8.507059e+37
        %v1435 = vand.u32 %v1423, 2147483648
        %v1436 = vor.u32 1.1754944e-38, %v1435
        %v1437 = vsel %vm1434, %v1436, %v1432
        %v1438 = vmul.f32 %v1413, %v1437
        %v1439 = vmin.f32 %v1438, 1.0
        %v1440 = vmax.f32 %v1439, -1.0
        %v1441 = vmul.f32 %v1074, %v1074
        %v1442 = vmin.f32 16.0, %v1441
        %v1443 = vmul.f32 %v1442, 2.1237322e-06
        %v1444 = vadd.f32 %v1443, 0.00028619796
        %v1445 = vmul.f32 %v1442, %v1444
        %v1446 = vadd.f32 %v1445, 0.0036580483
        %v1447 = vmul.f32 %v1442, %v1446
        %v1448 = vadd.f32 %v1447, 0.05243302
        %v1449 = vmul.f32 %v1442, %v1448
        %v1450 = vadd.f32 %v1449, 0.18741608
        %v1451 = vmul.f32 %v1442, %v1450
        %v1452 = vadd.f32 %v1451, 1.1283791
        %v1453 = vmul.f32 %v1074, %v1452
        %v1454 = vmul.f32 %v1442, 3.8918573e-05
        %v1455 = vadd.f32 %v1454, 0.001143296
        %v1456 = vmul.f32 %v1442, %v1455
        %v1457 = vadd.f32 %v1456, 0.014752088
        %v1458 = vmul.f32 %v1442, %v1457
        %v1459 = vadd.f32 %v1458, 0.112945676
        %v1460 = vmul.f32 %v1442, %v1459
        %v1461 = vadd.f32 %v1460, 0.4994258
        %v1462 = vmul.f32 %v1442, %v1461
        %v1463 = vadd.f32 %v1462, 1.0
        %v1464 = vrcp.pop %v1463
        %v1465 = vmul.f32 %v1463, %v1464
        %v1466 = vsub.f32 1.0, %v1465
        %v1467 = vmul.f32 %v1464, %v1466
        %v1468 = vadd.f32 %v1464, %v1467
        %vm1469 = vweird.f32 %v1463
        %vm1470 = vweird.f32 %v1464
        %vm1471 = vmor %vm1469, %vm1470
        %v1472 = vsel %vm1471, %v1464, %v1468
        %v1473 = vand.u32 2147483647, %v1463
        %vm1474 = vcmp.eq.f32.partialorder %v1473, 8.507059e+37
        %v1475 = vand.u32 %v1463, 2147483648
        %v1476 = vor.u32 1.1754944e-38, %v1475
        %v1477 = vsel %vm1474, %v1476, %v1472
        %v1478 = vmul.f32 %v1453, %v1477
        %v1479 = vmin.f32 %v1478, 1.0
        %v1480 = vmax.f32 %v1479, -1.0
        %v1481 = vmul.f32 %v1075, %v1075
        %v1482 = vmin.f32 16.0, %v1481
        %v1483 = vmul.f32 %v1482, 2.1237322e-06
        %v1484 = vadd.f32 %v1483, 0.00028619796
        %v1485 = vmul.f32 %v1482, %v1484
        %v1486 = vadd.f32 %v1485, 0.0036580483
        %v1487 = vmul.f32 %v1482, %v1486
        %v1488 = vadd.f32 %v1487, 0.05243302
        %v1489 = vmul.f32 %v1482, %v1488
        %v1490 = vadd.f32 %v1489, 0.18741608
        %v1491 = vmul.f32 %v1482, %v1490
        %v1492 = vadd.f32 %v1491, 1.1283791
        %v1493 = vmul.f32 %v1075, %v1492
        %v1494 = vmul.f32 %v1482, 3.8918573e-05
        %v1495 = vadd.f32 %v1494, 0.001143296
        %v1496 = vmul.f32 %v1482, %v1495
        %v1497 = vadd.f32 %v1496, 0.014752088
        %v1498 = vmul.f32 %v1482, %v1497
        %v1499 = vadd.f32 %v1498, 0.112945676
        %v1500 = vmul.f32 %v1482, %v1499
        %v1501 = vadd.f32 %v1500, 0.4994258
        %v1502 = vmul.f32 %v1482, %v1501
        %v1503 = vadd.f32 %v1502, 1.0
        %v1504 = vrcp.pop %v1503
        %v1505 = vmul.f32 %v1503, %v1504
        %v1506 = vsub.f32 1.0, %v1505
        %v1507 = vmul.f32 %v1504, %v1506
        %v1508 = vadd.f32 %v1504, %v1507
        %vm1509 = vweird.f32 %v1503
        %vm1510 = vweird.f32 %v1504
        %vm1511 = vmor %vm1509, %vm1510
        %v1512 = vsel %vm1511, %v1504, %v1508
        %v1513 = vand.u32 2147483647, %v1503
        %vm1514 = vcmp.eq.f32.partialorder %v1513, 8.507059e+37
        %v1515 = vand.u32 %v1503, 2147483648
        %v1516 = vor.u32 1.1754944e-38, %v1515
        %v1517 = vsel %vm1514, %v1516, %v1512
        %v1518 = vmul.f32 %v1493, %v1517
        %v1519 = vmin.f32 %v1518, 1.0
        %v1520 = vmax.f32 %v1519, -1.0
        %v1521 = vmul.f32 %v1076, %v1076
        %v1522 = vmin.f32 16.0, %v1521
        %v1523 = vmul.f32 %v1522, 2.1237322e-06
        %v1524 = vadd.f32 %v1523, 0.00028619796
        %v1525 = vmul.f32 %v1522, %v1524
        %v1526 = vadd.f32 %v1525, 0.0036580483
        %v1527 = vmul.f32 %v1522, %v1526
        %v1528 = vadd.f32 %v1527, 0.05243302
        %v1529 = vmul.f32 %v1522, %v1528
        %v1530 = vadd.f32 %v1529, 0.18741608
        %v1531 = vmul.f32 %v1522, %v1530
        %v1532 = vadd.f32 %v1531, 1.1283791
        %v1533 = vmul.f32 %v1076, %v1532
        %v1534 = vmul.f32 %v1522, 3.8918573e-05
        %v1535 = vadd.f32 %v1534, 0.001143296
        %v1536 = vmul.f32 %v1522, %v1535
        %v1537 = vadd.f32 %v1536, 0.014752088
        %v1538 = vmul.f32 %v1522, %v1537
        %v1539 = vadd.f32 %v1538, 0.112945676
        %v1540 = vmul.f32 %v1522, %v1539
        %v1541 = vadd.f32 %v1540, 0.4994258
        %v1542 = vmul.f32 %v1522, %v1541
        %v1543 = vadd.f32 %v1542, 1.0
        %v1544 = vrcp.pop %v1543
        %v1545 = vmul.f32 %v1543, %v1544
        %v1546 = vsub.f32 1.0, %v1545
        %v1547 = vmul.f32 %v1544, %v1546
        %v1548 = vadd.f32 %v1544, %v1547
        %vm1549 = vweird.f32 %v1543
        %vm1550 = vweird.f32 %v1544
        %vm1551 = vmor %vm1549, %vm1550
        %v1552 = vsel %vm1551, %v1544, %v1548
        %v1553 = vand.u32 2147483647, %v1543
        %vm1554 = vcmp.eq.f32.partialorder %v1553, 8.507059e+37
        %v1555 = vand.u32 %v1543, 2147483648
        %v1556 = vor.u32 1.1754944e-38, %v1555
        %v1557 = vsel %vm1554, %v1556, %v1552
        %v1558 = vmul.f32 %v1533, %v1557
        %v1559 = vmin.f32 %v1558, 1.0
        %v1560 = vmax.f32 %v1559, -1.0
        %v1561 = vmul.f32 %v1077, %v1077
        %v1562 = vmin.f32 16.0, %v1561
        %v1563 = vmul.f32 %v1562, 2.1237322e-06
        %v1564 = vadd.f32 %v1563, 0.00028619796
        %v1565 = vmul.f32 %v1562, %v1564
        %v1566 = vadd.f32 %v1565, 0.0036580483
        %v1567 = vmul.f32 %v1562, %v1566
        %v1568 = vadd.f32 %v1567, 0.05243302
        %v1569 = vmul.f32 %v1562, %v1568
        %v1570 = vadd.f32 %v1569, 0.18741608
        %v1571 = vmul.f32 %v1562, %v1570
        %v1572 = vadd.f32 %v1571, 1.1283791
        %v1573 = vmul.f32 %v1077, %v1572
        %v1574 = vmul.f32 %v1562, 3.8918573e-05
        %v1575 = vadd.f32 %v1574, 0.001143296
        %v1576 = vmul.f32 %v1562, %v1575
        %v1577 = vadd.f32 %v1576, 0.014752088
        %v1578 = vmul.f32 %v1562, %v1577
        %v1579 = vadd.f32 %v1578, 0.112945676
        %v1580 = vmul.f32 %v1562, %v1579
        %v1581 = vadd.f32 %v1580, 0.4994258
        %v1582 = vmul.f32 %v1562, %v1581
        %v1583 = vadd.f32 %v1582, 1.0
        %v1584 = vrcp.pop %v1583
        %v1585 = vmul.f32 %v1583, %v1584
        %v1586 = vsub.f32 1.0, %v1585
        %v1587 = vmul.f32 %v1584, %v1586
        %v1588 = vadd.f32 %v1584, %v1587
        %vm1589 = vweird.f32 %v1583
        %vm1590 = vweird.f32 %v1584
        %vm1591 = vmor %vm1589, %vm1590
        %v1592 = vsel %vm1591, %v1584, %v1588
        %v1593 = vand.u32 2147483647, %v1583
        %vm1594 = vcmp.eq.f32.partialorder %v1593, 8.507059e+37
        %v1595 = vand.u32 %v1583, 2147483648
        %v1596 = vor.u32 1.1754944e-38, %v1595
        %v1597 = vsel %vm1594, %v1596, %v1592
        %v1598 = vmul.f32 %v1573, %v1597
        %v1599 = vmin.f32 %v1598, 1.0
        %v1600 = vmax.f32 %v1599, -1.0
        %v1601 = vmul.f32 %v1078, %v1078
        %v1602 = vmin.f32 16.0, %v1601
        %v1603 = vmul.f32 %v1602, 2.1237322e-06
        %v1604 = vadd.f32 %v1603, 0.00028619796
        %v1605 = vmul.f32 %v1602, %v1604
        %v1606 = vadd.f32 %v1605, 0.0036580483
        %v1607 = vmul.f32 %v1602, %v1606
        %v1608 = vadd.f32 %v1607, 0.05243302
        %v1609 = vmul.f32 %v1602, %v1608
        %v1610 = vadd.f32 %v1609, 0.18741608
        %v1611 = vmul.f32 %v1602, %v1610
        %v1612 = vadd.f32 %v1611, 1.1283791
        %v1613 = vmul.f32 %v1078, %v1612
        %v1614 = vmul.f32 %v1602, 3.8918573e-05
        %v1615 = vadd.f32 %v1614, 0.001143296
        %v1616 = vmul.f32 %v1602, %v1615
        %v1617 = vadd.f32 %v1616, 0.014752088
        %v1618 = vmul.f32 %v1602, %v1617
        %v1619 = vadd.f32 %v1618, 0.112945676
        %v1620 = vmul.f32 %v1602, %v1619
        %v1621 = vadd.f32 %v1620, 0.4994258
        %v1622 = vmul.f32 %v1602, %v1621
        %v1623 = vadd.f32 %v1622, 1.0
        %v1624 = vrcp.pop %v1623
        %v1625 = vmul.f32 %v1623, %v1624
        %v1626 = vsub.f32 1.0, %v1625
        %v1627 = vmul.f32 %v1624, %v1626
        %v1628 = vadd.f32 %v1624, %v1627
        %vm1629 = vweird.f32 %v1623
        %vm1630 = vweird.f32 %v1624
        %vm1631 = vmor %vm1629, %vm1630
        %v1632 = vsel %vm1631, %v1624, %v1628
        %v1633 = vand.u32 2147483647, %v1623
        %vm1634 = vcmp.eq.f32.partialorder %v1633, 8.507059e+37
        %v1635 = vand.u32 %v1623, 2147483648
        %v1636 = vor.u32 1.1754944e-38, %v1635
        %v1637 = vsel %vm1634, %v1636, %v1632
        %v1638 = vmul.f32 %v1613, %v1637
        %v1639 = vmin.f32 %v1638, 1.0
        %v1640 = vmax.f32 %v1639, -1.0
        %v1641 = vmul.f32 %v1079, %v1079
        %v1642 = vmin.f32 16.0, %v1641
        %v1643 = vmul.f32 %v1642, 2.1237322e-06
        %v1644 = vadd.f32 %v1643, 0.00028619796
        %v1645 = vmul.f32 %v1642, %v1644
        %v1646 = vadd.f32 %v1645, 0.0036580483
        %v1647 = vmul.f32 %v1642, %v1646
        %v1648 = vadd.f32 %v1647, 0.05243302
        %v1649 = vmul.f32 %v1642, %v1648
        %v1650 = vadd.f32 %v1649, 0.18741608
        %v1651 = vmul.f32 %v1642, %v1650
        %v1652 = vadd.f32 %v1651, 1.1283791
        %v1653 = vmul.f32 %v1079, %v1652
        %v1654 = vmul.f32 %v1642, 3.8918573e-05
        %v1655 = vadd.f32 %v1654, 0.001143296
        %v1656 = vmul.f32 %v1642, %v1655
        %v1657 = vadd.f32 %v1656, 0.014752088
        %v1658 = vmul.f32 %v1642, %v1657
        %v1659 = vadd.f32 %v1658, 0.112945676
        %v1660 = vmul.f32 %v1642, %v1659
        %v1661 = vadd.f32 %v1660, 0.4994258
        %v1662 = vmul.f32 %v1642, %v1661
        %v1663 = vadd.f32 %v1662, 1.0
        %v1664 = vrcp.pop %v1663
        %v1665 = vmul.f32 %v1663, %v1664
        %v1666 = vsub.f32 1.0, %v1665
        %v1667 = vmul.f32 %v1664, %v1666
        %v1668 = vadd.f32 %v1664, %v1667
        %vm1669 = vweird.f32 %v1663
        %vm1670 = vweird.f32 %v1664
        %vm1671 = vmor %vm1669, %vm1670
        %v1672 = vsel %vm1671, %v1664, %v1668
        %v1673 = vand.u32 2147483647, %v1663
        %vm1674 = vcmp.eq.f32.partialorder %v1673, 8.507059e+37
        %v1675 = vand.u32 %v1663, 2147483648
        %v1676 = vor.u32 1.1754944e-38, %v1675
        %v1677 = vsel %vm1674, %v1676, %v1672
        %v1678 = vmul.f32 %v1653, %v1677
        %v1679 = vmin.f32 %v1678, 1.0
        %v1680 = vmax.f32 %v1679, -1.0
        %v1681 = vmul.f32 %v1080, %v1080
        %v1682 = vmin.f32 16.0, %v1681
        %v1683 = vmul.f32 %v1682, 2.1237322e-06
        %v1684 = vadd.f32 %v1683, 0.00028619796
        %v1685 = vmul.f32 %v1682, %v1684
        %v1686 = vadd.f32 %v1685, 0.0036580483
        %v1687 = vmul.f32 %v1682, %v1686
        %v1688 = vadd.f32 %v1687, 0.05243302
        %v1689 = vmul.f32 %v1682, %v1688
        %v1690 = vadd.f32 %v1689, 0.18741608
        %v1691 = vmul.f32 %v1682, %v1690
        %v1692 = vadd.f32 %v1691, 1.1283791
        %v1693 = vmul.f32 %v1080, %v1692
        %v1694 = vmul.f32 %v1682, 3.8918573e-05
        %v1695 = vadd.f32 %v1694, 0.001143296
        %v1696 = vmul.f32 %v1682, %v1695
        %v1697 = vadd.f32 %v1696, 0.014752088
        %v1698 = vmul.f32 %v1682, %v1697
        %v1699 = vadd.f32 %v1698, 0.112945676
        %v1700 = vmul.f32 %v1682, %v1699
        %v1701 = vadd.f32 %v1700, 0.4994258
        %v1702 = vmul.f32 %v1682, %v1701
        %v1703 = vadd.f32 %v1702, 1.0
        %v1704 = vrcp.pop %v1703
        %v1705 = vmul.f32 %v1703, %v1704
        %v1706 = vsub.f32 1.0, %v1705
        %v1707 = vmul.f32 %v1704, %v1706
        %v1708 = vadd.f32 %v1704, %v1707
        %vm1709 = vweird.f32 %v1703
        %vm1710 = vweird.f32 %v1704
        %vm1711 = vmor %vm1709, %vm1710
        %v1712 = vsel %vm1711, %v1704, %v1708
        %v1713 = vand.u32 2147483647, %v1703
        %vm1714 = vcmp.eq.f32.partialorder %v1713, 8.507059e+37
        %v1715 = vand.u32 %v1703, 2147483648
        %v1716 = vor.u32 1.1754944e-38, %v1715
        %v1717 = vsel %vm1714, %v1716, %v1712
        %v1718 = vmul.f32 %v1693, %v1717
        %v1719 = vmin.f32 %v1718, 1.0
        %v1720 = vmax.f32 %v1719, -1.0
        %v1721 = vadd.f32 %v1120, 1.0
        %v1722 = vadd.f32 %v1160, 1.0
        %v1723 = vadd.f32 %v1200, 1.0
        %v1724 = vadd.f32 %v1240, 1.0
        %v1725 = vadd.f32 %v1280, 1.0
        %v1726 = vadd.f32 %v1320, 1.0
        %v1727 = vadd.f32 %v1360, 1.0
        %v1728 = vadd.f32 %v1400, 1.0
        %v1729 = vadd.f32 %v1440, 1.0
        %v1730 = vadd.f32 %v1480, 1.0
        %v1731 = vadd.f32 %v1520, 1.0
        %v1732 = vadd.f32 %v1560, 1.0
        %v1733 = vadd.f32 %v1600, 1.0
        %v1734 = vadd.f32 %v1640, 1.0
        %v1735 = vadd.f32 %v1680, 1.0
        %v1736 = vadd.f32 %v1720, 1.0
        %v1737 = vmul.f32 %v1049, %v1721
        %v1738 = vmul.f32 %v1050, %v1722
        %v1739 = vmul.f32 %v1051, %v1723
        %v1740 = vmul.f32 %v1052, %v1724
        %v1741 = vmul.f32 %v1053, %v1725
        %v1742 = vmul.f32 %v1054, %v1726
        %v1743 = vmul.f32 %v1055, %v1727
        %v1744 = vmul.f32 %v1056, %v1728
        %v1745 = vmul.f32 %v1057, %v1729
        %v1746 = vmul.f32 %v1058, %v1730
        %v1747 = vmul.f32 %v1059, %v1731
        %v1748 = vmul.f32 %v1060, %v1732
        %v1749 = vmul.f32 %v1061, %v1733
        %v1750 = vmul.f32 %v1062, %v1734
        %v1751 = vmul.f32 %v1063, %v1735
        %v1752 = vmul.f32 %v1064, %v1736
        %v1753 = vld [vmem:[%s5] sm:$0xf]
        %v1754 = vld [vmem:[%s5 + $0x4] sm:$0xf]
        %v1755 = vld [vmem:[%s5 + $0x8] sm:$0xf]
        %v1756 = vld [vmem:[%s5 + $0xc] sm:$0xf]
        %v1757 = vld [vmem:[%s5 + $0x10] sm:$0xf]
        %v1758 = vld [vmem:[%s5 + $0x14] sm:$0xf]
        %v1759 = vld [vmem:[%s5 + $0x18] sm:$0xf]
        %v1760 = vld [vmem:[%s5 + $0x1c] sm:$0xf]
        %v1761 = vld [vmem:[%s5 + $0x20] sm:$0xf]
        %v1762 = vld [vmem:[%s5 + $0x24] sm:$0xf]
        %v1763 = vld [vmem:[%s5 + $0x28] sm:$0xf]
        %v1764 = vld [vmem:[%s5 + $0x2c] sm:$0xf]
        %v1765 = vld [vmem:[%s5 + $0x30] sm:$0xf]
        %v1766 = vld [vmem:[%s5 + $0x34] sm:$0xf]
        %v1767 = vld [vmem:[%s5 + $0x38] sm:$0xf]
        %v1768 = vld [vmem:[%s5 + $0x3c] sm:$0xf]
        %v1769 = vld [vmem:[%s7] sm:$0x1]
        %v1771 = vperm.slane %v1769, 0
        %v1789 = vunpack.c.l.b16 %v1753
        %v1790 = vunpack.c.l.b16 %v1754
        %v1791 = vunpack.c.l.b16 %v1755
        %v1792 = vunpack.c.l.b16 %v1756
        %v1793 = vunpack.c.l.b16 %v1757
        %v1794 = vunpack.c.l.b16 %v1758
        %v1795 = vunpack.c.l.b16 %v1759
        %v1796 = vunpack.c.l.b16 %v1760
        %v1797 = vunpack.c.l.b16 %v1761
        %v1798 = vunpack.c.l.b16 %v1762
        %v1799 = vunpack.c.l.b16 %v1763
        %v1800 = vunpack.c.l.b16 %v1764
        %v1801 = vunpack.c.l.b16 %v1765
        %v1802 = vunpack.c.l.b16 %v1766
        %v1803 = vunpack.c.l.b16 %v1767
        %v1804 = vunpack.c.l.b16 %v1768
        %v1805 = vpack.c.b16 %v1790, %v1789
        %v1806 = vpack.c.b16 %v1792, %v1791
        %v1807 = vpack.c.b16 %v1794, %v1793
        %v1808 = vpack.c.b16 %v1796, %v1795
        %v1809 = vpack.c.b16 %v1798, %v1797
        %v1810 = vpack.c.b16 %v1800, %v1799
        %v1811 = vpack.c.b16 %v1802, %v1801
        %v1812 = vpack.c.b16 %v1804, %v1803
        %1821 = vmatpush.bf16.msra.mxu0 %v1812
        %1822 = vmatpush.bf16.msra.mxu0 %v1811
        %1823 = vmatpush.bf16.msra.mxu0 %v1810
        %1824 = vmatpush.bf16.msra.mxu0 %v1809
        %1825 = vmatpush.bf16.msra.mxu0 %v1808
        %1826 = vmatpush.bf16.msra.mxu0 %v1807
        %1827 = vmatpush.bf16.msra.mxu0 %v1806
        %1828 = vmatpush.bf16.msra.mxu0 %v1805
        %1829 = vmatmul.bf16.gmra.mxu0 %v924
        %v1830 = vpop.f32.mrf.mxu0
        %v1831 = vadd.f32 %v1771, %v1830
        %v1832 = vpop.f32.mrf.mxu0
        %v1833 = vadd.f32 %v1771, %v1832
        %1834 = vmatmul.bf16.gmra.mxu0 %v925
        %v1835 = vpop.f32.mrf.mxu0
        %v1836 = vadd.f32 %v1771, %v1835
        %v1837 = vpop.f32.mrf.mxu0
        %v1838 = vadd.f32 %v1771, %v1837
        %1839 = vmatmul.bf16.gmra.mxu0 %v926
        %v1840 = vpop.f32.mrf.mxu0
        %v1841 = vadd.f32 %v1771, %v1840
        %v1842 = vpop.f32.mrf.mxu0
        %v1843 = vadd.f32 %v1771, %v1842
        %1844 = vmatmul.bf16.gmra.mxu0 %v927
        %v1845 = vpop.f32.mrf.mxu0
        %v1846 = vadd.f32 %v1771, %v1845
        %v1847 = vpop.f32.mrf.mxu0
        %v1848 = vadd.f32 %v1771, %v1847
        %1849 = vmatmul.bf16.gmra.mxu0 %v928
        %v1850 = vpop.f32.mrf.mxu0
        %v1851 = vadd.f32 %v1771, %v1850
        %v1852 = vpop.f32.mrf.mxu0
        %v1853 = vadd.f32 %v1771, %v1852
        %1854 = vmatmul.bf16.gmra.mxu0 %v929
        %v1855 = vpop.f32.mrf.mxu0
        %v1856 = vadd.f32 %v1771, %v1855
        %v1857 = vpop.f32.mrf.mxu0
        %v1858 = vadd.f32 %v1771, %v1857
        %1859 = vmatmul.bf16.gmra.mxu0 %v930
        %v1860 = vpop.f32.mrf.mxu0
        %v1861 = vadd.f32 %v1771, %v1860
        %v1862 = vpop.f32.mrf.mxu0
        %v1863 = vadd.f32 %v1771, %v1862
        %1864 = vmatmul.bf16.gmra.mxu0 %v931
        %v1865 = vpop.f32.mrf.mxu0
        %v1866 = vadd.f32 %v1771, %v1865
        %v1867 = vpop.f32.mrf.mxu0
        %v1868 = vadd.f32 %v1771, %v1867
        %1869 = vdwg.mxu0
        %v1870 = vmul.f32 %v1831, 0.5
        %v1871 = vmul.f32 %v1833, 0.5
        %v1872 = vmul.f32 %v1836, 0.5
        %v1873 = vmul.f32 %v1838, 0.5
        %v1874 = vmul.f32 %v1841, 0.5
        %v1875 = vmul.f32 %v1843, 0.5
        %v1876 = vmul.f32 %v1846, 0.5
        %v1877 = vmul.f32 %v1848, 0.5
        %v1878 = vmul.f32 %v1851, 0.5
        %v1879 = vmul.f32 %v1853, 0.5
        %v1880 = vmul.f32 %v1856, 0.5
        %v1881 = vmul.f32 %v1858, 0.5
        %v1882 = vmul.f32 %v1861, 0.5
        %v1883 = vmul.f32 %v1863, 0.5
        %v1884 = vmul.f32 %v1866, 0.5
        %v1885 = vmul.f32 %v1868, 0.5
        %v1886 = vmul.f32 %v1831, 0.70710677
        %v1887 = vmul.f32 %v1833, 0.70710677
        %v1888 = vmul.f32 %v1836, 0.70710677
        %v1889 = vmul.f32 %v1838, 0.70710677
        %v1890 = vmul.f32 %v1841, 0.70710677
        %v1891 = vmul.f32 %v1843, 0.70710677
        %v1892 = vmul.f32 %v1846, 0.70710677
        %v1893 = vmul.f32 %v1848, 0.70710677
        %v1894 = vmul.f32 %v1851, 0.70710677
        %v1895 = vmul.f32 %v1853, 0.70710677
        %v1896 = vmul.f32 %v1856, 0.70710677
        %v1897 = vmul.f32 %v1858, 0.70710677
        %v1898 = vmul.f32 %v1861, 0.70710677
        %v1899 = vmul.f32 %v1863, 0.70710677
        %v1900 = vmul.f32 %v1866, 0.70710677
        %v1901 = vmul.f32 %v1868, 0.70710677
        %v1902 = vmul.f32 %v1886, %v1886
        %v1903 = vmin.f32 16.0, %v1902
        %v1904 = vmul.f32 %v1903, 2.1237322e-06
        %v1905 = vadd.f32 %v1904, 0.00028619796
        %v1906 = vmul.f32 %v1903, %v1905
        %v1907 = vadd.f32 %v1906, 0.0036580483
        %v1908 = vmul.f32 %v1903, %v1907
        %v1909 = vadd.f32 %v1908, 0.05243302
        %v1910 = vmul.f32 %v1903, %v1909
        %v1911 = vadd.f32 %v1910, 0.18741608
        %v1912 = vmul.f32 %v1903, %v1911
        %v1913 = vadd.f32 %v1912, 1.1283791
        %v1914 = vmul.f32 %v1886, %v1913
        %v1915 = vmul.f32 %v1903, 3.8918573e-05
        %v1916 = vadd.f32 %v1915, 0.001143296
        %v1917 = vmul.f32 %v1903, %v1916
        %v1918 = vadd.f32 %v1917, 0.014752088
        %v1919 = vmul.f32 %v1903, %v1918
        %v1920 = vadd.f32 %v1919, 0.112945676
        %v1921 = vmul.f32 %v1903, %v1920
        %v1922 = vadd.f32 %v1921, 0.4994258
        %v1923 = vmul.f32 %v1903, %v1922
        %v1924 = vadd.f32 %v1923, 1.0
        %v1925 = vrcp.pop %v1924
        %v1926 = vmul.f32 %v1924, %v1925
        %v1927 = vsub.f32 1.0, %v1926
        %v1928 = vmul.f32 %v1925, %v1927
        %v1929 = vadd.f32 %v1925, %v1928
        %vm1930 = vweird.f32 %v1924
        %vm1931 = vweird.f32 %v1925
        %vm1932 = vmor %vm1930, %vm1931
        %v1933 = vsel %vm1932, %v1925, %v1929
        %v1934 = vand.u32 2147483647, %v1924
        %vm1935 = vcmp.eq.f32.partialorder %v1934, 8.507059e+37
        %v1936 = vand.u32 %v1924, 2147483648
        %v1937 = vor.u32 1.1754944e-38, %v1936
        %v1938 = vsel %vm1935, %v1937, %v1933
        %v1939 = vmul.f32 %v1914, %v1938
        %v1940 = vmin.f32 %v1939, 1.0
        %v1941 = vmax.f32 %v1940, -1.0
        %v1942 = vmul.f32 %v1887, %v1887
        %v1943 = vmin.f32 16.0, %v1942
        %v1944 = vmul.f32 %v1943, 2.1237322e-06
        %v1945 = vadd.f32 %v1944, 0.00028619796
        %v1946 = vmul.f32 %v1943, %v1945
        %v1947 = vadd.f32 %v1946, 0.0036580483
        %v1948 = vmul.f32 %v1943, %v1947
        %v1949 = vadd.f32 %v1948, 0.05243302
        %v1950 = vmul.f32 %v1943, %v1949
        %v1951 = vadd.f32 %v1950, 0.18741608
        %v1952 = vmul.f32 %v1943, %v1951
        %v1953 = vadd.f32 %v1952, 1.1283791
        %v1954 = vmul.f32 %v1887, %v1953
        %v1955 = vmul.f32 %v1943, 3.8918573e-05
        %v1956 = vadd.f32 %v1955, 0.001143296
        %v1957 = vmul.f32 %v1943, %v1956
        %v1958 = vadd.f32 %v1957, 0.014752088
        %v1959 = vmul.f32 %v1943, %v1958
        %v1960 = vadd.f32 %v1959, 0.112945676
        %v1961 = vmul.f32 %v1943, %v1960
        %v1962 = vadd.f32 %v1961, 0.4994258
        %v1963 = vmul.f32 %v1943, %v1962
        %v1964 = vadd.f32 %v1963, 1.0
        %v1965 = vrcp.pop %v1964
        %v1966 = vmul.f32 %v1964, %v1965
        %v1967 = vsub.f32 1.0, %v1966
        %v1968 = vmul.f32 %v1965, %v1967
        %v1969 = vadd.f32 %v1965, %v1968
        %vm1970 = vweird.f32 %v1964
        %vm1971 = vweird.f32 %v1965
        %vm1972 = vmor %vm1970, %vm1971
        %v1973 = vsel %vm1972, %v1965, %v1969
        %v1974 = vand.u32 2147483647, %v1964
        %vm1975 = vcmp.eq.f32.partialorder %v1974, 8.507059e+37
        %v1976 = vand.u32 %v1964, 2147483648
        %v1977 = vor.u32 1.1754944e-38, %v1976
        %v1978 = vsel %vm1975, %v1977, %v1973
        %v1979 = vmul.f32 %v1954, %v1978
        %v1980 = vmin.f32 %v1979, 1.0
        %v1981 = vmax.f32 %v1980, -1.0
        %v1982 = vmul.f32 %v1888, %v1888
        %v1983 = vmin.f32 16.0, %v1982
        %v1984 = vmul.f32 %v1983, 2.1237322e-06
        %v1985 = vadd.f32 %v1984, 0.00028619796
        %v1986 = vmul.f32 %v1983, %v1985
        %v1987 = vadd.f32 %v1986, 0.0036580483
        %v1988 = vmul.f32 %v1983, %v1987
        %v1989 = vadd.f32 %v1988, 0.05243302
        %v1990 = vmul.f32 %v1983, %v1989
        %v1991 = vadd.f32 %v1990, 0.18741608
        %v1992 = vmul.f32 %v1983, %v1991
        %v1993 = vadd.f32 %v1992, 1.1283791
        %v1994 = vmul.f32 %v1888, %v1993
        %v1995 = vmul.f32 %v1983, 3.8918573e-05
        %v1996 = vadd.f32 %v1995, 0.001143296
        %v1997 = vmul.f32 %v1983, %v1996
        %v1998 = vadd.f32 %v1997, 0.014752088
        %v1999 = vmul.f32 %v1983, %v1998
        %v2000 = vadd.f32 %v1999, 0.112945676
        %v2001 = vmul.f32 %v1983, %v2000
        %v2002 = vadd.f32 %v2001, 0.4994258
        %v2003 = vmul.f32 %v1983, %v2002
        %v2004 = vadd.f32 %v2003, 1.0
        %v2005 = vrcp.pop %v2004
        %v2006 = vmul.f32 %v2004, %v2005
        %v2007 = vsub.f32 1.0, %v2006
        %v2008 = vmul.f32 %v2005, %v2007
        %v2009 = vadd.f32 %v2005, %v2008
        %vm2010 = vweird.f32 %v2004
        %vm2011 = vweird.f32 %v2005
        %vm2012 = vmor %vm2010, %vm2011
        %v2013 = vsel %vm2012, %v2005, %v2009
        %v2014 = vand.u32 2147483647, %v2004
        %vm2015 = vcmp.eq.f32.partialorder %v2014, 8.507059e+37
        %v2016 = vand.u32 %v2004, 2147483648
        %v2017 = vor.u32 1.1754944e-38, %v2016
        %v2018 = vsel %vm2015, %v2017, %v2013
        %v2019 = vmul.f32 %v1994, %v2018
        %v2020 = vmin.f32 %v2019, 1.0
        %v2021 = vmax.f32 %v2020, -1.0
        %v2022 = vmul.f32 %v1889, %v1889
        %v2023 = vmin.f32 16.0, %v2022
        %v2024 = vmul.f32 %v2023, 2.1237322e-06
        %v2025 = vadd.f32 %v2024, 0.00028619796
        %v2026 = vmul.f32 %v2023, %v2025
        %v2027 = vadd.f32 %v2026, 0.0036580483
        %v2028 = vmul.f32 %v2023, %v2027
        %v2029 = vadd.f32 %v2028, 0.05243302
        %v2030 = vmul.f32 %v2023, %v2029
        %v2031 = vadd.f32 %v2030, 0.18741608
        %v2032 = vmul.f32 %v2023, %v2031
        %v2033 = vadd.f32 %v2032, 1.1283791
        %v2034 = vmul.f32 %v1889, %v2033
        %v2035 = vmul.f32 %v2023, 3.8918573e-05
        %v2036 = vadd.f32 %v2035, 0.001143296
        %v2037 = vmul.f32 %v2023, %v2036
        %v2038 = vadd.f32 %v2037, 0.014752088
        %v2039 = vmul.f32 %v2023, %v2038
        %v2040 = vadd.f32 %v2039, 0.112945676
        %v2041 = vmul.f32 %v2023, %v2040
        %v2042 = vadd.f32 %v2041, 0.4994258
        %v2043 = vmul.f32 %v2023, %v2042
        %v2044 = vadd.f32 %v2043, 1.0
        %v2045 = vrcp.pop %v2044
        %v2046 = vmul.f32 %v2044, %v2045
        %v2047 = vsub.f32 1.0, %v2046
        %v2048 = vmul.f32 %v2045, %v2047
        %v2049 = vadd.f32 %v2045, %v2048
        %vm2050 = vweird.f32 %v2044
        %vm2051 = vweird.f32 %v2045
        %vm2052 = vmor %vm2050, %vm2051
        %v2053 = vsel %vm2052, %v2045, %v2049
        %v2054 = vand.u32 2147483647, %v2044
        %vm2055 = vcmp.eq.f32.partialorder %v2054, 8.507059e+37
        %v2056 = vand.u32 %v2044, 2147483648
        %v2057 = vor.u32 1.1754944e-38, %v2056
        %v2058 = vsel %vm2055, %v2057, %v2053
        %v2059 = vmul.f32 %v2034, %v2058
        %v2060 = vmin.f32 %v2059, 1.0
        %v2061 = vmax.f32 %v2060, -1.0
        %v2062 = vmul.f32 %v1890, %v1890
        %v2063 = vmin.f32 16.0, %v2062
        %v2064 = vmul.f32 %v2063, 2.1237322e-06
        %v2065 = vadd.f32 %v2064, 0.00028619796
        %v2066 = vmul.f32 %v2063, %v2065
        %v2067 = vadd.f32 %v2066, 0.0036580483
        %v2068 = vmul.f32 %v2063, %v2067
        %v2069 = vadd.f32 %v2068, 0.05243302
        %v2070 = vmul.f32 %v2063, %v2069
        %v2071 = vadd.f32 %v2070, 0.18741608
        %v2072 = vmul.f32 %v2063, %v2071
        %v2073 = vadd.f32 %v2072, 1.1283791
        %v2074 = vmul.f32 %v1890, %v2073
        %v2075 = vmul.f32 %v2063, 3.8918573e-05
        %v2076 = vadd.f32 %v2075, 0.001143296
        %v2077 = vmul.f32 %v2063, %v2076
        %v2078 = vadd.f32 %v2077, 0.014752088
        %v2079 = vmul.f32 %v2063, %v2078
        %v2080 = vadd.f32 %v2079, 0.112945676
        %v2081 = vmul.f32 %v2063, %v2080
        %v2082 = vadd.f32 %v2081, 0.4994258
        %v2083 = vmul.f32 %v2063, %v2082
        %v2084 = vadd.f32 %v2083, 1.0
        %v2085 = vrcp.pop %v2084
        %v2086 = vmul.f32 %v2084, %v2085
        %v2087 = vsub.f32 1.0, %v2086
        %v2088 = vmul.f32 %v2085, %v2087
        %v2089 = vadd.f32 %v2085, %v2088
        %vm2090 = vweird.f32 %v2084
        %vm2091 = vweird.f32 %v2085
        %vm2092 = vmor %vm2090, %vm2091
        %v2093 = vsel %vm2092, %v2085, %v2089
        %v2094 = vand.u32 2147483647, %v2084
        %vm2095 = vcmp.eq.f32.partialorder %v2094, 8.507059e+37
        %v2096 = vand.u32 %v2084, 2147483648
        %v2097 = vor.u32 1.1754944e-38, %v2096
        %v2098 = vsel %vm2095, %v2097, %v2093
        %v2099 = vmul.f32 %v2074, %v2098
        %v2100 = vmin.f32 %v2099, 1.0
        %v2101 = vmax.f32 %v2100, -1.0
        %v2102 = vmul.f32 %v1891, %v1891
        %v2103 = vmin.f32 16.0, %v2102
        %v2104 = vmul.f32 %v2103, 2.1237322e-06
        %v2105 = vadd.f32 %v2104, 0.00028619796
        %v2106 = vmul.f32 %v2103, %v2105
        %v2107 = vadd.f32 %v2106, 0.0036580483
        %v2108 = vmul.f32 %v2103, %v2107
        %v2109 = vadd.f32 %v2108, 0.05243302
        %v2110 = vmul.f32 %v2103, %v2109
        %v2111 = vadd.f32 %v2110, 0.18741608
        %v2112 = vmul.f32 %v2103, %v2111
        %v2113 = vadd.f32 %v2112, 1.1283791
        %v2114 = vmul.f32 %v1891, %v2113
        %v2115 = vmul.f32 %v2103, 3.8918573e-05
        %v2116 = vadd.f32 %v2115, 0.001143296
        %v2117 = vmul.f32 %v2103, %v2116
        %v2118 = vadd.f32 %v2117, 0.014752088
        %v2119 = vmul.f32 %v2103, %v2118
        %v2120 = vadd.f32 %v2119, 0.112945676
        %v2121 = vmul.f32 %v2103, %v2120
        %v2122 = vadd.f32 %v2121, 0.4994258
        %v2123 = vmul.f32 %v2103, %v2122
        %v2124 = vadd.f32 %v2123, 1.0
        %v2125 = vrcp.pop %v2124
        %v2126 = vmul.f32 %v2124, %v2125
        %v2127 = vsub.f32 1.0, %v2126
        %v2128 = vmul.f32 %v2125, %v2127
        %v2129 = vadd.f32 %v2125, %v2128
        %vm2130 = vweird.f32 %v2124
        %vm2131 = vweird.f32 %v2125
        %vm2132 = vmor %vm2130, %vm2131
        %v2133 = vsel %vm2132, %v2125, %v2129
        %v2134 = vand.u32 2147483647, %v2124
        %vm2135 = vcmp.eq.f32.partialorder %v2134, 8.507059e+37
        %v2136 = vand.u32 %v2124, 2147483648
        %v2137 = vor.u32 1.1754944e-38, %v2136
        %v2138 = vsel %vm2135, %v2137, %v2133
        %v2139 = vmul.f32 %v2114, %v2138
        %v2140 = vmin.f32 %v2139, 1.0
        %v2141 = vmax.f32 %v2140, -1.0
        %v2142 = vmul.f32 %v1892, %v1892
        %v2143 = vmin.f32 16.0, %v2142
        %v2144 = vmul.f32 %v2143, 2.1237322e-06
        %v2145 = vadd.f32 %v2144, 0.00028619796
        %v2146 = vmul.f32 %v2143, %v2145
        %v2147 = vadd.f32 %v2146, 0.0036580483
        %v2148 = vmul.f32 %v2143, %v2147
        %v2149 = vadd.f32 %v2148, 0.05243302
        %v2150 = vmul.f32 %v2143, %v2149
        %v2151 = vadd.f32 %v2150, 0.18741608
        %v2152 = vmul.f32 %v2143, %v2151
        %v2153 = vadd.f32 %v2152, 1.1283791
        %v2154 = vmul.f32 %v1892, %v2153
        %v2155 = vmul.f32 %v2143, 3.8918573e-05
        %v2156 = vadd.f32 %v2155, 0.001143296
        %v2157 = vmul.f32 %v2143, %v2156
        %v2158 = vadd.f32 %v2157, 0.014752088
        %v2159 = vmul.f32 %v2143, %v2158
        %v2160 = vadd.f32 %v2159, 0.112945676
        %v2161 = vmul.f32 %v2143, %v2160
        %v2162 = vadd.f32 %v2161, 0.4994258
        %v2163 = vmul.f32 %v2143, %v2162
        %v2164 = vadd.f32 %v2163, 1.0
        %v2165 = vrcp.pop %v2164
        %v2166 = vmul.f32 %v2164, %v2165
        %v2167 = vsub.f32 1.0, %v2166
        %v2168 = vmul.f32 %v2165, %v2167
        %v2169 = vadd.f32 %v2165, %v2168
        %vm2170 = vweird.f32 %v2164
        %vm2171 = vweird.f32 %v2165
        %vm2172 = vmor %vm2170, %vm2171
        %v2173 = vsel %vm2172, %v2165, %v2169
        %v2174 = vand.u32 2147483647, %v2164
        %vm2175 = vcmp.eq.f32.partialorder %v2174, 8.507059e+37
        %v2176 = vand.u32 %v2164, 2147483648
        %v2177 = vor.u32 1.1754944e-38, %v2176
        %v2178 = vsel %vm2175, %v2177, %v2173
        %v2179 = vmul.f32 %v2154, %v2178
        %v2180 = vmin.f32 %v2179, 1.0
        %v2181 = vmax.f32 %v2180, -1.0
        %v2182 = vmul.f32 %v1893, %v1893
        %v2183 = vmin.f32 16.0, %v2182
        %v2184 = vmul.f32 %v2183, 2.1237322e-06
        %v2185 = vadd.f32 %v2184, 0.00028619796
        %v2186 = vmul.f32 %v2183, %v2185
        %v2187 = vadd.f32 %v2186, 0.0036580483
        %v2188 = vmul.f32 %v2183, %v2187
        %v2189 = vadd.f32 %v2188, 0.05243302
        %v2190 = vmul.f32 %v2183, %v2189
        %v2191 = vadd.f32 %v2190, 0.18741608
        %v2192 = vmul.f32 %v2183, %v2191
        %v2193 = vadd.f32 %v2192, 1.1283791
        %v2194 = vmul.f32 %v1893, %v2193
        %v2195 = vmul.f32 %v2183, 3.8918573e-05
        %v2196 = vadd.f32 %v2195, 0.001143296
        %v2197 = vmul.f32 %v2183, %v2196
        %v2198 = vadd.f32 %v2197, 0.014752088
        %v2199 = vmul.f32 %v2183, %v2198
        %v2200 = vadd.f32 %v2199, 0.112945676
        %v2201 = vmul.f32 %v2183, %v2200
        %v2202 = vadd.f32 %v2201, 0.4994258
        %v2203 = vmul.f32 %v2183, %v2202
        %v2204 = vadd.f32 %v2203, 1.0
        %v2205 = vrcp.pop %v2204
        %v2206 = vmul.f32 %v2204, %v2205
        %v2207 = vsub.f32 1.0, %v2206
        %v2208 = vmul.f32 %v2205, %v2207
        %v2209 = vadd.f32 %v2205, %v2208
        %vm2210 = vweird.f32 %v2204
        %vm2211 = vweird.f32 %v2205
        %vm2212 = vmor %vm2210, %vm2211
        %v2213 = vsel %vm2212, %v2205, %v2209
        %v2214 = vand.u32 2147483647, %v2204
        %vm2215 = vcmp.eq.f32.partialorder %v2214, 8.507059e+37
        %v2216 = vand.u32 %v2204, 2147483648
        %v2217 = vor.u32 1.1754944e-38, %v2216
        %v2218 = vsel %vm2215, %v2217, %v2213
        %v2219 = vmul.f32 %v2194, %v2218
        %v2220 = vmin.f32 %v2219, 1.0
        %v2221 = vmax.f32 %v2220, -1.0
        %v2222 = vmul.f32 %v1894, %v1894
        %v2223 = vmin.f32 16.0, %v2222
        %v2224 = vmul.f32 %v2223, 2.1237322e-06
        %v2225 = vadd.f32 %v2224, 0.00028619796
        %v2226 = vmul.f32 %v2223, %v2225
        %v2227 = vadd.f32 %v2226, 0.0036580483
        %v2228 = vmul.f32 %v2223, %v2227
        %v2229 = vadd.f32 %v2228, 0.05243302
        %v2230 = vmul.f32 %v2223, %v2229
        %v2231 = vadd.f32 %v2230, 0.18741608
        %v2232 = vmul.f32 %v2223, %v2231
        %v2233 = vadd.f32 %v2232, 1.1283791
        %v2234 = vmul.f32 %v1894, %v2233
        %v2235 = vmul.f32 %v2223, 3.8918573e-05
        %v2236 = vadd.f32 %v2235, 0.001143296
        %v2237 = vmul.f32 %v2223, %v2236
        %v2238 = vadd.f32 %v2237, 0.014752088
        %v2239 = vmul.f32 %v2223, %v2238
        %v2240 = vadd.f32 %v2239, 0.112945676
        %v2241 = vmul.f32 %v2223, %v2240
        %v2242 = vadd.f32 %v2241, 0.4994258
        %v2243 = vmul.f32 %v2223, %v2242
        %v2244 = vadd.f32 %v2243, 1.0
        %v2245 = vrcp.pop %v2244
        %v2246 = vmul.f32 %v2244, %v2245
        %v2247 = vsub.f32 1.0, %v2246
        %v2248 = vmul.f32 %v2245, %v2247
        %v2249 = vadd.f32 %v2245, %v2248
        %vm2250 = vweird.f32 %v2244
        %vm2251 = vweird.f32 %v2245
        %vm2252 = vmor %vm2250, %vm2251
        %v2253 = vsel %vm2252, %v2245, %v2249
        %v2254 = vand.u32 2147483647, %v2244
        %vm2255 = vcmp.eq.f32.partialorder %v2254, 8.507059e+37
        %v2256 = vand.u32 %v2244, 2147483648
        %v2257 = vor.u32 1.1754944e-38, %v2256
        %v2258 = vsel %vm2255, %v2257, %v2253
        %v2259 = vmul.f32 %v2234, %v2258
        %v2260 = vmin.f32 %v2259, 1.0
        %v2261 = vmax.f32 %v2260, -1.0
        %v2262 = vmul.f32 %v1895, %v1895
        %v2263 = vmin.f32 16.0, %v2262
        %v2264 = vmul.f32 %v2263, 2.1237322e-06
        %v2265 = vadd.f32 %v2264, 0.00028619796
        %v2266 = vmul.f32 %v2263, %v2265
        %v2267 = vadd.f32 %v2266, 0.0036580483
        %v2268 = vmul.f32 %v2263, %v2267
        %v2269 = vadd.f32 %v2268, 0.05243302
        %v2270 = vmul.f32 %v2263, %v2269
        %v2271 = vadd.f32 %v2270, 0.18741608
        %v2272 = vmul.f32 %v2263, %v2271
        %v2273 = vadd.f32 %v2272, 1.1283791
        %v2274 = vmul.f32 %v1895, %v2273
        %v2275 = vmul.f32 %v2263, 3.8918573e-05
        %v2276 = vadd.f32 %v2275, 0.001143296
        %v2277 = vmul.f32 %v2263, %v2276
        %v2278 = vadd.f32 %v2277, 0.014752088
        %v2279 = vmul.f32 %v2263, %v2278
        %v2280 = vadd.f32 %v2279, 0.112945676
        %v2281 = vmul.f32 %v2263, %v2280
        %v2282 = vadd.f32 %v2281, 0.4994258
        %v2283 = vmul.f32 %v2263, %v2282
        %v2284 = vadd.f32 %v2283, 1.0
        %v2285 = vrcp.pop %v2284
        %v2286 = vmul.f32 %v2284, %v2285
        %v2287 = vsub.f32 1.0, %v2286
        %v2288 = vmul.f32 %v2285, %v2287
        %v2289 = vadd.f32 %v2285, %v2288
        %vm2290 = vweird.f32 %v2284
        %vm2291 = vweird.f32 %v2285
        %vm2292 = vmor %vm2290, %vm2291
        %v2293 = vsel %vm2292, %v2285, %v2289
        %v2294 = vand.u32 2147483647, %v2284
        %vm2295 = vcmp.eq.f32.partialorder %v2294, 8.507059e+37
        %v2296 = vand.u32 %v2284, 2147483648
        %v2297 = vor.u32 1.1754944e-38, %v2296
        %v2298 = vsel %vm2295, %v2297, %v2293
        %v2299 = vmul.f32 %v2274, %v2298
        %v2300 = vmin.f32 %v2299, 1.0
        %v2301 = vmax.f32 %v2300, -1.0
        %v2302 = vmul.f32 %v1896, %v1896
        %v2303 = vmin.f32 16.0, %v2302
        %v2304 = vmul.f32 %v2303, 2.1237322e-06
        %v2305 = vadd.f32 %v2304, 0.00028619796
        %v2306 = vmul.f32 %v2303, %v2305
        %v2307 = vadd.f32 %v2306, 0.0036580483
        %v2308 = vmul.f32 %v2303, %v2307
        %v2309 = vadd.f32 %v2308, 0.05243302
        %v2310 = vmul.f32 %v2303, %v2309
        %v2311 = vadd.f32 %v2310, 0.18741608
        %v2312 = vmul.f32 %v2303, %v2311
        %v2313 = vadd.f32 %v2312, 1.1283791
        %v2314 = vmul.f32 %v1896, %v2313
        %v2315 = vmul.f32 %v2303, 3.8918573e-05
        %v2316 = vadd.f32 %v2315, 0.001143296
        %v2317 = vmul.f32 %v2303, %v2316
        %v2318 = vadd.f32 %v2317, 0.014752088
        %v2319 = vmul.f32 %v2303, %v2318
        %v2320 = vadd.f32 %v2319, 0.112945676
        %v2321 = vmul.f32 %v2303, %v2320
        %v2322 = vadd.f32 %v2321, 0.4994258
        %v2323 = vmul.f32 %v2303, %v2322
        %v2324 = vadd.f32 %v2323, 1.0
        %v2325 = vrcp.pop %v2324
        %v2326 = vmul.f32 %v2324, %v2325
        %v2327 = vsub.f32 1.0, %v2326
        %v2328 = vmul.f32 %v2325, %v2327
        %v2329 = vadd.f32 %v2325, %v2328
        %vm2330 = vweird.f32 %v2324
        %vm2331 = vweird.f32 %v2325
        %vm2332 = vmor %vm2330, %vm2331
        %v2333 = vsel %vm2332, %v2325, %v2329
        %v2334 = vand.u32 2147483647, %v2324
        %vm2335 = vcmp.eq.f32.partialorder %v2334, 8.507059e+37
        %v2336 = vand.u32 %v2324, 2147483648
        %v2337 = vor.u32 1.1754944e-38, %v2336
        %v2338 = vsel %vm2335, %v2337, %v2333
        %v2339 = vmul.f32 %v2314, %v2338
        %v2340 = vmin.f32 %v2339, 1.0
        %v2341 = vmax.f32 %v2340, -1.0
        %v2342 = vmul.f32 %v1897, %v1897
        %v2343 = vmin.f32 16.0, %v2342
        %v2344 = vmul.f32 %v2343, 2.1237322e-06
        %v2345 = vadd.f32 %v2344, 0.00028619796
        %v2346 = vmul.f32 %v2343, %v2345
        %v2347 = vadd.f32 %v2346, 0.0036580483
        %v2348 = vmul.f32 %v2343, %v2347
        %v2349 = vadd.f32 %v2348, 0.05243302
        %v2350 = vmul.f32 %v2343, %v2349
        %v2351 = vadd.f32 %v2350, 0.18741608
        %v2352 = vmul.f32 %v2343, %v2351
        %v2353 = vadd.f32 %v2352, 1.1283791
        %v2354 = vmul.f32 %v1897, %v2353
        %v2355 = vmul.f32 %v2343, 3.8918573e-05
        %v2356 = vadd.f32 %v2355, 0.001143296
        %v2357 = vmul.f32 %v2343, %v2356
        %v2358 = vadd.f32 %v2357, 0.014752088
        %v2359 = vmul.f32 %v2343, %v2358
        %v2360 = vadd.f32 %v2359, 0.112945676
        %v2361 = vmul.f32 %v2343, %v2360
        %v2362 = vadd.f32 %v2361, 0.4994258
        %v2363 = vmul.f32 %v2343, %v2362
        %v2364 = vadd.f32 %v2363, 1.0
        %v2365 = vrcp.pop %v2364
        %v2366 = vmul.f32 %v2364, %v2365
        %v2367 = vsub.f32 1.0, %v2366
        %v2368 = vmul.f32 %v2365, %v2367
        %v2369 = vadd.f32 %v2365, %v2368
        %vm2370 = vweird.f32 %v2364
        %vm2371 = vweird.f32 %v2365
        %vm2372 = vmor %vm2370, %vm2371
        %v2373 = vsel %vm2372, %v2365, %v2369
        %v2374 = vand.u32 2147483647, %v2364
        %vm2375 = vcmp.eq.f32.partialorder %v2374, 8.507059e+37
        %v2376 = vand.u32 %v2364, 2147483648
        %v2377 = vor.u32 1.1754944e-38, %v2376
        %v2378 = vsel %vm2375, %v2377, %v2373
        %v2379 = vmul.f32 %v2354, %v2378
        %v2380 = vmin.f32 %v2379, 1.0
        %v2381 = vmax.f32 %v2380, -1.0
        %v2382 = vmul.f32 %v1898, %v1898
        %v2383 = vmin.f32 16.0, %v2382
        %v2384 = vmul.f32 %v2383, 2.1237322e-06
        %v2385 = vadd.f32 %v2384, 0.00028619796
        %v2386 = vmul.f32 %v2383, %v2385
        %v2387 = vadd.f32 %v2386, 0.0036580483
        %v2388 = vmul.f32 %v2383, %v2387
        %v2389 = vadd.f32 %v2388, 0.05243302
        %v2390 = vmul.f32 %v2383, %v2389
        %v2391 = vadd.f32 %v2390, 0.18741608
        %v2392 = vmul.f32 %v2383, %v2391
        %v2393 = vadd.f32 %v2392, 1.1283791
        %v2394 = vmul.f32 %v1898, %v2393
        %v2395 = vmul.f32 %v2383, 3.8918573e-05
        %v2396 = vadd.f32 %v2395, 0.001143296
        %v2397 = vmul.f32 %v2383, %v2396
        %v2398 = vadd.f32 %v2397, 0.014752088
        %v2399 = vmul.f32 %v2383, %v2398
        %v2400 = vadd.f32 %v2399, 0.112945676
        %v2401 = vmul.f32 %v2383, %v2400
        %v2402 = vadd.f32 %v2401, 0.4994258
        %v2403 = vmul.f32 %v2383, %v2402
        %v2404 = vadd.f32 %v2403, 1.0
        %v2405 = vrcp.pop %v2404
        %v2406 = vmul.f32 %v2404, %v2405
        %v2407 = vsub.f32 1.0, %v2406
        %v2408 = vmul.f32 %v2405, %v2407
        %v2409 = vadd.f32 %v2405, %v2408
        %vm2410 = vweird.f32 %v2404
        %vm2411 = vweird.f32 %v2405
        %vm2412 = vmor %vm2410, %vm2411
        %v2413 = vsel %vm2412, %v2405, %v2409
        %v2414 = vand.u32 2147483647, %v2404
        %vm2415 = vcmp.eq.f32.partialorder %v2414, 8.507059e+37
        %v2416 = vand.u32 %v2404, 2147483648
        %v2417 = vor.u32 1.1754944e-38, %v2416
        %v2418 = vsel %vm2415, %v2417, %v2413
        %v2419 = vmul.f32 %v2394, %v2418
        %v2420 = vmin.f32 %v2419, 1.0
        %v2421 = vmax.f32 %v2420, -1.0
        %v2422 = vmul.f32 %v1899, %v1899
        %v2423 = vmin.f32 16.0, %v2422
        %v2424 = vmul.f32 %v2423, 2.1237322e-06
        %v2425 = vadd.f32 %v2424, 0.00028619796
        %v2426 = vmul.f32 %v2423, %v2425
        %v2427 = vadd.f32 %v2426, 0.0036580483
        %v2428 = vmul.f32 %v2423, %v2427
        %v2429 = vadd.f32 %v2428, 0.05243302
        %v2430 = vmul.f32 %v2423, %v2429
        %v2431 = vadd.f32 %v2430, 0.18741608
        %v2432 = vmul.f32 %v2423, %v2431
        %v2433 = vadd.f32 %v2432, 1.1283791
        %v2434 = vmul.f32 %v1899, %v2433
        %v2435 = vmul.f32 %v2423, 3.8918573e-05
        %v2436 = vadd.f32 %v2435, 0.001143296
        %v2437 = vmul.f32 %v2423, %v2436
        %v2438 = vadd.f32 %v2437, 0.014752088
        %v2439 = vmul.f32 %v2423, %v2438
        %v2440 = vadd.f32 %v2439, 0.112945676
        %v2441 = vmul.f32 %v2423, %v2440
        %v2442 = vadd.f32 %v2441, 0.4994258
        %v2443 = vmul.f32 %v2423, %v2442
        %v2444 = vadd.f32 %v2443, 1.0
        %v2445 = vrcp.pop %v2444
        %v2446 = vmul.f32 %v2444, %v2445
        %v2447 = vsub.f32 1.0, %v2446
        %v2448 = vmul.f32 %v2445, %v2447
        %v2449 = vadd.f32 %v2445, %v2448
        %vm2450 = vweird.f32 %v2444
        %vm2451 = vweird.f32 %v2445
        %vm2452 = vmor %vm2450, %vm2451
        %v2453 = vsel %vm2452, %v2445, %v2449
        %v2454 = vand.u32 2147483647, %v2444
        %vm2455 = vcmp.eq.f32.partialorder %v2454, 8.507059e+37
        %v2456 = vand.u32 %v2444, 2147483648
        %v2457 = vor.u32 1.1754944e-38, %v2456
        %v2458 = vsel %vm2455, %v2457, %v2453
        %v2459 = vmul.f32 %v2434, %v2458
        %v2460 = vmin.f32 %v2459, 1.0
        %v2461 = vmax.f32 %v2460, -1.0
        %v2462 = vmul.f32 %v1900, %v1900
        %v2463 = vmin.f32 16.0, %v2462
        %v2464 = vmul.f32 %v2463, 2.1237322e-06
        %v2465 = vadd.f32 %v2464, 0.00028619796
        %v2466 = vmul.f32 %v2463, %v2465
        %v2467 = vadd.f32 %v2466, 0.0036580483
        %v2468 = vmul.f32 %v2463, %v2467
        %v2469 = vadd.f32 %v2468, 0.05243302
        %v2470 = vmul.f32 %v2463, %v2469
        %v2471 = vadd.f32 %v2470, 0.18741608
        %v2472 = vmul.f32 %v2463, %v2471
        %v2473 = vadd.f32 %v2472, 1.1283791
        %v2474 = vmul.f32 %v1900, %v2473
        %v2475 = vmul.f32 %v2463, 3.8918573e-05
        %v2476 = vadd.f32 %v2475, 0.001143296
        %v2477 = vmul.f32 %v2463, %v2476
        %v2478 = vadd.f32 %v2477, 0.014752088
        %v2479 = vmul.f32 %v2463, %v2478
        %v2480 = vadd.f32 %v2479, 0.112945676
        %v2481 = vmul.f32 %v2463, %v2480
        %v2482 = vadd.f32 %v2481, 0.4994258
        %v2483 = vmul.f32 %v2463, %v2482
        %v2484 = vadd.f32 %v2483, 1.0
        %v2485 = vrcp.pop %v2484
        %v2486 = vmul.f32 %v2484, %v2485
        %v2487 = vsub.f32 1.0, %v2486
        %v2488 = vmul.f32 %v2485, %v2487
        %v2489 = vadd.f32 %v2485, %v2488
        %vm2490 = vweird.f32 %v2484
        %vm2491 = vweird.f32 %v2485
        %vm2492 = vmor %vm2490, %vm2491
        %v2493 = vsel %vm2492, %v2485, %v2489
        %v2494 = vand.u32 2147483647, %v2484
        %vm2495 = vcmp.eq.f32.partialorder %v2494, 8.507059e+37
        %v2496 = vand.u32 %v2484, 2147483648
        %v2497 = vor.u32 1.1754944e-38, %v2496
        %v2498 = vsel %vm2495, %v2497, %v2493
        %v2499 = vmul.f32 %v2474, %v2498
        %v2500 = vmin.f32 %v2499, 1.0
        %v2501 = vmax.f32 %v2500, -1.0
        %v2502 = vmul.f32 %v1901, %v1901
        %v2503 = vmin.f32 16.0, %v2502
        %v2504 = vmul.f32 %v2503, 2.1237322e-06
        %v2505 = vadd.f32 %v2504, 0.00028619796
        %v2506 = vmul.f32 %v2503, %v2505
        %v2507 = vadd.f32 %v2506, 0.0036580483
        %v2508 = vmul.f32 %v2503, %v2507
        %v2509 = vadd.f32 %v2508, 0.05243302
        %v2510 = vmul.f32 %v2503, %v2509
        %v2511 = vadd.f32 %v2510, 0.18741608
        %v2512 = vmul.f32 %v2503, %v2511
        %v2513 = vadd.f32 %v2512, 1.1283791
        %v2514 = vmul.f32 %v1901, %v2513
        %v2515 = vmul.f32 %v2503, 3.8918573e-05
        %v2516 = vadd.f32 %v2515, 0.001143296
        %v2517 = vmul.f32 %v2503, %v2516
        %v2518 = vadd.f32 %v2517, 0.014752088
        %v2519 = vmul.f32 %v2503, %v2518
        %v2520 = vadd.f32 %v2519, 0.112945676
        %v2521 = vmul.f32 %v2503, %v2520
        %v2522 = vadd.f32 %v2521, 0.4994258
        %v2523 = vmul.f32 %v2503, %v2522
        %v2524 = vadd.f32 %v2523, 1.0
        %v2525 = vrcp.pop %v2524
        %v2526 = vmul.f32 %v2524, %v2525
        %v2527 = vsub.f32 1.0, %v2526
        %v2528 = vmul.f32 %v2525, %v2527
        %v2529 = vadd.f32 %v2525, %v2528
        %vm2530 = vweird.f32 %v2524
        %vm2531 = vweird.f32 %v2525
        %vm2532 = vmor %vm2530, %vm2531
        %v2533 = vsel %vm2532, %v2525, %v2529
        %v2534 = vand.u32 2147483647, %v2524
        %vm2535 = vcmp.eq.f32.partialorder %v2534, 8.507059e+37
        %v2536 = vand.u32 %v2524, 2147483648
        %v2537 = vor.u32 1.1754944e-38, %v2536
        %v2538 = vsel %vm2535, %v2537, %v2533
        %v2539 = vmul.f32 %v2514, %v2538
        %v2540 = vmin.f32 %v2539, 1.0
        %v2541 = vmax.f32 %v2540, -1.0
        %v2542 = vadd.f32 %v1941, 1.0
        %v2543 = vadd.f32 %v1981, 1.0
        %v2544 = vadd.f32 %v2021, 1.0
        %v2545 = vadd.f32 %v2061, 1.0
        %v2546 = vadd.f32 %v2101, 1.0
        %v2547 = vadd.f32 %v2141, 1.0
        %v2548 = vadd.f32 %v2181, 1.0
        %v2549 = vadd.f32 %v2221, 1.0
        %v2550 = vadd.f32 %v2261, 1.0
        %v2551 = vadd.f32 %v2301, 1.0
        %v2552 = vadd.f32 %v2341, 1.0
        %v2553 = vadd.f32 %v2381, 1.0
        %v2554 = vadd.f32 %v2421, 1.0
        %v2555 = vadd.f32 %v2461, 1.0
        %v2556 = vadd.f32 %v2501, 1.0
        %v2557 = vadd.f32 %v2541, 1.0
        %v2558 = vmul.f32 %v1870, %v2542
        %v2559 = vmul.f32 %v1871, %v2543
        %v2560 = vmul.f32 %v1872, %v2544
        %v2561 = vmul.f32 %v1873, %v2545
        %v2562 = vmul.f32 %v1874, %v2546
        %v2563 = vmul.f32 %v1875, %v2547
        %v2564 = vmul.f32 %v1876, %v2548
        %v2565 = vmul.f32 %v1877, %v2549
        %v2566 = vmul.f32 %v1878, %v2550
        %v2567 = vmul.f32 %v1879, %v2551
        %v2568 = vmul.f32 %v1880, %v2552
        %v2569 = vmul.f32 %v1881, %v2553
        %v2570 = vmul.f32 %v1882, %v2554
        %v2571 = vmul.f32 %v1883, %v2555
        %v2572 = vmul.f32 %v1884, %v2556
        %v2573 = vmul.f32 %v1885, %v2557
        %2575 = vset.pattern.permute.xlu0 0
        %2576 = vperm.xlu0 %2575, %v541
        %v2577 = vpop.permute.xlu0 %2576
        %2580 = vset.pattern.permute.xlu0 0
        %2581 = vperm.xlu0 %2580, %v542
        %v2582 = vpop.permute.xlu0 %2581
        %2585 = vset.pattern.permute.xlu0 0
        %2586 = vperm.xlu0 %2585, %v543
        %v2587 = vpop.permute.xlu0 %2586
        %2590 = vset.pattern.permute.xlu0 0
        %2591 = vperm.xlu0 %2590, %v544
        %v2592 = vpop.permute.xlu0 %2591
        %2595 = vset.pattern.permute.xlu0 0
        %2596 = vperm.xlu0 %2595, %v545
        %v2597 = vpop.permute.xlu0 %2596
        %2600 = vset.pattern.permute.xlu0 0
        %2601 = vperm.xlu0 %2600, %v546
        %v2602 = vpop.permute.xlu0 %2601
        %2605 = vset.pattern.permute.xlu0 0
        %2606 = vperm.xlu0 %2605, %v547
        %v2607 = vpop.permute.xlu0 %2606
        %2610 = vset.pattern.permute.xlu0 0
        %2611 = vperm.xlu0 %2610, %v548
        %v2612 = vpop.permute.xlu0 %2611
        %2615 = vset.pattern.permute.xlu0 0
        %2616 = vperm.xlu0 %2615, %v549
        %v2617 = vpop.permute.xlu0 %2616
        %2620 = vset.pattern.permute.xlu0 0
        %2621 = vperm.xlu0 %2620, %v550
        %v2622 = vpop.permute.xlu0 %2621
        %2625 = vset.pattern.permute.xlu0 0
        %2626 = vperm.xlu0 %2625, %v551
        %v2627 = vpop.permute.xlu0 %2626
        %2630 = vset.pattern.permute.xlu0 0
        %2631 = vperm.xlu0 %2630, %v552
        %v2632 = vpop.permute.xlu0 %2631
        %2635 = vset.pattern.permute.xlu0 0
        %2636 = vperm.xlu0 %2635, %v553
        %v2637 = vpop.permute.xlu0 %2636
        %2640 = vset.pattern.permute.xlu0 0
        %2641 = vperm.xlu0 %2640, %v554
        %v2642 = vpop.permute.xlu0 %2641
        %2645 = vset.pattern.permute.xlu0 0
        %2646 = vperm.xlu0 %2645, %v555
        %v2647 = vpop.permute.xlu0 %2646
        %2650 = vset.pattern.permute.xlu0 0
        %2651 = vperm.xlu0 %2650, %v556
        %v2652 = vpop.permute.xlu0 %2651
        %v2654 = vmul.f32 %v2558, %v2577
        %v2655 = vmul.f32 %v2559, %v2582
        %v2656 = vmul.f32 %v2560, %v2587
        %v2657 = vmul.f32 %v2561, %v2592
        %v2658 = vmul.f32 %v2562, %v2597
        %v2659 = vmul.f32 %v2563, %v2602
        %v2660 = vmul.f32 %v2564, %v2607
        %v2661 = vmul.f32 %v2565, %v2612
        %v2662 = vmul.f32 %v2566, %v2617
        %v2663 = vmul.f32 %v2567, %v2622
        %v2664 = vmul.f32 %v2568, %v2627
        %v2665 = vmul.f32 %v2569, %v2632
        %v2666 = vmul.f32 %v2570, %v2637
        %v2667 = vmul.f32 %v2571, %v2642
        %v2668 = vmul.f32 %v2572, %v2647
        %v2669 = vmul.f32 %v2573, %v2652
        %vm2670 = vcmask 523264
        %v2671 = vsel %vm2670, %v2654, 0.0
        %v2672 = vsel %vm2670, %v2655, 0.0
        %v2673 = vadd.f32 %v2671, %v2672
        %v2674 = vsel %vm2670, %v2656, 0.0
        %v2675 = vadd.f32 %v2673, %v2674
        %v2676 = vsel %vm2670, %v2657, 0.0
        %v2677 = vadd.f32 %v2675, %v2676
        %v2678 = vsel %vm2670, %v2658, 0.0
        %v2679 = vadd.f32 %v2677, %v2678
        %v2680 = vsel %vm2670, %v2659, 0.0
        %v2681 = vadd.f32 %v2679, %v2680
        %v2682 = vsel %vm2670, %v2660, 0.0
        %v2683 = vadd.f32 %v2681, %v2682
        %v2684 = vsel %vm2670, %v2661, 0.0
        %v2685 = vadd.f32 %v2683, %v2684
        %v2686 = vrot.slane %v2685, 4
        %v2687 = vadd.f32 %v2685, %v2686
        %v2688 = vrot.slane %v2687, 2
        %v2689 = vadd.f32 %v2687, %v2688
        %v2690 = vrot.slane %v2689, 1
        %v2691 = vadd.f32 %v2689, %v2690
        %v2692 = vsel %vm2670, %v2662, 0.0
        %v2693 = vsel %vm2670, %v2663, 0.0
        %v2694 = vadd.f32 %v2692, %v2693
        %v2695 = vsel %vm2670, %v2664, 0.0
        %v2696 = vadd.f32 %v2694, %v2695
        %v2697 = vsel %vm2670, %v2665, 0.0
        %v2698 = vadd.f32 %v2696, %v2697
        %v2699 = vsel %vm2670, %v2666, 0.0
        %v2700 = vadd.f32 %v2698, %v2699
        %v2701 = vsel %vm2670, %v2667, 0.0
        %v2702 = vadd.f32 %v2700, %v2701
        %v2703 = vsel %vm2670, %v2668, 0.0
        %v2704 = vadd.f32 %v2702, %v2703
        %v2705 = vsel %vm2670, %v2669, 0.0
        %v2706 = vadd.f32 %v2704, %v2705
        %v2707 = vrot.slane %v2706, 4
        %v2708 = vadd.f32 %v2706, %v2707
        %v2709 = vrot.slane %v2708, 2
        %v2710 = vadd.f32 %v2708, %v2709
        %v2711 = vrot.slane %v2710, 1
        %v2712 = vadd.f32 %v2710, %v2711
        %vm2713 = vcmask 7168
        %v2714 = vsel %vm2713, %v541, 0.0
        %v2715 = vsel %vm2713, %v542, 0.0
        %v2716 = vadd.f32 %v2714, %v2715
        %v2717 = vsel %vm2713, %v543, 0.0
        %v2718 = vadd.f32 %v2716, %v2717
        %v2719 = vsel %vm2713, %v544, 0.0
        %v2720 = vadd.f32 %v2718, %v2719
        %v2721 = vsel %vm2713, %v545, 0.0
        %v2722 = vadd.f32 %v2720, %v2721
        %v2723 = vsel %vm2713, %v546, 0.0
        %v2724 = vadd.f32 %v2722, %v2723
        %v2725 = vsel %vm2713, %v547, 0.0
        %v2726 = vadd.f32 %v2724, %v2725
        %v2727 = vsel %vm2713, %v548, 0.0
        %v2728 = vadd.f32 %v2726, %v2727
        %v2729 = vrot.slane %v2728, 4
        %v2730 = vadd.f32 %v2728, %v2729
        %v2731 = vrot.slane %v2730, 2
        %v2732 = vadd.f32 %v2730, %v2731
        %v2733 = vrot.slane %v2732, 1
        %v2734 = vadd.f32 %v2732, %v2733
        %v2735 = vsel %vm2713, %v549, 0.0
        %v2736 = vsel %vm2713, %v550, 0.0
        %v2737 = vadd.f32 %v2735, %v2736
        %v2738 = vsel %vm2713, %v551, 0.0
        %v2739 = vadd.f32 %v2737, %v2738
        %v2740 = vsel %vm2713, %v552, 0.0
        %v2741 = vadd.f32 %v2739, %v2740
        %v2742 = vsel %vm2713, %v553, 0.0
        %v2743 = vadd.f32 %v2741, %v2742
        %v2744 = vsel %vm2713, %v554, 0.0
        %v2745 = vadd.f32 %v2743, %v2744
        %v2746 = vsel %vm2713, %v555, 0.0
        %v2747 = vadd.f32 %v2745, %v2746
        %v2748 = vsel %vm2713, %v556, 0.0
        %v2749 = vadd.f32 %v2747, %v2748
        %v2750 = vrot.slane %v2749, 4
        %v2751 = vadd.f32 %v2749, %v2750
        %v2752 = vrot.slane %v2751, 2
        %v2753 = vadd.f32 %v2751, %v2752
        %v2754 = vrot.slane %v2753, 1
        %v2755 = vadd.f32 %v2753, %v2754
        %v2756 = vrcp.pop %v2734
        %v2757 = vrcp.pop %v2755
        %2759 = vset.pattern.permute.xlu0 0
        %2760 = vperm.xlu0 %2759, %v2756
        %v2761 = vpop.permute.xlu0 %2760
        %2764 = vset.pattern.permute.xlu0 0
        %2765 = vperm.xlu0 %2764, %v2757
        %v2766 = vpop.permute.xlu0 %2765
        %v2768 = vmul.f32 %v2691, %v2761
        %v2769 = vmul.f32 %v2712, %v2766
        %v2770 = vpack.c.bf16 %v2768, %v2768
        %v2771 = vpack.c.bf16 %v2769, %v2769
        %v2774 = vpack.c.bf16 %v1738, %v1737
        %v2775 = vpack.c.bf16 %v1740, %v1739
        %v2776 = vpack.c.bf16 %v1742, %v1741
        %v2777 = vpack.c.bf16 %v1744, %v1743
        %v2778 = vpack.c.bf16 %v1746, %v1745
        %v2779 = vpack.c.bf16 %v1748, %v1747
        %v2780 = vpack.c.bf16 %v1750, %v1749
        %v2781 = vpack.c.bf16 %v1752, %v1751
        %v2782 = vld [vmem:[%s8] sm:$0xf]
        %v2783 = vld [vmem:[%s8 + $0x4] sm:$0xf]
        %v2784 = vld [vmem:[%s8 + $0x8] sm:$0xf]
        %v2785 = vld [vmem:[%s8 + $0xc] sm:$0xf]
        %v2786 = vld [vmem:[%s8 + $0x10] sm:$0xf]
        %v2787 = vld [vmem:[%s8 + $0x14] sm:$0xf]
        %v2788 = vld [vmem:[%s8 + $0x18] sm:$0xf]
        %v2789 = vld [vmem:[%s8 + $0x1c] sm:$0xf]
        %v2790 = vld [vmem:[%s9] sm:$0xf]
        %v2791 = vld [vmem:[%s9 + $0x4] sm:$0xf]
        %v2792 = vld [vmem:[%s9 + $0x8] sm:$0xf]
        %v2793 = vld [vmem:[%s9 + $0xc] sm:$0xf]
        %v2794 = vld [vmem:[%s9 + $0x10] sm:$0xf]
        %v2795 = vld [vmem:[%s9 + $0x14] sm:$0xf]
        %v2796 = vld [vmem:[%s9 + $0x18] sm:$0xf]
        %v2797 = vld [vmem:[%s9 + $0x1c] sm:$0xf]
        %v2798 = vunpack.c.l.b16 %v2770
        %v2799 = vunpack.c.l.b16 %v2771
        %v2800 = vpack.c.b16 %v2798, %v2798
        %v2801 = vpack.c.b16 %v2799, %v2799
        %v2810 = vunpack.c.l.b16 %v2790
        %v2811 = vunpack.c.l.b16 %v2791
        %v2812 = vunpack.c.l.b16 %v2792
        %v2813 = vunpack.c.l.b16 %v2793
        %v2814 = vunpack.c.l.b16 %v2794
        %v2815 = vunpack.c.l.b16 %v2795
        %v2816 = vunpack.c.l.b16 %v2796
        %v2817 = vunpack.c.l.b16 %v2797
        %v2818 = vpack.c.b16 %v2811, %v2810
        %v2819 = vpack.c.b16 %v2813, %v2812
        %v2820 = vpack.c.b16 %v2815, %v2814
        %v2821 = vpack.c.b16 %v2817, %v2816
        %v2827 = vsel %vm2670, %v2800, 0
        %v2830 = vsel %vm2670, %v2801, 0
        %2832 = vmatpush.bf16.msra.mxu0 0
        %2833 = vmatpush.bf16.msra.mxu0 0
        %2834 = vmatpush.bf16.msra.mxu0 0
        %2835 = vmatpush.bf16.msra.mxu0 0
        %2836 = vmatpush.bf16.msra.mxu0 %v2821
        %2837 = vmatpush.bf16.msra.mxu0 %v2820
        %2838 = vmatpush.bf16.msra.mxu0 %v2819
        %2839 = vmatpush.bf16.msra.mxu0 %v2818
        %2840 = vmatmul.bf16.gmra.mxu0 %v2827
        %v2841 = vpop.f32.mrf.mxu0
        %v2842 = vadd.f32 0.0, %v2841
        %v2843 = vpop.f32.mrf.mxu0
        %v2844 = vadd.f32 0.0, %v2843
        %2845 = vmatmul.bf16.gmra.mxu0 %v2827
        %v2846 = vpop.f32.mrf.mxu0
        %v2847 = vadd.f32 0.0, %v2846
        %v2848 = vpop.f32.mrf.mxu0
        %v2849 = vadd.f32 0.0, %v2848
        %2850 = vmatmul.bf16.gmra.mxu0 %v2827
        %v2851 = vpop.f32.mrf.mxu0
        %v2852 = vadd.f32 0.0, %v2851
        %v2853 = vpop.f32.mrf.mxu0
        %v2854 = vadd.f32 0.0, %v2853
        %2855 = vmatmul.bf16.gmra.mxu0 %v2827
        %v2856 = vpop.f32.mrf.mxu0
        %v2857 = vadd.f32 0.0, %v2856
        %v2858 = vpop.f32.mrf.mxu0
        %v2859 = vadd.f32 0.0, %v2858
        %2860 = vmatmul.bf16.gmra.mxu0 %v2830
        %v2861 = vpop.f32.mrf.mxu0
        %v2862 = vadd.f32 0.0, %v2861
        %v2863 = vpop.f32.mrf.mxu0
        %v2864 = vadd.f32 0.0, %v2863
        %2865 = vmatmul.bf16.gmra.mxu0 %v2830
        %v2866 = vpop.f32.mrf.mxu0
        %v2867 = vadd.f32 0.0, %v2866
        %v2868 = vpop.f32.mrf.mxu0
        %v2869 = vadd.f32 0.0, %v2868
        %2870 = vmatmul.bf16.gmra.mxu0 %v2830
        %v2871 = vpop.f32.mrf.mxu0
        %v2872 = vadd.f32 0.0, %v2871
        %v2873 = vpop.f32.mrf.mxu0
        %v2874 = vadd.f32 0.0, %v2873
        %2875 = vmatmul.bf16.gmra.mxu0 %v2830
        %v2876 = vpop.f32.mrf.mxu0
        %v2877 = vadd.f32 0.0, %v2876
        %v2878 = vpop.f32.mrf.mxu0
        %v2879 = vadd.f32 0.0, %v2878
        %2880 = vdwg.mxu0
        %v2889 = vunpack.c.l.b16 %v2782
        %v2890 = vunpack.c.l.b16 %v2783
        %v2891 = vunpack.c.l.b16 %v2784
        %v2892 = vunpack.c.l.b16 %v2785
        %v2893 = vunpack.c.l.b16 %v2786
        %v2894 = vunpack.c.l.b16 %v2787
        %v2895 = vunpack.c.l.b16 %v2788
        %v2896 = vunpack.c.l.b16 %v2789
        %v2897 = vpack.c.b16 %v2890, %v2889
        %v2898 = vpack.c.b16 %v2892, %v2891
        %v2899 = vpack.c.b16 %v2894, %v2893
        %v2900 = vpack.c.b16 %v2896, %v2895
        %v2906 = vsel %vm2670, %v2774, 0
        %v2909 = vsel %vm2670, %v2775, 0
        %v2912 = vsel %vm2670, %v2776, 0
        %v2915 = vsel %vm2670, %v2777, 0
        %v2918 = vsel %vm2670, %v2778, 0
        %v2921 = vsel %vm2670, %v2779, 0
        %v2924 = vsel %vm2670, %v2780, 0
        %v2927 = vsel %vm2670, %v2781, 0
        %2929 = vmatpush.bf16.msra.mxu0 0
        %2930 = vmatpush.bf16.msra.mxu0 0
        %2931 = vmatpush.bf16.msra.mxu0 0
        %2932 = vmatpush.bf16.msra.mxu0 0
        %2933 = vmatpush.bf16.msra.mxu0 %v2900
        %2934 = vmatpush.bf16.msra.mxu0 %v2899
        %2935 = vmatpush.bf16.msra.mxu0 %v2898
        %2936 = vmatpush.bf16.msra.mxu0 %v2897
        %2937 = vmatmul.bf16.gmra.mxu0 %v2906
        %v2938 = vpop.f32.mrf.mxu0
        %v2939 = vadd.f32 %v2842, %v2938
        %v2940 = vpop.f32.mrf.mxu0
        %v2941 = vadd.f32 %v2844, %v2940
        %2942 = vmatmul.bf16.gmra.mxu0 %v2909
        %v2943 = vpop.f32.mrf.mxu0
        %v2944 = vadd.f32 %v2847, %v2943
        %v2945 = vpop.f32.mrf.mxu0
        %v2946 = vadd.f32 %v2849, %v2945
        %2947 = vmatmul.bf16.gmra.mxu0 %v2912
        %v2948 = vpop.f32.mrf.mxu0
        %v2949 = vadd.f32 %v2852, %v2948
        %v2950 = vpop.f32.mrf.mxu0
        %v2951 = vadd.f32 %v2854, %v2950
        %2952 = vmatmul.bf16.gmra.mxu0 %v2915
        %v2953 = vpop.f32.mrf.mxu0
        %v2954 = vadd.f32 %v2857, %v2953
        %v2955 = vpop.f32.mrf.mxu0
        %v2956 = vadd.f32 %v2859, %v2955
        %2957 = vmatmul.bf16.gmra.mxu0 %v2918
        %v2958 = vpop.f32.mrf.mxu0
        %v2959 = vadd.f32 %v2862, %v2958
        %v2960 = vpop.f32.mrf.mxu0
        %v2961 = vadd.f32 %v2864, %v2960
        %2962 = vmatmul.bf16.gmra.mxu0 %v2921
        %v2963 = vpop.f32.mrf.mxu0
        %v2964 = vadd.f32 %v2867, %v2963
        %v2965 = vpop.f32.mrf.mxu0
        %v2966 = vadd.f32 %v2869, %v2965
        %2967 = vmatmul.bf16.gmra.mxu0 %v2924
        %v2968 = vpop.f32.mrf.mxu0
        %v2969 = vadd.f32 %v2872, %v2968
        %v2970 = vpop.f32.mrf.mxu0
        %v2971 = vadd.f32 %v2874, %v2970
        %2972 = vmatmul.bf16.gmra.mxu0 %v2927
        %v2973 = vpop.f32.mrf.mxu0
        %v2974 = vadd.f32 %v2877, %v2973
        %v2975 = vpop.f32.mrf.mxu0
        %v2976 = vadd.f32 %v2879, %v2975
        %2977 = vdwg.mxu0
        %v2978 = vld [vmem:[%s10] sm:$0x1]
        %v2980 = vperm.slane %v2978, 0
        %v2982 = vadd.f32 %v2939, %v2980
        %v2983 = vadd.f32 %v2941, %v2980
        %v2984 = vadd.f32 %v2944, %v2980
        %v2985 = vadd.f32 %v2946, %v2980
        %v2986 = vadd.f32 %v2949, %v2980
        %v2987 = vadd.f32 %v2951, %v2980
        %v2988 = vadd.f32 %v2954, %v2980
        %v2989 = vadd.f32 %v2956, %v2980
        %v2990 = vadd.f32 %v2959, %v2980
        %v2991 = vadd.f32 %v2961, %v2980
        %v2992 = vadd.f32 %v2964, %v2980
        %v2993 = vadd.f32 %v2966, %v2980
        %v2994 = vadd.f32 %v2969, %v2980
        %v2995 = vadd.f32 %v2971, %v2980
        %v2996 = vadd.f32 %v2974, %v2980
        %v2997 = vadd.f32 %v2976, %v2980
        %v2998 = vmul.f32 %v2982, 0.5
        %v2999 = vmul.f32 %v2983, 0.5
        %v3000 = vmul.f32 %v2984, 0.5
        %v3001 = vmul.f32 %v2985, 0.5
        %v3002 = vmul.f32 %v2986, 0.5
        %v3003 = vmul.f32 %v2987, 0.5
        %v3004 = vmul.f32 %v2988, 0.5
        %v3005 = vmul.f32 %v2989, 0.5
        %v3006 = vmul.f32 %v2990, 0.5
        %v3007 = vmul.f32 %v2991, 0.5
        %v3008 = vmul.f32 %v2992, 0.5
        %v3009 = vmul.f32 %v2993, 0.5
        %v3010 = vmul.f32 %v2994, 0.5
        %v3011 = vmul.f32 %v2995, 0.5
        %v3012 = vmul.f32 %v2996, 0.5
        %v3013 = vmul.f32 %v2997, 0.5
        %v3014 = vmul.f32 %v2982, 0.70710677
        %v3015 = vmul.f32 %v2983, 0.70710677
        %v3016 = vmul.f32 %v2984, 0.70710677
        %v3017 = vmul.f32 %v2985, 0.70710677
        %v3018 = vmul.f32 %v2986, 0.70710677
        %v3019 = vmul.f32 %v2987, 0.70710677
        %v3020 = vmul.f32 %v2988, 0.70710677
        %v3021 = vmul.f32 %v2989, 0.70710677
        %v3022 = vmul.f32 %v2990, 0.70710677
        %v3023 = vmul.f32 %v2991, 0.70710677
        %v3024 = vmul.f32 %v2992, 0.70710677
        %v3025 = vmul.f32 %v2993, 0.70710677
        %v3026 = vmul.f32 %v2994, 0.70710677
        %v3027 = vmul.f32 %v2995, 0.70710677
        %v3028 = vmul.f32 %v2996, 0.70710677
        %v3029 = vmul.f32 %v2997, 0.70710677
        %v3030 = vmul.f32 %v3014, %v3014
        %v3031 = vmin.f32 16.0, %v3030
        %v3032 = vmul.f32 %v3031, 2.1237322e-06
        %v3033 = vadd.f32 %v3032, 0.00028619796
        %v3034 = vmul.f32 %v3031, %v3033
        %v3035 = vadd.f32 %v3034, 0.0036580483
        %v3036 = vmul.f32 %v3031, %v3035
        %v3037 = vadd.f32 %v3036, 0.05243302
        %v3038 = vmul.f32 %v3031, %v3037
        %v3039 = vadd.f32 %v3038, 0.18741608
        %v3040 = vmul.f32 %v3031, %v3039
        %v3041 = vadd.f32 %v3040, 1.1283791
        %v3042 = vmul.f32 %v3014, %v3041
        %v3043 = vmul.f32 %v3031, 3.8918573e-05
        %v3044 = vadd.f32 %v3043, 0.001143296
        %v3045 = vmul.f32 %v3031, %v3044
        %v3046 = vadd.f32 %v3045, 0.014752088
        %v3047 = vmul.f32 %v3031, %v3046
        %v3048 = vadd.f32 %v3047, 0.112945676
        %v3049 = vmul.f32 %v3031, %v3048
        %v3050 = vadd.f32 %v3049, 0.4994258
        %v3051 = vmul.f32 %v3031, %v3050
        %v3052 = vadd.f32 %v3051, 1.0
        %v3053 = vrcp.pop %v3052
        %v3054 = vmul.f32 %v3052, %v3053
        %v3055 = vsub.f32 1.0, %v3054
        %v3056 = vmul.f32 %v3053, %v3055
        %v3057 = vadd.f32 %v3053, %v3056
        %vm3058 = vweird.f32 %v3052
        %vm3059 = vweird.f32 %v3053
        %vm3060 = vmor %vm3058, %vm3059
        %v3061 = vsel %vm3060, %v3053, %v3057
        %v3062 = vand.u32 2147483647, %v3052
        %vm3063 = vcmp.eq.f32.partialorder %v3062, 8.507059e+37
        %v3064 = vand.u32 %v3052, 2147483648
        %v3065 = vor.u32 1.1754944e-38, %v3064
        %v3066 = vsel %vm3063, %v3065, %v3061
        %v3067 = vmul.f32 %v3042, %v3066
        %v3068 = vmin.f32 %v3067, 1.0
        %v3069 = vmax.f32 %v3068, -1.0
        %v3070 = vmul.f32 %v3015, %v3015
        %v3071 = vmin.f32 16.0, %v3070
        %v3072 = vmul.f32 %v3071, 2.1237322e-06
        %v3073 = vadd.f32 %v3072, 0.00028619796
        %v3074 = vmul.f32 %v3071, %v3073
        %v3075 = vadd.f32 %v3074, 0.0036580483
        %v3076 = vmul.f32 %v3071, %v3075
        %v3077 = vadd.f32 %v3076, 0.05243302
        %v3078 = vmul.f32 %v3071, %v3077
        %v3079 = vadd.f32 %v3078, 0.18741608
        %v3080 = vmul.f32 %v3071, %v3079
        %v3081 = vadd.f32 %v3080, 1.1283791
        %v3082 = vmul.f32 %v3015, %v3081
        %v3083 = vmul.f32 %v3071, 3.8918573e-05
        %v3084 = vadd.f32 %v3083, 0.001143296
        %v3085 = vmul.f32 %v3071, %v3084
        %v3086 = vadd.f32 %v3085, 0.014752088
        %v3087 = vmul.f32 %v3071, %v3086
        %v3088 = vadd.f32 %v3087, 0.112945676
        %v3089 = vmul.f32 %v3071, %v3088
        %v3090 = vadd.f32 %v3089, 0.4994258
        %v3091 = vmul.f32 %v3071, %v3090
        %v3092 = vadd.f32 %v3091, 1.0
        %v3093 = vrcp.pop %v3092
        %v3094 = vmul.f32 %v3092, %v3093
        %v3095 = vsub.f32 1.0, %v3094
        %v3096 = vmul.f32 %v3093, %v3095
        %v3097 = vadd.f32 %v3093, %v3096
        %vm3098 = vweird.f32 %v3092
        %vm3099 = vweird.f32 %v3093
        %vm3100 = vmor %vm3098, %vm3099
        %v3101 = vsel %vm3100, %v3093, %v3097
        %v3102 = vand.u32 2147483647, %v3092
        %vm3103 = vcmp.eq.f32.partialorder %v3102, 8.507059e+37
        %v3104 = vand.u32 %v3092, 2147483648
        %v3105 = vor.u32 1.1754944e-38, %v3104
        %v3106 = vsel %vm3103, %v3105, %v3101
        %v3107 = vmul.f32 %v3082, %v3106
        %v3108 = vmin.f32 %v3107, 1.0
        %v3109 = vmax.f32 %v3108, -1.0
        %v3110 = vmul.f32 %v3016, %v3016
        %v3111 = vmin.f32 16.0, %v3110
        %v3112 = vmul.f32 %v3111, 2.1237322e-06
        %v3113 = vadd.f32 %v3112, 0.00028619796
        %v3114 = vmul.f32 %v3111, %v3113
        %v3115 = vadd.f32 %v3114, 0.0036580483
        %v3116 = vmul.f32 %v3111, %v3115
        %v3117 = vadd.f32 %v3116, 0.05243302
        %v3118 = vmul.f32 %v3111, %v3117
        %v3119 = vadd.f32 %v3118, 0.18741608
        %v3120 = vmul.f32 %v3111, %v3119
        %v3121 = vadd.f32 %v3120, 1.1283791
        %v3122 = vmul.f32 %v3016, %v3121
        %v3123 = vmul.f32 %v3111, 3.8918573e-05
        %v3124 = vadd.f32 %v3123, 0.001143296
        %v3125 = vmul.f32 %v3111, %v3124
        %v3126 = vadd.f32 %v3125, 0.014752088
        %v3127 = vmul.f32 %v3111, %v3126
        %v3128 = vadd.f32 %v3127, 0.112945676
        %v3129 = vmul.f32 %v3111, %v3128
        %v3130 = vadd.f32 %v3129, 0.4994258
        %v3131 = vmul.f32 %v3111, %v3130
        %v3132 = vadd.f32 %v3131, 1.0
        %v3133 = vrcp.pop %v3132
        %v3134 = vmul.f32 %v3132, %v3133
        %v3135 = vsub.f32 1.0, %v3134
        %v3136 = vmul.f32 %v3133, %v3135
        %v3137 = vadd.f32 %v3133, %v3136
        %vm3138 = vweird.f32 %v3132
        %vm3139 = vweird.f32 %v3133
        %vm3140 = vmor %vm3138, %vm3139
        %v3141 = vsel %vm3140, %v3133, %v3137
        %v3142 = vand.u32 2147483647, %v3132
        %vm3143 = vcmp.eq.f32.partialorder %v3142, 8.507059e+37
        %v3144 = vand.u32 %v3132, 2147483648
        %v3145 = vor.u32 1.1754944e-38, %v3144
        %v3146 = vsel %vm3143, %v3145, %v3141
        %v3147 = vmul.f32 %v3122, %v3146
        %v3148 = vmin.f32 %v3147, 1.0
        %v3149 = vmax.f32 %v3148, -1.0
        %v3150 = vmul.f32 %v3017, %v3017
        %v3151 = vmin.f32 16.0, %v3150
        %v3152 = vmul.f32 %v3151, 2.1237322e-06
        %v3153 = vadd.f32 %v3152, 0.00028619796
        %v3154 = vmul.f32 %v3151, %v3153
        %v3155 = vadd.f32 %v3154, 0.0036580483
        %v3156 = vmul.f32 %v3151, %v3155
        %v3157 = vadd.f32 %v3156, 0.05243302
        %v3158 = vmul.f32 %v3151, %v3157
        %v3159 = vadd.f32 %v3158, 0.18741608
        %v3160 = vmul.f32 %v3151, %v3159
        %v3161 = vadd.f32 %v3160, 1.1283791
        %v3162 = vmul.f32 %v3017, %v3161
        %v3163 = vmul.f32 %v3151, 3.8918573e-05
        %v3164 = vadd.f32 %v3163, 0.001143296
        %v3165 = vmul.f32 %v3151, %v3164
        %v3166 = vadd.f32 %v3165, 0.014752088
        %v3167 = vmul.f32 %v3151, %v3166
        %v3168 = vadd.f32 %v3167, 0.112945676
        %v3169 = vmul.f32 %v3151, %v3168
        %v3170 = vadd.f32 %v3169, 0.4994258
        %v3171 = vmul.f32 %v3151, %v3170
        %v3172 = vadd.f32 %v3171, 1.0
        %v3173 = vrcp.pop %v3172
        %v3174 = vmul.f32 %v3172, %v3173
        %v3175 = vsub.f32 1.0, %v3174
        %v3176 = vmul.f32 %v3173, %v3175
        %v3177 = vadd.f32 %v3173, %v3176
        %vm3178 = vweird.f32 %v3172
        %vm3179 = vweird.f32 %v3173
        %vm3180 = vmor %vm3178, %vm3179
        %v3181 = vsel %vm3180, %v3173, %v3177
        %v3182 = vand.u32 2147483647, %v3172
        %vm3183 = vcmp.eq.f32.partialorder %v3182, 8.507059e+37
        %v3184 = vand.u32 %v3172, 2147483648
        %v3185 = vor.u32 1.1754944e-38, %v3184
        %v3186 = vsel %vm3183, %v3185, %v3181
        %v3187 = vmul.f32 %v3162, %v3186
        %v3188 = vmin.f32 %v3187, 1.0
        %v3189 = vmax.f32 %v3188, -1.0
        %v3190 = vmul.f32 %v3018, %v3018
        %v3191 = vmin.f32 16.0, %v3190
        %v3192 = vmul.f32 %v3191, 2.1237322e-06
        %v3193 = vadd.f32 %v3192, 0.00028619796
        %v3194 = vmul.f32 %v3191, %v3193
        %v3195 = vadd.f32 %v3194, 0.0036580483
        %v3196 = vmul.f32 %v3191, %v3195
        %v3197 = vadd.f32 %v3196, 0.05243302
        %v3198 = vmul.f32 %v3191, %v3197
        %v3199 = vadd.f32 %v3198, 0.18741608
        %v3200 = vmul.f32 %v3191, %v3199
        %v3201 = vadd.f32 %v3200, 1.1283791
        %v3202 = vmul.f32 %v3018, %v3201
        %v3203 = vmul.f32 %v3191, 3.8918573e-05
        %v3204 = vadd.f32 %v3203, 0.001143296
        %v3205 = vmul.f32 %v3191, %v3204
        %v3206 = vadd.f32 %v3205, 0.014752088
        %v3207 = vmul.f32 %v3191, %v3206
        %v3208 = vadd.f32 %v3207, 0.112945676
        %v3209 = vmul.f32 %v3191, %v3208
        %v3210 = vadd.f32 %v3209, 0.4994258
        %v3211 = vmul.f32 %v3191, %v3210
        %v3212 = vadd.f32 %v3211, 1.0
        %v3213 = vrcp.pop %v3212
        %v3214 = vmul.f32 %v3212, %v3213
        %v3215 = vsub.f32 1.0, %v3214
        %v3216 = vmul.f32 %v3213, %v3215
        %v3217 = vadd.f32 %v3213, %v3216
        %vm3218 = vweird.f32 %v3212
        %vm3219 = vweird.f32 %v3213
        %vm3220 = vmor %vm3218, %vm3219
        %v3221 = vsel %vm3220, %v3213, %v3217
        %v3222 = vand.u32 2147483647, %v3212
        %vm3223 = vcmp.eq.f32.partialorder %v3222, 8.507059e+37
        %v3224 = vand.u32 %v3212, 2147483648
        %v3225 = vor.u32 1.1754944e-38, %v3224
        %v3226 = vsel %vm3223, %v3225, %v3221
        %v3227 = vmul.f32 %v3202, %v3226
        %v3228 = vmin.f32 %v3227, 1.0
        %v3229 = vmax.f32 %v3228, -1.0
        %v3230 = vmul.f32 %v3019, %v3019
        %v3231 = vmin.f32 16.0, %v3230
        %v3232 = vmul.f32 %v3231, 2.1237322e-06
        %v3233 = vadd.f32 %v3232, 0.00028619796
        %v3234 = vmul.f32 %v3231, %v3233
        %v3235 = vadd.f32 %v3234, 0.0036580483
        %v3236 = vmul.f32 %v3231, %v3235
        %v3237 = vadd.f32 %v3236, 0.05243302
        %v3238 = vmul.f32 %v3231, %v3237
        %v3239 = vadd.f32 %v3238, 0.18741608
        %v3240 = vmul.f32 %v3231, %v3239
        %v3241 = vadd.f32 %v3240, 1.1283791
        %v3242 = vmul.f32 %v3019, %v3241
        %v3243 = vmul.f32 %v3231, 3.8918573e-05
        %v3244 = vadd.f32 %v3243, 0.001143296
        %v3245 = vmul.f32 %v3231, %v3244
        %v3246 = vadd.f32 %v3245, 0.014752088
        %v3247 = vmul.f32 %v3231, %v3246
        %v3248 = vadd.f32 %v3247, 0.112945676
        %v3249 = vmul.f32 %v3231, %v3248
        %v3250 = vadd.f32 %v3249, 0.4994258
        %v3251 = vmul.f32 %v3231, %v3250
        %v3252 = vadd.f32 %v3251, 1.0
        %v3253 = vrcp.pop %v3252
        %v3254 = vmul.f32 %v3252, %v3253
        %v3255 = vsub.f32 1.0, %v3254
        %v3256 = vmul.f32 %v3253, %v3255
        %v3257 = vadd.f32 %v3253, %v3256
        %vm3258 = vweird.f32 %v3252
        %vm3259 = vweird.f32 %v3253
        %vm3260 = vmor %vm3258, %vm3259
        %v3261 = vsel %vm3260, %v3253, %v3257
        %v3262 = vand.u32 2147483647, %v3252
        %vm3263 = vcmp.eq.f32.partialorder %v3262, 8.507059e+37
        %v3264 = vand.u32 %v3252, 2147483648
        %v3265 = vor.u32 1.1754944e-38, %v3264
        %v3266 = vsel %vm3263, %v3265, %v3261
        %v3267 = vmul.f32 %v3242, %v3266
        %v3268 = vmin.f32 %v3267, 1.0
        %v3269 = vmax.f32 %v3268, -1.0
        %v3270 = vmul.f32 %v3020, %v3020
        %v3271 = vmin.f32 16.0, %v3270
        %v3272 = vmul.f32 %v3271, 2.1237322e-06
        %v3273 = vadd.f32 %v3272, 0.00028619796
        %v3274 = vmul.f32 %v3271, %v3273
        %v3275 = vadd.f32 %v3274, 0.0036580483
        %v3276 = vmul.f32 %v3271, %v3275
        %v3277 = vadd.f32 %v3276, 0.05243302
        %v3278 = vmul.f32 %v3271, %v3277
        %v3279 = vadd.f32 %v3278, 0.18741608
        %v3280 = vmul.f32 %v3271, %v3279
        %v3281 = vadd.f32 %v3280, 1.1283791
        %v3282 = vmul.f32 %v3020, %v3281
        %v3283 = vmul.f32 %v3271, 3.8918573e-05
        %v3284 = vadd.f32 %v3283, 0.001143296
        %v3285 = vmul.f32 %v3271, %v3284
        %v3286 = vadd.f32 %v3285, 0.014752088
        %v3287 = vmul.f32 %v3271, %v3286
        %v3288 = vadd.f32 %v3287, 0.112945676
        %v3289 = vmul.f32 %v3271, %v3288
        %v3290 = vadd.f32 %v3289, 0.4994258
        %v3291 = vmul.f32 %v3271, %v3290
        %v3292 = vadd.f32 %v3291, 1.0
        %v3293 = vrcp.pop %v3292
        %v3294 = vmul.f32 %v3292, %v3293
        %v3295 = vsub.f32 1.0, %v3294
        %v3296 = vmul.f32 %v3293, %v3295
        %v3297 = vadd.f32 %v3293, %v3296
        %vm3298 = vweird.f32 %v3292
        %vm3299 = vweird.f32 %v3293
        %vm3300 = vmor %vm3298, %vm3299
        %v3301 = vsel %vm3300, %v3293, %v3297
        %v3302 = vand.u32 2147483647, %v3292
        %vm3303 = vcmp.eq.f32.partialorder %v3302, 8.507059e+37
        %v3304 = vand.u32 %v3292, 2147483648
        %v3305 = vor.u32 1.1754944e-38, %v3304
        %v3306 = vsel %vm3303, %v3305, %v3301
        %v3307 = vmul.f32 %v3282, %v3306
        %v3308 = vmin.f32 %v3307, 1.0
        %v3309 = vmax.f32 %v3308, -1.0
        %v3310 = vmul.f32 %v3021, %v3021
        %v3311 = vmin.f32 16.0, %v3310
        %v3312 = vmul.f32 %v3311, 2.1237322e-06
        %v3313 = vadd.f32 %v3312, 0.00028619796
        %v3314 = vmul.f32 %v3311, %v3313
        %v3315 = vadd.f32 %v3314, 0.0036580483
        %v3316 = vmul.f32 %v3311, %v3315
        %v3317 = vadd.f32 %v3316, 0.05243302
        %v3318 = vmul.f32 %v3311, %v3317
        %v3319 = vadd.f32 %v3318, 0.18741608
        %v3320 = vmul.f32 %v3311, %v3319
        %v3321 = vadd.f32 %v3320, 1.1283791
        %v3322 = vmul.f32 %v3021, %v3321
        %v3323 = vmul.f32 %v3311, 3.8918573e-05
        %v3324 = vadd.f32 %v3323, 0.001143296
        %v3325 = vmul.f32 %v3311, %v3324
        %v3326 = vadd.f32 %v3325, 0.014752088
        %v3327 = vmul.f32 %v3311, %v3326
        %v3328 = vadd.f32 %v3327, 0.112945676
        %v3329 = vmul.f32 %v3311, %v3328
        %v3330 = vadd.f32 %v3329, 0.4994258
        %v3331 = vmul.f32 %v3311, %v3330
        %v3332 = vadd.f32 %v3331, 1.0
        %v3333 = vrcp.pop %v3332
        %v3334 = vmul.f32 %v3332, %v3333
        %v3335 = vsub.f32 1.0, %v3334
        %v3336 = vmul.f32 %v3333, %v3335
        %v3337 = vadd.f32 %v3333, %v3336
        %vm3338 = vweird.f32 %v3332
        %vm3339 = vweird.f32 %v3333
        %vm3340 = vmor %vm3338, %vm3339
        %v3341 = vsel %vm3340, %v3333, %v3337
        %v3342 = vand.u32 2147483647, %v3332
        %vm3343 = vcmp.eq.f32.partialorder %v3342, 8.507059e+37
        %v3344 = vand.u32 %v3332, 2147483648
        %v3345 = vor.u32 1.1754944e-38, %v3344
        %v3346 = vsel %vm3343, %v3345, %v3341
        %v3347 = vmul.f32 %v3322, %v3346
        %v3348 = vmin.f32 %v3347, 1.0
        %v3349 = vmax.f32 %v3348, -1.0
        %v3350 = vmul.f32 %v3022, %v3022
        %v3351 = vmin.f32 16.0, %v3350
        %v3352 = vmul.f32 %v3351, 2.1237322e-06
        %v3353 = vadd.f32 %v3352, 0.00028619796
        %v3354 = vmul.f32 %v3351, %v3353
        %v3355 = vadd.f32 %v3354, 0.0036580483
        %v3356 = vmul.f32 %v3351, %v3355
        %v3357 = vadd.f32 %v3356, 0.05243302
        %v3358 = vmul.f32 %v3351, %v3357
        %v3359 = vadd.f32 %v3358, 0.18741608
        %v3360 = vmul.f32 %v3351, %v3359
        %v3361 = vadd.f32 %v3360, 1.1283791
        %v3362 = vmul.f32 %v3022, %v3361
        %v3363 = vmul.f32 %v3351, 3.8918573e-05
        %v3364 = vadd.f32 %v3363, 0.001143296
        %v3365 = vmul.f32 %v3351, %v3364
        %v3366 = vadd.f32 %v3365, 0.014752088
        %v3367 = vmul.f32 %v3351, %v3366
        %v3368 = vadd.f32 %v3367, 0.112945676
        %v3369 = vmul.f32 %v3351, %v3368
        %v3370 = vadd.f32 %v3369, 0.4994258
        %v3371 = vmul.f32 %v3351, %v3370
        %v3372 = vadd.f32 %v3371, 1.0
        %v3373 = vrcp.pop %v3372
        %v3374 = vmul.f32 %v3372, %v3373
        %v3375 = vsub.f32 1.0, %v3374
        %v3376 = vmul.f32 %v3373, %v3375
        %v3377 = vadd.f32 %v3373, %v3376
        %vm3378 = vweird.f32 %v3372
        %vm3379 = vweird.f32 %v3373
        %vm3380 = vmor %vm3378, %vm3379
        %v3381 = vsel %vm3380, %v3373, %v3377
        %v3382 = vand.u32 2147483647, %v3372
        %vm3383 = vcmp.eq.f32.partialorder %v3382, 8.507059e+37
        %v3384 = vand.u32 %v3372, 2147483648
        %v3385 = vor.u32 1.1754944e-38, %v3384
        %v3386 = vsel %vm3383, %v3385, %v3381
        %v3387 = vmul.f32 %v3362, %v3386
        %v3388 = vmin.f32 %v3387, 1.0
        %v3389 = vmax.f32 %v3388, -1.0
        %v3390 = vmul.f32 %v3023, %v3023
        %v3391 = vmin.f32 16.0, %v3390
        %v3392 = vmul.f32 %v3391, 2.1237322e-06
        %v3393 = vadd.f32 %v3392, 0.00028619796
        %v3394 = vmul.f32 %v3391, %v3393
        %v3395 = vadd.f32 %v3394, 0.0036580483
        %v3396 = vmul.f32 %v3391, %v3395
        %v3397 = vadd.f32 %v3396, 0.05243302
        %v3398 = vmul.f32 %v3391, %v3397
        %v3399 = vadd.f32 %v3398, 0.18741608
        %v3400 = vmul.f32 %v3391, %v3399
        %v3401 = vadd.f32 %v3400, 1.1283791
        %v3402 = vmul.f32 %v3023, %v3401
        %v3403 = vmul.f32 %v3391, 3.8918573e-05
        %v3404 = vadd.f32 %v3403, 0.001143296
        %v3405 = vmul.f32 %v3391, %v3404
        %v3406 = vadd.f32 %v3405, 0.014752088
        %v3407 = vmul.f32 %v3391, %v3406
        %v3408 = vadd.f32 %v3407, 0.112945676
        %v3409 = vmul.f32 %v3391, %v3408
        %v3410 = vadd.f32 %v3409, 0.4994258
        %v3411 = vmul.f32 %v3391, %v3410
        %v3412 = vadd.f32 %v3411, 1.0
        %v3413 = vrcp.pop %v3412
        %v3414 = vmul.f32 %v3412, %v3413
        %v3415 = vsub.f32 1.0, %v3414
        %v3416 = vmul.f32 %v3413, %v3415
        %v3417 = vadd.f32 %v3413, %v3416
        %vm3418 = vweird.f32 %v3412
        %vm3419 = vweird.f32 %v3413
        %vm3420 = vmor %vm3418, %vm3419
        %v3421 = vsel %vm3420, %v3413, %v3417
        %v3422 = vand.u32 2147483647, %v3412
        %vm3423 = vcmp.eq.f32.partialorder %v3422, 8.507059e+37
        %v3424 = vand.u32 %v3412, 2147483648
        %v3425 = vor.u32 1.1754944e-38, %v3424
        %v3426 = vsel %vm3423, %v3425, %v3421
        %v3427 = vmul.f32 %v3402, %v3426
        %v3428 = vmin.f32 %v3427, 1.0
        %v3429 = vmax.f32 %v3428, -1.0
        %v3430 = vmul.f32 %v3024, %v3024
        %v3431 = vmin.f32 16.0, %v3430
        %v3432 = vmul.f32 %v3431, 2.1237322e-06
        %v3433 = vadd.f32 %v3432, 0.00028619796
        %v3434 = vmul.f32 %v3431, %v3433
        %v3435 = vadd.f32 %v3434, 0.0036580483
        %v3436 = vmul.f32 %v3431, %v3435
        %v3437 = vadd.f32 %v3436, 0.05243302
        %v3438 = vmul.f32 %v3431, %v3437
        %v3439 = vadd.f32 %v3438, 0.18741608
        %v3440 = vmul.f32 %v3431, %v3439
        %v3441 = vadd.f32 %v3440, 1.1283791
        %v3442 = vmul.f32 %v3024, %v3441
        %v3443 = vmul.f32 %v3431, 3.8918573e-05
        %v3444 = vadd.f32 %v3443, 0.001143296
        %v3445 = vmul.f32 %v3431, %v3444
        %v3446 = vadd.f32 %v3445, 0.014752088
        %v3447 = vmul.f32 %v3431, %v3446
        %v3448 = vadd.f32 %v3447, 0.112945676
        %v3449 = vmul.f32 %v3431, %v3448
        %v3450 = vadd.f32 %v3449, 0.4994258
        %v3451 = vmul.f32 %v3431, %v3450
        %v3452 = vadd.f32 %v3451, 1.0
        %v3453 = vrcp.pop %v3452
        %v3454 = vmul.f32 %v3452, %v3453
        %v3455 = vsub.f32 1.0, %v3454
        %v3456 = vmul.f32 %v3453, %v3455
        %v3457 = vadd.f32 %v3453, %v3456
        %vm3458 = vweird.f32 %v3452
        %vm3459 = vweird.f32 %v3453
        %vm3460 = vmor %vm3458, %vm3459
        %v3461 = vsel %vm3460, %v3453, %v3457
        %v3462 = vand.u32 2147483647, %v3452
        %vm3463 = vcmp.eq.f32.partialorder %v3462, 8.507059e+37
        %v3464 = vand.u32 %v3452, 2147483648
        %v3465 = vor.u32 1.1754944e-38, %v3464
        %v3466 = vsel %vm3463, %v3465, %v3461
        %v3467 = vmul.f32 %v3442, %v3466
        %v3468 = vmin.f32 %v3467, 1.0
        %v3469 = vmax.f32 %v3468, -1.0
        %v3470 = vmul.f32 %v3025, %v3025
        %v3471 = vmin.f32 16.0, %v3470
        %v3472 = vmul.f32 %v3471, 2.1237322e-06
        %v3473 = vadd.f32 %v3472, 0.00028619796
        %v3474 = vmul.f32 %v3471, %v3473
        %v3475 = vadd.f32 %v3474, 0.0036580483
        %v3476 = vmul.f32 %v3471, %v3475
        %v3477 = vadd.f32 %v3476, 0.05243302
        %v3478 = vmul.f32 %v3471, %v3477
        %v3479 = vadd.f32 %v3478, 0.18741608
        %v3480 = vmul.f32 %v3471, %v3479
        %v3481 = vadd.f32 %v3480, 1.1283791
        %v3482 = vmul.f32 %v3025, %v3481
        %v3483 = vmul.f32 %v3471, 3.8918573e-05
        %v3484 = vadd.f32 %v3483, 0.001143296
        %v3485 = vmul.f32 %v3471, %v3484
        %v3486 = vadd.f32 %v3485, 0.014752088
        %v3487 = vmul.f32 %v3471, %v3486
        %v3488 = vadd.f32 %v3487, 0.112945676
        %v3489 = vmul.f32 %v3471, %v3488
        %v3490 = vadd.f32 %v3489, 0.4994258
        %v3491 = vmul.f32 %v3471, %v3490
        %v3492 = vadd.f32 %v3491, 1.0
        %v3493 = vrcp.pop %v3492
        %v3494 = vmul.f32 %v3492, %v3493
        %v3495 = vsub.f32 1.0, %v3494
        %v3496 = vmul.f32 %v3493, %v3495
        %v3497 = vadd.f32 %v3493, %v3496
        %vm3498 = vweird.f32 %v3492
        %vm3499 = vweird.f32 %v3493
        %vm3500 = vmor %vm3498, %vm3499
        %v3501 = vsel %vm3500, %v3493, %v3497
        %v3502 = vand.u32 2147483647, %v3492
        %vm3503 = vcmp.eq.f32.partialorder %v3502, 8.507059e+37
        %v3504 = vand.u32 %v3492, 2147483648
        %v3505 = vor.u32 1.1754944e-38, %v3504
        %v3506 = vsel %vm3503, %v3505, %v3501
        %v3507 = vmul.f32 %v3482, %v3506
        %v3508 = vmin.f32 %v3507, 1.0
        %v3509 = vmax.f32 %v3508, -1.0
        %v3510 = vmul.f32 %v3026, %v3026
        %v3511 = vmin.f32 16.0, %v3510
        %v3512 = vmul.f32 %v3511, 2.1237322e-06
        %v3513 = vadd.f32 %v3512, 0.00028619796
        %v3514 = vmul.f32 %v3511, %v3513
        %v3515 = vadd.f32 %v3514, 0.0036580483
        %v3516 = vmul.f32 %v3511, %v3515
        %v3517 = vadd.f32 %v3516, 0.05243302
        %v3518 = vmul.f32 %v3511, %v3517
        %v3519 = vadd.f32 %v3518, 0.18741608
        %v3520 = vmul.f32 %v3511, %v3519
        %v3521 = vadd.f32 %v3520, 1.1283791
        %v3522 = vmul.f32 %v3026, %v3521
        %v3523 = vmul.f32 %v3511, 3.8918573e-05
        %v3524 = vadd.f32 %v3523, 0.001143296
        %v3525 = vmul.f32 %v3511, %v3524
        %v3526 = vadd.f32 %v3525, 0.014752088
        %v3527 = vmul.f32 %v3511, %v3526
        %v3528 = vadd.f32 %v3527, 0.112945676
        %v3529 = vmul.f32 %v3511, %v3528
        %v3530 = vadd.f32 %v3529, 0.4994258
        %v3531 = vmul.f32 %v3511, %v3530
        %v3532 = vadd.f32 %v3531, 1.0
        %v3533 = vrcp.pop %v3532
        %v3534 = vmul.f32 %v3532, %v3533
        %v3535 = vsub.f32 1.0, %v3534
        %v3536 = vmul.f32 %v3533, %v3535
        %v3537 = vadd.f32 %v3533, %v3536
        %vm3538 = vweird.f32 %v3532
        %vm3539 = vweird.f32 %v3533
        %vm3540 = vmor %vm3538, %vm3539
        %v3541 = vsel %vm3540, %v3533, %v3537
        %v3542 = vand.u32 2147483647, %v3532
        %vm3543 = vcmp.eq.f32.partialorder %v3542, 8.507059e+37
        %v3544 = vand.u32 %v3532, 2147483648
        %v3545 = vor.u32 1.1754944e-38, %v3544
        %v3546 = vsel %vm3543, %v3545, %v3541
        %v3547 = vmul.f32 %v3522, %v3546
        %v3548 = vmin.f32 %v3547, 1.0
        %v3549 = vmax.f32 %v3548, -1.0
        %v3550 = vmul.f32 %v3027, %v3027
        %v3551 = vmin.f32 16.0, %v3550
        %v3552 = vmul.f32 %v3551, 2.1237322e-06
        %v3553 = vadd.f32 %v3552, 0.00028619796
        %v3554 = vmul.f32 %v3551, %v3553
        %v3555 = vadd.f32 %v3554, 0.0036580483
        %v3556 = vmul.f32 %v3551, %v3555
        %v3557 = vadd.f32 %v3556, 0.05243302
        %v3558 = vmul.f32 %v3551, %v3557
        %v3559 = vadd.f32 %v3558, 0.18741608
        %v3560 = vmul.f32 %v3551, %v3559
        %v3561 = vadd.f32 %v3560, 1.1283791
        %v3562 = vmul.f32 %v3027, %v3561
        %v3563 = vmul.f32 %v3551, 3.8918573e-05
        %v3564 = vadd.f32 %v3563, 0.001143296
        %v3565 = vmul.f32 %v3551, %v3564
        %v3566 = vadd.f32 %v3565, 0.014752088
        %v3567 = vmul.f32 %v3551, %v3566
        %v3568 = vadd.f32 %v3567, 0.112945676
        %v3569 = vmul.f32 %v3551, %v3568
        %v3570 = vadd.f32 %v3569, 0.4994258
        %v3571 = vmul.f32 %v3551, %v3570
        %v3572 = vadd.f32 %v3571, 1.0
        %v3573 = vrcp.pop %v3572
        %v3574 = vmul.f32 %v3572, %v3573
        %v3575 = vsub.f32 1.0, %v3574
        %v3576 = vmul.f32 %v3573, %v3575
        %v3577 = vadd.f32 %v3573, %v3576
        %vm3578 = vweird.f32 %v3572
        %vm3579 = vweird.f32 %v3573
        %vm3580 = vmor %vm3578, %vm3579
        %v3581 = vsel %vm3580, %v3573, %v3577
        %v3582 = vand.u32 2147483647, %v3572
        %vm3583 = vcmp.eq.f32.partialorder %v3582, 8.507059e+37
        %v3584 = vand.u32 %v3572, 2147483648
        %v3585 = vor.u32 1.1754944e-38, %v3584
        %v3586 = vsel %vm3583, %v3585, %v3581
        %v3587 = vmul.f32 %v3562, %v3586
        %v3588 = vmin.f32 %v3587, 1.0
        %v3589 = vmax.f32 %v3588, -1.0
        %v3590 = vmul.f32 %v3028, %v3028
        %v3591 = vmin.f32 16.0, %v3590
        %v3592 = vmul.f32 %v3591, 2.1237322e-06
        %v3593 = vadd.f32 %v3592, 0.00028619796
        %v3594 = vmul.f32 %v3591, %v3593
        %v3595 = vadd.f32 %v3594, 0.0036580483
        %v3596 = vmul.f32 %v3591, %v3595
        %v3597 = vadd.f32 %v3596, 0.05243302
        %v3598 = vmul.f32 %v3591, %v3597
        %v3599 = vadd.f32 %v3598, 0.18741608
        %v3600 = vmul.f32 %v3591, %v3599
        %v3601 = vadd.f32 %v3600, 1.1283791
        %v3602 = vmul.f32 %v3028, %v3601
        %v3603 = vmul.f32 %v3591, 3.8918573e-05
        %v3604 = vadd.f32 %v3603, 0.001143296
        %v3605 = vmul.f32 %v3591, %v3604
        %v3606 = vadd.f32 %v3605, 0.014752088
        %v3607 = vmul.f32 %v3591, %v3606
        %v3608 = vadd.f32 %v3607, 0.112945676
        %v3609 = vmul.f32 %v3591, %v3608
        %v3610 = vadd.f32 %v3609, 0.4994258
        %v3611 = vmul.f32 %v3591, %v3610
        %v3612 = vadd.f32 %v3611, 1.0
        %v3613 = vrcp.pop %v3612
        %v3614 = vmul.f32 %v3612, %v3613
        %v3615 = vsub.f32 1.0, %v3614
        %v3616 = vmul.f32 %v3613, %v3615
        %v3617 = vadd.f32 %v3613, %v3616
        %vm3618 = vweird.f32 %v3612
        %vm3619 = vweird.f32 %v3613
        %vm3620 = vmor %vm3618, %vm3619
        %v3621 = vsel %vm3620, %v3613, %v3617
        %v3622 = vand.u32 2147483647, %v3612
        %vm3623 = vcmp.eq.f32.partialorder %v3622, 8.507059e+37
        %v3624 = vand.u32 %v3612, 2147483648
        %v3625 = vor.u32 1.1754944e-38, %v3624
        %v3626 = vsel %vm3623, %v3625, %v3621
        %v3627 = vmul.f32 %v3602, %v3626
        %v3628 = vmin.f32 %v3627, 1.0
        %v3629 = vmax.f32 %v3628, -1.0
        %v3630 = vmul.f32 %v3029, %v3029
        %v3631 = vmin.f32 16.0, %v3630
        %v3632 = vmul.f32 %v3631, 2.1237322e-06
        %v3633 = vadd.f32 %v3632, 0.00028619796
        %v3634 = vmul.f32 %v3631, %v3633
        %v3635 = vadd.f32 %v3634, 0.0036580483
        %v3636 = vmul.f32 %v3631, %v3635
        %v3637 = vadd.f32 %v3636, 0.05243302
        %v3638 = vmul.f32 %v3631, %v3637
        %v3639 = vadd.f32 %v3638, 0.18741608
        %v3640 = vmul.f32 %v3631, %v3639
        %v3641 = vadd.f32 %v3640, 1.1283791
        %v3642 = vmul.f32 %v3029, %v3641
        %v3643 = vmul.f32 %v3631, 3.8918573e-05
        %v3644 = vadd.f32 %v3643, 0.001143296
        %v3645 = vmul.f32 %v3631, %v3644
        %v3646 = vadd.f32 %v3645, 0.014752088
        %v3647 = vmul.f32 %v3631, %v3646
        %v3648 = vadd.f32 %v3647, 0.112945676
        %v3649 = vmul.f32 %v3631, %v3648
        %v3650 = vadd.f32 %v3649, 0.4994258
        %v3651 = vmul.f32 %v3631, %v3650
        %v3652 = vadd.f32 %v3651, 1.0
        %v3653 = vrcp.pop %v3652
        %v3654 = vmul.f32 %v3652, %v3653
        %v3655 = vsub.f32 1.0, %v3654
        %v3656 = vmul.f32 %v3653, %v3655
        %v3657 = vadd.f32 %v3653, %v3656
        %vm3658 = vweird.f32 %v3652
        %vm3659 = vweird.f32 %v3653
        %vm3660 = vmor %vm3658, %vm3659
        %v3661 = vsel %vm3660, %v3653, %v3657
        %v3662 = vand.u32 2147483647, %v3652
        %vm3663 = vcmp.eq.f32.partialorder %v3662, 8.507059e+37
        %v3664 = vand.u32 %v3652, 2147483648
        %v3665 = vor.u32 1.1754944e-38, %v3664
        %v3666 = vsel %vm3663, %v3665, %v3661
        %v3667 = vmul.f32 %v3642, %v3666
        %v3668 = vmin.f32 %v3667, 1.0
        %v3669 = vmax.f32 %v3668, -1.0
        %v3670 = vadd.f32 %v3069, 1.0
        %v3671 = vadd.f32 %v3109, 1.0
        %v3672 = vadd.f32 %v3149, 1.0
        %v3673 = vadd.f32 %v3189, 1.0
        %v3674 = vadd.f32 %v3229, 1.0
        %v3675 = vadd.f32 %v3269, 1.0
        %v3676 = vadd.f32 %v3309, 1.0
        %v3677 = vadd.f32 %v3349, 1.0
        %v3678 = vadd.f32 %v3389, 1.0
        %v3679 = vadd.f32 %v3429, 1.0
        %v3680 = vadd.f32 %v3469, 1.0
        %v3681 = vadd.f32 %v3509, 1.0
        %v3682 = vadd.f32 %v3549, 1.0
        %v3683 = vadd.f32 %v3589, 1.0
        %v3684 = vadd.f32 %v3629, 1.0
        %v3685 = vadd.f32 %v3669, 1.0
        %v3686 = vmul.f32 %v2998, %v3670
        %v3687 = vmul.f32 %v2999, %v3671
        %v3688 = vmul.f32 %v3000, %v3672
        %v3689 = vmul.f32 %v3001, %v3673
        %v3690 = vmul.f32 %v3002, %v3674
        %v3691 = vmul.f32 %v3003, %v3675
        %v3692 = vmul.f32 %v3004, %v3676
        %v3693 = vmul.f32 %v3005, %v3677
        %v3694 = vmul.f32 %v3006, %v3678
        %v3695 = vmul.f32 %v3007, %v3679
        %v3696 = vmul.f32 %v3008, %v3680
        %v3697 = vmul.f32 %v3009, %v3681
        %v3698 = vmul.f32 %v3010, %v3682
        %v3699 = vmul.f32 %v3011, %v3683
        %v3700 = vmul.f32 %v3012, %v3684
        %v3701 = vmul.f32 %v3013, %v3685
        %v3702 = vpack.c.bf16 %v3687, %v3686
        %v3703 = vpack.c.bf16 %v3689, %v3688
        %v3704 = vpack.c.bf16 %v3691, %v3690
        %v3705 = vpack.c.bf16 %v3693, %v3692
        %v3706 = vpack.c.bf16 %v3695, %v3694
        %v3707 = vpack.c.bf16 %v3697, %v3696
        %v3708 = vpack.c.bf16 %v3699, %v3698
        %v3709 = vpack.c.bf16 %v3701, %v3700
        %v3710 = vld [vmem:[%s11] sm:$0xf]
        %v3711 = vld [vmem:[%s11 + $0x4] sm:$0xf]
        %v3712 = vld [vmem:[%s11 + $0x8] sm:$0xf]
        %v3713 = vld [vmem:[%s11 + $0xc] sm:$0xf]
        %v3714 = vld [vmem:[%s11 + $0x10] sm:$0xf]
        %v3715 = vld [vmem:[%s11 + $0x14] sm:$0xf]
        %v3716 = vld [vmem:[%s11 + $0x18] sm:$0xf]
        %v3717 = vld [vmem:[%s11 + $0x1c] sm:$0xf]
        %v3718 = vld [vmem:[%s12] sm:$0x1]
        %v3720 = vperm.slane %v3718, 0
        %v3730 = vunpack.c.l.b16 %v3710
        %v3731 = vunpack.c.l.b16 %v3711
        %v3732 = vunpack.c.l.b16 %v3712
        %v3733 = vunpack.c.l.b16 %v3713
        %v3734 = vunpack.c.l.b16 %v3714
        %v3735 = vunpack.c.l.b16 %v3715
        %v3736 = vunpack.c.l.b16 %v3716
        %v3737 = vunpack.c.l.b16 %v3717
        %v3738 = vpack.c.b16 %v3731, %v3730
        %v3739 = vpack.c.b16 %v3733, %v3732
        %v3740 = vpack.c.b16 %v3735, %v3734
        %v3741 = vpack.c.b16 %v3737, %v3736
        %v3747 = vsel %vm2670, %v3702, 0
        %v3750 = vsel %vm2670, %v3703, 0
        %v3753 = vsel %vm2670, %v3704, 0
        %v3756 = vsel %vm2670, %v3705, 0
        %v3759 = vsel %vm2670, %v3706, 0
        %v3762 = vsel %vm2670, %v3707, 0
        %v3765 = vsel %vm2670, %v3708, 0
        %v3768 = vsel %vm2670, %v3709, 0
        %3770 = vmatpush.bf16.msra.mxu0 0
        %3771 = vmatpush.bf16.msra.mxu0 0
        %3772 = vmatpush.bf16.msra.mxu0 0
        %3773 = vmatpush.bf16.msra.mxu0 0
        %3774 = vmatpush.bf16.msra.mxu0 %v3741
        %3775 = vmatpush.bf16.msra.mxu0 %v3740
        %3776 = vmatpush.bf16.msra.mxu0 %v3739
        %3777 = vmatpush.bf16.msra.mxu0 %v3738
        %3778 = vmatmul.bf16.gmra.mxu0 %v3747
        %v3779 = vpop.f32.mrf.mxu0
        %v3780 = vadd.f32 %v3720, %v3779
        %v3781 = vpop.f32.mrf.mxu0
        %v3782 = vadd.f32 %v3720, %v3781
        %3783 = vmatmul.bf16.gmra.mxu0 %v3750
        %v3784 = vpop.f32.mrf.mxu0
        %v3785 = vadd.f32 %v3720, %v3784
        %v3786 = vpop.f32.mrf.mxu0
        %v3787 = vadd.f32 %v3720, %v3786
        %3788 = vmatmul.bf16.gmra.mxu0 %v3753
        %v3789 = vpop.f32.mrf.mxu0
        %v3790 = vadd.f32 %v3720, %v3789
        %v3791 = vpop.f32.mrf.mxu0
        %v3792 = vadd.f32 %v3720, %v3791
        %3793 = vmatmul.bf16.gmra.mxu0 %v3756
        %v3794 = vpop.f32.mrf.mxu0
        %v3795 = vadd.f32 %v3720, %v3794
        %v3796 = vpop.f32.mrf.mxu0
        %v3797 = vadd.f32 %v3720, %v3796
        %3798 = vmatmul.bf16.gmra.mxu0 %v3759
        %v3799 = vpop.f32.mrf.mxu0
        %v3800 = vadd.f32 %v3720, %v3799
        %v3801 = vpop.f32.mrf.mxu0
        %v3802 = vadd.f32 %v3720, %v3801
        %3803 = vmatmul.bf16.gmra.mxu0 %v3762
        %v3804 = vpop.f32.mrf.mxu0
        %v3805 = vadd.f32 %v3720, %v3804
        %v3806 = vpop.f32.mrf.mxu0
        %v3807 = vadd.f32 %v3720, %v3806
        %3808 = vmatmul.bf16.gmra.mxu0 %v3765
        %v3809 = vpop.f32.mrf.mxu0
        %v3810 = vadd.f32 %v3720, %v3809
        %v3811 = vpop.f32.mrf.mxu0
        %v3812 = vadd.f32 %v3720, %v3811
        %3813 = vmatmul.bf16.gmra.mxu0 %v3768
        %v3814 = vpop.f32.mrf.mxu0
        %v3815 = vadd.f32 %v3720, %v3814
        %v3816 = vpop.f32.mrf.mxu0
        %v3817 = vadd.f32 %v3720, %v3816
        %3818 = vdwg.mxu0
        %v3819 = vmul.f32 %v3780, 0.5
        %v3820 = vmul.f32 %v3782, 0.5
        %v3821 = vmul.f32 %v3785, 0.5
        %v3822 = vmul.f32 %v3787, 0.5
        %v3823 = vmul.f32 %v3790, 0.5
        %v3824 = vmul.f32 %v3792, 0.5
        %v3825 = vmul.f32 %v3795, 0.5
        %v3826 = vmul.f32 %v3797, 0.5
        %v3827 = vmul.f32 %v3800, 0.5
        %v3828 = vmul.f32 %v3802, 0.5
        %v3829 = vmul.f32 %v3805, 0.5
        %v3830 = vmul.f32 %v3807, 0.5
        %v3831 = vmul.f32 %v3810, 0.5
        %v3832 = vmul.f32 %v3812, 0.5
        %v3833 = vmul.f32 %v3815, 0.5
        %v3834 = vmul.f32 %v3817, 0.5
        %v3835 = vmul.f32 %v3780, 0.70710677
        %v3836 = vmul.f32 %v3782, 0.70710677
        %v3837 = vmul.f32 %v3785, 0.70710677
        %v3838 = vmul.f32 %v3787, 0.70710677
        %v3839 = vmul.f32 %v3790, 0.70710677
        %v3840 = vmul.f32 %v3792, 0.70710677
        %v3841 = vmul.f32 %v3795, 0.70710677
        %v3842 = vmul.f32 %v3797, 0.70710677
        %v3843 = vmul.f32 %v3800, 0.70710677
        %v3844 = vmul.f32 %v3802, 0.70710677
        %v3845 = vmul.f32 %v3805, 0.70710677
        %v3846 = vmul.f32 %v3807, 0.70710677
        %v3847 = vmul.f32 %v3810, 0.70710677
        %v3848 = vmul.f32 %v3812, 0.70710677
        %v3849 = vmul.f32 %v3815, 0.70710677
        %v3850 = vmul.f32 %v3817, 0.70710677
        %v3851 = vmul.f32 %v3835, %v3835
        %v3852 = vmin.f32 16.0, %v3851
        %v3853 = vmul.f32 %v3852, 2.1237322e-06
        %v3854 = vadd.f32 %v3853, 0.00028619796
        %v3855 = vmul.f32 %v3852, %v3854
        %v3856 = vadd.f32 %v3855, 0.0036580483
        %v3857 = vmul.f32 %v3852, %v3856
        %v3858 = vadd.f32 %v3857, 0.05243302
        %v3859 = vmul.f32 %v3852, %v3858
        %v3860 = vadd.f32 %v3859, 0.18741608
        %v3861 = vmul.f32 %v3852, %v3860
        %v3862 = vadd.f32 %v3861, 1.1283791
        %v3863 = vmul.f32 %v3835, %v3862
        %v3864 = vmul.f32 %v3852, 3.8918573e-05
        %v3865 = vadd.f32 %v3864, 0.001143296
        %v3866 = vmul.f32 %v3852, %v3865
        %v3867 = vadd.f32 %v3866, 0.014752088
        %v3868 = vmul.f32 %v3852, %v3867
        %v3869 = vadd.f32 %v3868, 0.112945676
        %v3870 = vmul.f32 %v3852, %v3869
        %v3871 = vadd.f32 %v3870, 0.4994258
        %v3872 = vmul.f32 %v3852, %v3871
        %v3873 = vadd.f32 %v3872, 1.0
        %v3874 = vrcp.pop %v3873
        %v3875 = vmul.f32 %v3873, %v3874
        %v3876 = vsub.f32 1.0, %v3875
        %v3877 = vmul.f32 %v3874, %v3876
        %v3878 = vadd.f32 %v3874, %v3877
        %vm3879 = vweird.f32 %v3873
        %vm3880 = vweird.f32 %v3874
        %vm3881 = vmor %vm3879, %vm3880
        %v3882 = vsel %vm3881, %v3874, %v3878
        %v3883 = vand.u32 2147483647, %v3873
        %vm3884 = vcmp.eq.f32.partialorder %v3883, 8.507059e+37
        %v3885 = vand.u32 %v3873, 2147483648
        %v3886 = vor.u32 1.1754944e-38, %v3885
        %v3887 = vsel %vm3884, %v3886, %v3882
        %v3888 = vmul.f32 %v3863, %v3887
        %v3889 = vmin.f32 %v3888, 1.0
        %v3890 = vmax.f32 %v3889, -1.0
        %v3891 = vmul.f32 %v3836, %v3836
        %v3892 = vmin.f32 16.0, %v3891
        %v3893 = vmul.f32 %v3892, 2.1237322e-06
        %v3894 = vadd.f32 %v3893, 0.00028619796
        %v3895 = vmul.f32 %v3892, %v3894
        %v3896 = vadd.f32 %v3895, 0.0036580483
        %v3897 = vmul.f32 %v3892, %v3896
        %v3898 = vadd.f32 %v3897, 0.05243302
        %v3899 = vmul.f32 %v3892, %v3898
        %v3900 = vadd.f32 %v3899, 0.18741608
        %v3901 = vmul.f32 %v3892, %v3900
        %v3902 = vadd.f32 %v3901, 1.1283791
        %v3903 = vmul.f32 %v3836, %v3902
        %v3904 = vmul.f32 %v3892, 3.8918573e-05
        %v3905 = vadd.f32 %v3904, 0.001143296
        %v3906 = vmul.f32 %v3892, %v3905
        %v3907 = vadd.f32 %v3906, 0.014752088
        %v3908 = vmul.f32 %v3892, %v3907
        %v3909 = vadd.f32 %v3908, 0.112945676
        %v3910 = vmul.f32 %v3892, %v3909
        %v3911 = vadd.f32 %v3910, 0.4994258
        %v3912 = vmul.f32 %v3892, %v3911
        %v3913 = vadd.f32 %v3912, 1.0
        %v3914 = vrcp.pop %v3913
        %v3915 = vmul.f32 %v3913, %v3914
        %v3916 = vsub.f32 1.0, %v3915
        %v3917 = vmul.f32 %v3914, %v3916
        %v3918 = vadd.f32 %v3914, %v3917
        %vm3919 = vweird.f32 %v3913
        %vm3920 = vweird.f32 %v3914
        %vm3921 = vmor %vm3919, %vm3920
        %v3922 = vsel %vm3921, %v3914, %v3918
        %v3923 = vand.u32 2147483647, %v3913
        %vm3924 = vcmp.eq.f32.partialorder %v3923, 8.507059e+37
        %v3925 = vand.u32 %v3913, 2147483648
        %v3926 = vor.u32 1.1754944e-38, %v3925
        %v3927 = vsel %vm3924, %v3926, %v3922
        %v3928 = vmul.f32 %v3903, %v3927
        %v3929 = vmin.f32 %v3928, 1.0
        %v3930 = vmax.f32 %v3929, -1.0
        %v3931 = vmul.f32 %v3837, %v3837
        %v3932 = vmin.f32 16.0, %v3931
        %v3933 = vmul.f32 %v3932, 2.1237322e-06
        %v3934 = vadd.f32 %v3933, 0.00028619796
        %v3935 = vmul.f32 %v3932, %v3934
        %v3936 = vadd.f32 %v3935, 0.0036580483
        %v3937 = vmul.f32 %v3932, %v3936
        %v3938 = vadd.f32 %v3937, 0.05243302
        %v3939 = vmul.f32 %v3932, %v3938
        %v3940 = vadd.f32 %v3939, 0.18741608
        %v3941 = vmul.f32 %v3932, %v3940
        %v3942 = vadd.f32 %v3941, 1.1283791
        %v3943 = vmul.f32 %v3837, %v3942
        %v3944 = vmul.f32 %v3932, 3.8918573e-05
        %v3945 = vadd.f32 %v3944, 0.001143296
        %v3946 = vmul.f32 %v3932, %v3945
        %v3947 = vadd.f32 %v3946, 0.014752088
        %v3948 = vmul.f32 %v3932, %v3947
        %v3949 = vadd.f32 %v3948, 0.112945676
        %v3950 = vmul.f32 %v3932, %v3949
        %v3951 = vadd.f32 %v3950, 0.4994258
        %v3952 = vmul.f32 %v3932, %v3951
        %v3953 = vadd.f32 %v3952, 1.0
        %v3954 = vrcp.pop %v3953
        %v3955 = vmul.f32 %v3953, %v3954
        %v3956 = vsub.f32 1.0, %v3955
        %v3957 = vmul.f32 %v3954, %v3956
        %v3958 = vadd.f32 %v3954, %v3957
        %vm3959 = vweird.f32 %v3953
        %vm3960 = vweird.f32 %v3954
        %vm3961 = vmor %vm3959, %vm3960
        %v3962 = vsel %vm3961, %v3954, %v3958
        %v3963 = vand.u32 2147483647, %v3953
        %vm3964 = vcmp.eq.f32.partialorder %v3963, 8.507059e+37
        %v3965 = vand.u32 %v3953, 2147483648
        %v3966 = vor.u32 1.1754944e-38, %v3965
        %v3967 = vsel %vm3964, %v3966, %v3962
        %v3968 = vmul.f32 %v3943, %v3967
        %v3969 = vmin.f32 %v3968, 1.0
        %v3970 = vmax.f32 %v3969, -1.0
        %v3971 = vmul.f32 %v3838, %v3838
        %v3972 = vmin.f32 16.0, %v3971
        %v3973 = vmul.f32 %v3972, 2.1237322e-06
        %v3974 = vadd.f32 %v3973, 0.00028619796
        %v3975 = vmul.f32 %v3972, %v3974
        %v3976 = vadd.f32 %v3975, 0.0036580483
        %v3977 = vmul.f32 %v3972, %v3976
        %v3978 = vadd.f32 %v3977, 0.05243302
        %v3979 = vmul.f32 %v3972, %v3978
        %v3980 = vadd.f32 %v3979, 0.18741608
        %v3981 = vmul.f32 %v3972, %v3980
        %v3982 = vadd.f32 %v3981, 1.1283791
        %v3983 = vmul.f32 %v3838, %v3982
        %v3984 = vmul.f32 %v3972, 3.8918573e-05
        %v3985 = vadd.f32 %v3984, 0.001143296
        %v3986 = vmul.f32 %v3972, %v3985
        %v3987 = vadd.f32 %v3986, 0.014752088
        %v3988 = vmul.f32 %v3972, %v3987
        %v3989 = vadd.f32 %v3988, 0.112945676
        %v3990 = vmul.f32 %v3972, %v3989
        %v3991 = vadd.f32 %v3990, 0.4994258
        %v3992 = vmul.f32 %v3972, %v3991
        %v3993 = vadd.f32 %v3992, 1.0
        %v3994 = vrcp.pop %v3993
        %v3995 = vmul.f32 %v3993, %v3994
        %v3996 = vsub.f32 1.0, %v3995
        %v3997 = vmul.f32 %v3994, %v3996
        %v3998 = vadd.f32 %v3994, %v3997
        %vm3999 = vweird.f32 %v3993
        %vm4000 = vweird.f32 %v3994
        %vm4001 = vmor %vm3999, %vm4000
        %v4002 = vsel %vm4001, %v3994, %v3998
        %v4003 = vand.u32 2147483647, %v3993
        %vm4004 = vcmp.eq.f32.partialorder %v4003, 8.507059e+37
        %v4005 = vand.u32 %v3993, 2147483648
        %v4006 = vor.u32 1.1754944e-38, %v4005
        %v4007 = vsel %vm4004, %v4006, %v4002
        %v4008 = vmul.f32 %v3983, %v4007
        %v4009 = vmin.f32 %v4008, 1.0
        %v4010 = vmax.f32 %v4009, -1.0
        %v4011 = vmul.f32 %v3839, %v3839
        %v4012 = vmin.f32 16.0, %v4011
        %v4013 = vmul.f32 %v4012, 2.1237322e-06
        %v4014 = vadd.f32 %v4013, 0.00028619796
        %v4015 = vmul.f32 %v4012, %v4014
        %v4016 = vadd.f32 %v4015, 0.0036580483
        %v4017 = vmul.f32 %v4012, %v4016
        %v4018 = vadd.f32 %v4017, 0.05243302
        %v4019 = vmul.f32 %v4012, %v4018
        %v4020 = vadd.f32 %v4019, 0.18741608
        %v4021 = vmul.f32 %v4012, %v4020
        %v4022 = vadd.f32 %v4021, 1.1283791
        %v4023 = vmul.f32 %v3839, %v4022
        %v4024 = vmul.f32 %v4012, 3.8918573e-05
        %v4025 = vadd.f32 %v4024, 0.001143296
        %v4026 = vmul.f32 %v4012, %v4025
        %v4027 = vadd.f32 %v4026, 0.014752088
        %v4028 = vmul.f32 %v4012, %v4027
        %v4029 = vadd.f32 %v4028, 0.112945676
        %v4030 = vmul.f32 %v4012, %v4029
        %v4031 = vadd.f32 %v4030, 0.4994258
        %v4032 = vmul.f32 %v4012, %v4031
        %v4033 = vadd.f32 %v4032, 1.0
        %v4034 = vrcp.pop %v4033
        %v4035 = vmul.f32 %v4033, %v4034
        %v4036 = vsub.f32 1.0, %v4035
        %v4037 = vmul.f32 %v4034, %v4036
        %v4038 = vadd.f32 %v4034, %v4037
        %vm4039 = vweird.f32 %v4033
        %vm4040 = vweird.f32 %v4034
        %vm4041 = vmor %vm4039, %vm4040
        %v4042 = vsel %vm4041, %v4034, %v4038
        %v4043 = vand.u32 2147483647, %v4033
        %vm4044 = vcmp.eq.f32.partialorder %v4043, 8.507059e+37
        %v4045 = vand.u32 %v4033, 2147483648
        %v4046 = vor.u32 1.1754944e-38, %v4045
        %v4047 = vsel %vm4044, %v4046, %v4042
        %v4048 = vmul.f32 %v4023, %v4047
        %v4049 = vmin.f32 %v4048, 1.0
        %v4050 = vmax.f32 %v4049, -1.0
        %v4051 = vmul.f32 %v3840, %v3840
        %v4052 = vmin.f32 16.0, %v4051
        %v4053 = vmul.f32 %v4052, 2.1237322e-06
        %v4054 = vadd.f32 %v4053, 0.00028619796
        %v4055 = vmul.f32 %v4052, %v4054
        %v4056 = vadd.f32 %v4055, 0.0036580483
        %v4057 = vmul.f32 %v4052, %v4056
        %v4058 = vadd.f32 %v4057, 0.05243302
        %v4059 = vmul.f32 %v4052, %v4058
        %v4060 = vadd.f32 %v4059, 0.18741608
        %v4061 = vmul.f32 %v4052, %v4060
        %v4062 = vadd.f32 %v4061, 1.1283791
        %v4063 = vmul.f32 %v3840, %v4062
        %v4064 = vmul.f32 %v4052, 3.8918573e-05
        %v4065 = vadd.f32 %v4064, 0.001143296
        %v4066 = vmul.f32 %v4052, %v4065
        %v4067 = vadd.f32 %v4066, 0.014752088
        %v4068 = vmul.f32 %v4052, %v4067
        %v4069 = vadd.f32 %v4068, 0.112945676
        %v4070 = vmul.f32 %v4052, %v4069
        %v4071 = vadd.f32 %v4070, 0.4994258
        %v4072 = vmul.f32 %v4052, %v4071
        %v4073 = vadd.f32 %v4072, 1.0
        %v4074 = vrcp.pop %v4073
        %v4075 = vmul.f32 %v4073, %v4074
        %v4076 = vsub.f32 1.0, %v4075
        %v4077 = vmul.f32 %v4074, %v4076
        %v4078 = vadd.f32 %v4074, %v4077
        %vm4079 = vweird.f32 %v4073
        %vm4080 = vweird.f32 %v4074
        %vm4081 = vmor %vm4079, %vm4080
        %v4082 = vsel %vm4081, %v4074, %v4078
        %v4083 = vand.u32 2147483647, %v4073
        %vm4084 = vcmp.eq.f32.partialorder %v4083, 8.507059e+37
        %v4085 = vand.u32 %v4073, 2147483648
        %v4086 = vor.u32 1.1754944e-38, %v4085
        %v4087 = vsel %vm4084, %v4086, %v4082
        %v4088 = vmul.f32 %v4063, %v4087
        %v4089 = vmin.f32 %v4088, 1.0
        %v4090 = vmax.f32 %v4089, -1.0
        %v4091 = vmul.f32 %v3841, %v3841
        %v4092 = vmin.f32 16.0, %v4091
        %v4093 = vmul.f32 %v4092, 2.1237322e-06
        %v4094 = vadd.f32 %v4093, 0.00028619796
        %v4095 = vmul.f32 %v4092, %v4094
        %v4096 = vadd.f32 %v4095, 0.0036580483
        %v4097 = vmul.f32 %v4092, %v4096
        %v4098 = vadd.f32 %v4097, 0.05243302
        %v4099 = vmul.f32 %v4092, %v4098
        %v4100 = vadd.f32 %v4099, 0.18741608
        %v4101 = vmul.f32 %v4092, %v4100
        %v4102 = vadd.f32 %v4101, 1.1283791
        %v4103 = vmul.f32 %v3841, %v4102
        %v4104 = vmul.f32 %v4092, 3.8918573e-05
        %v4105 = vadd.f32 %v4104, 0.001143296
        %v4106 = vmul.f32 %v4092, %v4105
        %v4107 = vadd.f32 %v4106, 0.014752088
        %v4108 = vmul.f32 %v4092, %v4107
        %v4109 = vadd.f32 %v4108, 0.112945676
        %v4110 = vmul.f32 %v4092, %v4109
        %v4111 = vadd.f32 %v4110, 0.4994258
        %v4112 = vmul.f32 %v4092, %v4111
        %v4113 = vadd.f32 %v4112, 1.0
        %v4114 = vrcp.pop %v4113
        %v4115 = vmul.f32 %v4113, %v4114
        %v4116 = vsub.f32 1.0, %v4115
        %v4117 = vmul.f32 %v4114, %v4116
        %v4118 = vadd.f32 %v4114, %v4117
        %vm4119 = vweird.f32 %v4113
        %vm4120 = vweird.f32 %v4114
        %vm4121 = vmor %vm4119, %vm4120
        %v4122 = vsel %vm4121, %v4114, %v4118
        %v4123 = vand.u32 2147483647, %v4113
        %vm4124 = vcmp.eq.f32.partialorder %v4123, 8.507059e+37
        %v4125 = vand.u32 %v4113, 2147483648
        %v4126 = vor.u32 1.1754944e-38, %v4125
        %v4127 = vsel %vm4124, %v4126, %v4122
        %v4128 = vmul.f32 %v4103, %v4127
        %v4129 = vmin.f32 %v4128, 1.0
        %v4130 = vmax.f32 %v4129, -1.0
        %v4131 = vmul.f32 %v3842, %v3842
        %v4132 = vmin.f32 16.0, %v4131
        %v4133 = vmul.f32 %v4132, 2.1237322e-06
        %v4134 = vadd.f32 %v4133, 0.00028619796
        %v4135 = vmul.f32 %v4132, %v4134
        %v4136 = vadd.f32 %v4135, 0.0036580483
        %v4137 = vmul.f32 %v4132, %v4136
        %v4138 = vadd.f32 %v4137, 0.05243302
        %v4139 = vmul.f32 %v4132, %v4138
        %v4140 = vadd.f32 %v4139, 0.18741608
        %v4141 = vmul.f32 %v4132, %v4140
        %v4142 = vadd.f32 %v4141, 1.1283791
        %v4143 = vmul.f32 %v3842, %v4142
        %v4144 = vmul.f32 %v4132, 3.8918573e-05
        %v4145 = vadd.f32 %v4144, 0.001143296
        %v4146 = vmul.f32 %v4132, %v4145
        %v4147 = vadd.f32 %v4146, 0.014752088
        %v4148 = vmul.f32 %v4132, %v4147
        %v4149 = vadd.f32 %v4148, 0.112945676
        %v4150 = vmul.f32 %v4132, %v4149
        %v4151 = vadd.f32 %v4150, 0.4994258
        %v4152 = vmul.f32 %v4132, %v4151
        %v4153 = vadd.f32 %v4152, 1.0
        %v4154 = vrcp.pop %v4153
        %v4155 = vmul.f32 %v4153, %v4154
        %v4156 = vsub.f32 1.0, %v4155
        %v4157 = vmul.f32 %v4154, %v4156
        %v4158 = vadd.f32 %v4154, %v4157
        %vm4159 = vweird.f32 %v4153
        %vm4160 = vweird.f32 %v4154
        %vm4161 = vmor %vm4159, %vm4160
        %v4162 = vsel %vm4161, %v4154, %v4158
        %v4163 = vand.u32 2147483647, %v4153
        %vm4164 = vcmp.eq.f32.partialorder %v4163, 8.507059e+37
        %v4165 = vand.u32 %v4153, 2147483648
        %v4166 = vor.u32 1.1754944e-38, %v4165
        %v4167 = vsel %vm4164, %v4166, %v4162
        %v4168 = vmul.f32 %v4143, %v4167
        %v4169 = vmin.f32 %v4168, 1.0
        %v4170 = vmax.f32 %v4169, -1.0
        %v4171 = vmul.f32 %v3843, %v3843
        %v4172 = vmin.f32 16.0, %v4171
        %v4173 = vmul.f32 %v4172, 2.1237322e-06
        %v4174 = vadd.f32 %v4173, 0.00028619796
        %v4175 = vmul.f32 %v4172, %v4174
        %v4176 = vadd.f32 %v4175, 0.0036580483
        %v4177 = vmul.f32 %v4172, %v4176
        %v4178 = vadd.f32 %v4177, 0.05243302
        %v4179 = vmul.f32 %v4172, %v4178
        %v4180 = vadd.f32 %v4179, 0.18741608
        %v4181 = vmul.f32 %v4172, %v4180
        %v4182 = vadd.f32 %v4181, 1.1283791
        %v4183 = vmul.f32 %v3843, %v4182
        %v4184 = vmul.f32 %v4172, 3.8918573e-05
        %v4185 = vadd.f32 %v4184, 0.001143296
        %v4186 = vmul.f32 %v4172, %v4185
        %v4187 = vadd.f32 %v4186, 0.014752088
        %v4188 = vmul.f32 %v4172, %v4187
        %v4189 = vadd.f32 %v4188, 0.112945676
        %v4190 = vmul.f32 %v4172, %v4189
        %v4191 = vadd.f32 %v4190, 0.4994258
        %v4192 = vmul.f32 %v4172, %v4191
        %v4193 = vadd.f32 %v4192, 1.0
        %v4194 = vrcp.pop %v4193
        %v4195 = vmul.f32 %v4193, %v4194
        %v4196 = vsub.f32 1.0, %v4195
        %v4197 = vmul.f32 %v4194, %v4196
        %v4198 = vadd.f32 %v4194, %v4197
        %vm4199 = vweird.f32 %v4193
        %vm4200 = vweird.f32 %v4194
        %vm4201 = vmor %vm4199, %vm4200
        %v4202 = vsel %vm4201, %v4194, %v4198
        %v4203 = vand.u32 2147483647, %v4193
        %vm4204 = vcmp.eq.f32.partialorder %v4203, 8.507059e+37
        %v4205 = vand.u32 %v4193, 2147483648
        %v4206 = vor.u32 1.1754944e-38, %v4205
        %v4207 = vsel %vm4204, %v4206, %v4202
        %v4208 = vmul.f32 %v4183, %v4207
        %v4209 = vmin.f32 %v4208, 1.0
        %v4210 = vmax.f32 %v4209, -1.0
        %v4211 = vmul.f32 %v3844, %v3844
        %v4212 = vmin.f32 16.0, %v4211
        %v4213 = vmul.f32 %v4212, 2.1237322e-06
        %v4214 = vadd.f32 %v4213, 0.00028619796
        %v4215 = vmul.f32 %v4212, %v4214
        %v4216 = vadd.f32 %v4215, 0.0036580483
        %v4217 = vmul.f32 %v4212, %v4216
        %v4218 = vadd.f32 %v4217, 0.05243302
        %v4219 = vmul.f32 %v4212, %v4218
        %v4220 = vadd.f32 %v4219, 0.18741608
        %v4221 = vmul.f32 %v4212, %v4220
        %v4222 = vadd.f32 %v4221, 1.1283791
        %v4223 = vmul.f32 %v3844, %v4222
        %v4224 = vmul.f32 %v4212, 3.8918573e-05
        %v4225 = vadd.f32 %v4224, 0.001143296
        %v4226 = vmul.f32 %v4212, %v4225
        %v4227 = vadd.f32 %v4226, 0.014752088
        %v4228 = vmul.f32 %v4212, %v4227
        %v4229 = vadd.f32 %v4228, 0.112945676
        %v4230 = vmul.f32 %v4212, %v4229
        %v4231 = vadd.f32 %v4230, 0.4994258
        %v4232 = vmul.f32 %v4212, %v4231
        %v4233 = vadd.f32 %v4232, 1.0
        %v4234 = vrcp.pop %v4233
        %v4235 = vmul.f32 %v4233, %v4234
        %v4236 = vsub.f32 1.0, %v4235
        %v4237 = vmul.f32 %v4234, %v4236
        %v4238 = vadd.f32 %v4234, %v4237
        %vm4239 = vweird.f32 %v4233
        %vm4240 = vweird.f32 %v4234
        %vm4241 = vmor %vm4239, %vm4240
        %v4242 = vsel %vm4241, %v4234, %v4238
        %v4243 = vand.u32 2147483647, %v4233
        %vm4244 = vcmp.eq.f32.partialorder %v4243, 8.507059e+37
        %v4245 = vand.u32 %v4233, 2147483648
        %v4246 = vor.u32 1.1754944e-38, %v4245
        %v4247 = vsel %vm4244, %v4246, %v4242
        %v4248 = vmul.f32 %v4223, %v4247
        %v4249 = vmin.f32 %v4248, 1.0
        %v4250 = vmax.f32 %v4249, -1.0
        %v4251 = vmul.f32 %v3845, %v3845
        %v4252 = vmin.f32 16.0, %v4251
        %v4253 = vmul.f32 %v4252, 2.1237322e-06
        %v4254 = vadd.f32 %v4253, 0.00028619796
        %v4255 = vmul.f32 %v4252, %v4254
        %v4256 = vadd.f32 %v4255, 0.0036580483
        %v4257 = vmul.f32 %v4252, %v4256
        %v4258 = vadd.f32 %v4257, 0.05243302
        %v4259 = vmul.f32 %v4252, %v4258
        %v4260 = vadd.f32 %v4259, 0.18741608
        %v4261 = vmul.f32 %v4252, %v4260
        %v4262 = vadd.f32 %v4261, 1.1283791
        %v4263 = vmul.f32 %v3845, %v4262
        %v4264 = vmul.f32 %v4252, 3.8918573e-05
        %v4265 = vadd.f32 %v4264, 0.001143296
        %v4266 = vmul.f32 %v4252, %v4265
        %v4267 = vadd.f32 %v4266, 0.014752088
        %v4268 = vmul.f32 %v4252, %v4267
        %v4269 = vadd.f32 %v4268, 0.112945676
        %v4270 = vmul.f32 %v4252, %v4269
        %v4271 = vadd.f32 %v4270, 0.4994258
        %v4272 = vmul.f32 %v4252, %v4271
        %v4273 = vadd.f32 %v4272, 1.0
        %v4274 = vrcp.pop %v4273
        %v4275 = vmul.f32 %v4273, %v4274
        %v4276 = vsub.f32 1.0, %v4275
        %v4277 = vmul.f32 %v4274, %v4276
        %v4278 = vadd.f32 %v4274, %v4277
        %vm4279 = vweird.f32 %v4273
        %vm4280 = vweird.f32 %v4274
        %vm4281 = vmor %vm4279, %vm4280
        %v4282 = vsel %vm4281, %v4274, %v4278
        %v4283 = vand.u32 2147483647, %v4273
        %vm4284 = vcmp.eq.f32.partialorder %v4283, 8.507059e+37
        %v4285 = vand.u32 %v4273, 2147483648
        %v4286 = vor.u32 1.1754944e-38, %v4285
        %v4287 = vsel %vm4284, %v4286, %v4282
        %v4288 = vmul.f32 %v4263, %v4287
        %v4289 = vmin.f32 %v4288, 1.0
        %v4290 = vmax.f32 %v4289, -1.0
        %v4291 = vmul.f32 %v3846, %v3846
        %v4292 = vmin.f32 16.0, %v4291
        %v4293 = vmul.f32 %v4292, 2.1237322e-06
        %v4294 = vadd.f32 %v4293, 0.00028619796
        %v4295 = vmul.f32 %v4292, %v4294
        %v4296 = vadd.f32 %v4295, 0.0036580483
        %v4297 = vmul.f32 %v4292, %v4296
        %v4298 = vadd.f32 %v4297, 0.05243302
        %v4299 = vmul.f32 %v4292, %v4298
        %v4300 = vadd.f32 %v4299, 0.18741608
        %v4301 = vmul.f32 %v4292, %v4300
        %v4302 = vadd.f32 %v4301, 1.1283791
        %v4303 = vmul.f32 %v3846, %v4302
        %v4304 = vmul.f32 %v4292, 3.8918573e-05
        %v4305 = vadd.f32 %v4304, 0.001143296
        %v4306 = vmul.f32 %v4292, %v4305
        %v4307 = vadd.f32 %v4306, 0.014752088
        %v4308 = vmul.f32 %v4292, %v4307
        %v4309 = vadd.f32 %v4308, 0.112945676
        %v4310 = vmul.f32 %v4292, %v4309
        %v4311 = vadd.f32 %v4310, 0.4994258
        %v4312 = vmul.f32 %v4292, %v4311
        %v4313 = vadd.f32 %v4312, 1.0
        %v4314 = vrcp.pop %v4313
        %v4315 = vmul.f32 %v4313, %v4314
        %v4316 = vsub.f32 1.0, %v4315
        %v4317 = vmul.f32 %v4314, %v4316
        %v4318 = vadd.f32 %v4314, %v4317
        %vm4319 = vweird.f32 %v4313
        %vm4320 = vweird.f32 %v4314
        %vm4321 = vmor %vm4319, %vm4320
        %v4322 = vsel %vm4321, %v4314, %v4318
        %v4323 = vand.u32 2147483647, %v4313
        %vm4324 = vcmp.eq.f32.partialorder %v4323, 8.507059e+37
        %v4325 = vand.u32 %v4313, 2147483648
        %v4326 = vor.u32 1.1754944e-38, %v4325
        %v4327 = vsel %vm4324, %v4326, %v4322
        %v4328 = vmul.f32 %v4303, %v4327
        %v4329 = vmin.f32 %v4328, 1.0
        %v4330 = vmax.f32 %v4329, -1.0
        %v4331 = vmul.f32 %v3847, %v3847
        %v4332 = vmin.f32 16.0, %v4331
        %v4333 = vmul.f32 %v4332, 2.1237322e-06
        %v4334 = vadd.f32 %v4333, 0.00028619796
        %v4335 = vmul.f32 %v4332, %v4334
        %v4336 = vadd.f32 %v4335, 0.0036580483
        %v4337 = vmul.f32 %v4332, %v4336
        %v4338 = vadd.f32 %v4337, 0.05243302
        %v4339 = vmul.f32 %v4332, %v4338
        %v4340 = vadd.f32 %v4339, 0.18741608
        %v4341 = vmul.f32 %v4332, %v4340
        %v4342 = vadd.f32 %v4341, 1.1283791
        %v4343 = vmul.f32 %v3847, %v4342
        %v4344 = vmul.f32 %v4332, 3.8918573e-05
        %v4345 = vadd.f32 %v4344, 0.001143296
        %v4346 = vmul.f32 %v4332, %v4345
        %v4347 = vadd.f32 %v4346, 0.014752088
        %v4348 = vmul.f32 %v4332, %v4347
        %v4349 = vadd.f32 %v4348, 0.112945676
        %v4350 = vmul.f32 %v4332, %v4349
        %v4351 = vadd.f32 %v4350, 0.4994258
        %v4352 = vmul.f32 %v4332, %v4351
        %v4353 = vadd.f32 %v4352, 1.0
        %v4354 = vrcp.pop %v4353
        %v4355 = vmul.f32 %v4353, %v4354
        %v4356 = vsub.f32 1.0, %v4355
        %v4357 = vmul.f32 %v4354, %v4356
        %v4358 = vadd.f32 %v4354, %v4357
        %vm4359 = vweird.f32 %v4353
        %vm4360 = vweird.f32 %v4354
        %vm4361 = vmor %vm4359, %vm4360
        %v4362 = vsel %vm4361, %v4354, %v4358
        %v4363 = vand.u32 2147483647, %v4353
        %vm4364 = vcmp.eq.f32.partialorder %v4363, 8.507059e+37
        %v4365 = vand.u32 %v4353, 2147483648
        %v4366 = vor.u32 1.1754944e-38, %v4365
        %v4367 = vsel %vm4364, %v4366, %v4362
        %v4368 = vmul.f32 %v4343, %v4367
        %v4369 = vmin.f32 %v4368, 1.0
        %v4370 = vmax.f32 %v4369, -1.0
        %v4371 = vmul.f32 %v3848, %v3848
        %v4372 = vmin.f32 16.0, %v4371
        %v4373 = vmul.f32 %v4372, 2.1237322e-06
        %v4374 = vadd.f32 %v4373, 0.00028619796
        %v4375 = vmul.f32 %v4372, %v4374
        %v4376 = vadd.f32 %v4375, 0.0036580483
        %v4377 = vmul.f32 %v4372, %v4376
        %v4378 = vadd.f32 %v4377, 0.05243302
        %v4379 = vmul.f32 %v4372, %v4378
        %v4380 = vadd.f32 %v4379, 0.18741608
        %v4381 = vmul.f32 %v4372, %v4380
        %v4382 = vadd.f32 %v4381, 1.1283791
        %v4383 = vmul.f32 %v3848, %v4382
        %v4384 = vmul.f32 %v4372, 3.8918573e-05
        %v4385 = vadd.f32 %v4384, 0.001143296
        %v4386 = vmul.f32 %v4372, %v4385
        %v4387 = vadd.f32 %v4386, 0.014752088
        %v4388 = vmul.f32 %v4372, %v4387
        %v4389 = vadd.f32 %v4388, 0.112945676
        %v4390 = vmul.f32 %v4372, %v4389
        %v4391 = vadd.f32 %v4390, 0.4994258
        %v4392 = vmul.f32 %v4372, %v4391
        %v4393 = vadd.f32 %v4392, 1.0
        %v4394 = vrcp.pop %v4393
        %v4395 = vmul.f32 %v4393, %v4394
        %v4396 = vsub.f32 1.0, %v4395
        %v4397 = vmul.f32 %v4394, %v4396
        %v4398 = vadd.f32 %v4394, %v4397
        %vm4399 = vweird.f32 %v4393
        %vm4400 = vweird.f32 %v4394
        %vm4401 = vmor %vm4399, %vm4400
        %v4402 = vsel %vm4401, %v4394, %v4398
        %v4403 = vand.u32 2147483647, %v4393
        %vm4404 = vcmp.eq.f32.partialorder %v4403, 8.507059e+37
        %v4405 = vand.u32 %v4393, 2147483648
        %v4406 = vor.u32 1.1754944e-38, %v4405
        %v4407 = vsel %vm4404, %v4406, %v4402
        %v4408 = vmul.f32 %v4383, %v4407
        %v4409 = vmin.f32 %v4408, 1.0
        %v4410 = vmax.f32 %v4409, -1.0
        %v4411 = vmul.f32 %v3849, %v3849
        %v4412 = vmin.f32 16.0, %v4411
        %v4413 = vmul.f32 %v4412, 2.1237322e-06
        %v4414 = vadd.f32 %v4413, 0.00028619796
        %v4415 = vmul.f32 %v4412, %v4414
        %v4416 = vadd.f32 %v4415, 0.0036580483
        %v4417 = vmul.f32 %v4412, %v4416
        %v4418 = vadd.f32 %v4417, 0.05243302
        %v4419 = vmul.f32 %v4412, %v4418
        %v4420 = vadd.f32 %v4419, 0.18741608
        %v4421 = vmul.f32 %v4412, %v4420
        %v4422 = vadd.f32 %v4421, 1.1283791
        %v4423 = vmul.f32 %v3849, %v4422
        %v4424 = vmul.f32 %v4412, 3.8918573e-05
        %v4425 = vadd.f32 %v4424, 0.001143296
        %v4426 = vmul.f32 %v4412, %v4425
        %v4427 = vadd.f32 %v4426, 0.014752088
        %v4428 = vmul.f32 %v4412, %v4427
        %v4429 = vadd.f32 %v4428, 0.112945676
        %v4430 = vmul.f32 %v4412, %v4429
        %v4431 = vadd.f32 %v4430, 0.4994258
        %v4432 = vmul.f32 %v4412, %v4431
        %v4433 = vadd.f32 %v4432, 1.0
        %v4434 = vrcp.pop %v4433
        %v4435 = vmul.f32 %v4433, %v4434
        %v4436 = vsub.f32 1.0, %v4435
        %v4437 = vmul.f32 %v4434, %v4436
        %v4438 = vadd.f32 %v4434, %v4437
        %vm4439 = vweird.f32 %v4433
        %vm4440 = vweird.f32 %v4434
        %vm4441 = vmor %vm4439, %vm4440
        %v4442 = vsel %vm4441, %v4434, %v4438
        %v4443 = vand.u32 2147483647, %v4433
        %vm4444 = vcmp.eq.f32.partialorder %v4443, 8.507059e+37
        %v4445 = vand.u32 %v4433, 2147483648
        %v4446 = vor.u32 1.1754944e-38, %v4445
        %v4447 = vsel %vm4444, %v4446, %v4442
        %v4448 = vmul.f32 %v4423, %v4447
        %v4449 = vmin.f32 %v4448, 1.0
        %v4450 = vmax.f32 %v4449, -1.0
        %v4451 = vmul.f32 %v3850, %v3850
        %v4452 = vmin.f32 16.0, %v4451
        %v4453 = vmul.f32 %v4452, 2.1237322e-06
        %v4454 = vadd.f32 %v4453, 0.00028619796
        %v4455 = vmul.f32 %v4452, %v4454
        %v4456 = vadd.f32 %v4455, 0.0036580483
        %v4457 = vmul.f32 %v4452, %v4456
        %v4458 = vadd.f32 %v4457, 0.05243302
        %v4459 = vmul.f32 %v4452, %v4458
        %v4460 = vadd.f32 %v4459, 0.18741608
        %v4461 = vmul.f32 %v4452, %v4460
        %v4462 = vadd.f32 %v4461, 1.1283791
        %v4463 = vmul.f32 %v3850, %v4462
        %v4464 = vmul.f32 %v4452, 3.8918573e-05
        %v4465 = vadd.f32 %v4464, 0.001143296
        %v4466 = vmul.f32 %v4452, %v4465
        %v4467 = vadd.f32 %v4466, 0.014752088
        %v4468 = vmul.f32 %v4452, %v4467
        %v4469 = vadd.f32 %v4468, 0.112945676
        %v4470 = vmul.f32 %v4452, %v4469
        %v4471 = vadd.f32 %v4470, 0.4994258
        %v4472 = vmul.f32 %v4452, %v4471
        %v4473 = vadd.f32 %v4472, 1.0
        %v4474 = vrcp.pop %v4473
        %v4475 = vmul.f32 %v4473, %v4474
        %v4476 = vsub.f32 1.0, %v4475
        %v4477 = vmul.f32 %v4474, %v4476
        %v4478 = vadd.f32 %v4474, %v4477
        %vm4479 = vweird.f32 %v4473
        %vm4480 = vweird.f32 %v4474
        %vm4481 = vmor %vm4479, %vm4480
        %v4482 = vsel %vm4481, %v4474, %v4478
        %v4483 = vand.u32 2147483647, %v4473
        %vm4484 = vcmp.eq.f32.partialorder %v4483, 8.507059e+37
        %v4485 = vand.u32 %v4473, 2147483648
        %v4486 = vor.u32 1.1754944e-38, %v4485
        %v4487 = vsel %vm4484, %v4486, %v4482
        %v4488 = vmul.f32 %v4463, %v4487
        %v4489 = vmin.f32 %v4488, 1.0
        %v4490 = vmax.f32 %v4489, -1.0
        %v4491 = vadd.f32 %v3890, 1.0
        %v4492 = vadd.f32 %v3930, 1.0
        %v4493 = vadd.f32 %v3970, 1.0
        %v4494 = vadd.f32 %v4010, 1.0
        %v4495 = vadd.f32 %v4050, 1.0
        %v4496 = vadd.f32 %v4090, 1.0
        %v4497 = vadd.f32 %v4130, 1.0
        %v4498 = vadd.f32 %v4170, 1.0
        %v4499 = vadd.f32 %v4210, 1.0
        %v4500 = vadd.f32 %v4250, 1.0
        %v4501 = vadd.f32 %v4290, 1.0
        %v4502 = vadd.f32 %v4330, 1.0
        %v4503 = vadd.f32 %v4370, 1.0
        %v4504 = vadd.f32 %v4410, 1.0
        %v4505 = vadd.f32 %v4450, 1.0
        %v4506 = vadd.f32 %v4490, 1.0
        %v4507 = vmul.f32 %v3819, %v4491
        %v4508 = vmul.f32 %v3820, %v4492
        %v4509 = vmul.f32 %v3821, %v4493
        %v4510 = vmul.f32 %v3822, %v4494
        %v4511 = vmul.f32 %v3823, %v4495
        %v4512 = vmul.f32 %v3824, %v4496
        %v4513 = vmul.f32 %v3825, %v4497
        %v4514 = vmul.f32 %v3826, %v4498
        %v4515 = vmul.f32 %v3827, %v4499
        %v4516 = vmul.f32 %v3828, %v4500
        %v4517 = vmul.f32 %v3829, %v4501
        %v4518 = vmul.f32 %v3830, %v4502
        %v4519 = vmul.f32 %v3831, %v4503
        %v4520 = vmul.f32 %v3832, %v4504
        %v4521 = vmul.f32 %v3833, %v4505
        %v4522 = vmul.f32 %v3834, %v4506
        %v4523 = vpack.c.bf16 %v4508, %v4507
        %v4524 = vpack.c.bf16 %v4510, %v4509
        %v4525 = vpack.c.bf16 %v4512, %v4511
        %v4526 = vpack.c.bf16 %v4514, %v4513
        %v4527 = vpack.c.bf16 %v4516, %v4515
        %v4528 = vpack.c.bf16 %v4518, %v4517
        %v4529 = vpack.c.bf16 %v4520, %v4519
        %v4530 = vpack.c.bf16 %v4522, %v4521
        %v4531 = vld [vmem:[%s13] sm:$0xf]
        %v4532 = vld [vmem:[%s13 + $0x4] sm:$0xf]
        %v4533 = vld [vmem:[%s13 + $0x8] sm:$0xf]
        %v4534 = vld [vmem:[%s13 + $0xc] sm:$0xf]
        %v4535 = vld [vmem:[%s14] sm:$0x1]
        %v4537 = vperm.slane %v4535, 0
        %v4543 = vunpack.c.l.b16 %v4531
        %v4544 = vunpack.c.l.b16 %v4532
        %v4545 = vunpack.c.l.b16 %v4533
        %v4546 = vunpack.c.l.b16 %v4534
        %v4547 = vpack.c.b16 %v4544, %v4543
        %v4548 = vpack.c.b16 %v4546, %v4545
        %vm4551 = vcmask 261120
        %v4553 = vsel %vm4551, %v4523, 0
        %v4556 = vsel %vm4551, %v4524, 0
        %v4559 = vsel %vm4551, %v4525, 0
        %v4562 = vsel %vm4551, %v4526, 0
        %v4565 = vsel %vm4551, %v4527, 0
        %v4568 = vsel %vm4551, %v4528, 0
        %v4571 = vsel %vm4551, %v4529, 0
        %v4574 = vsel %vm4551, %v4530, 0
        %4576 = vmatpush.bf16.msra.mxu0 0
        %4577 = vmatpush.bf16.msra.mxu0 0
        %4578 = vmatpush.bf16.msra.mxu0 0
        %4579 = vmatpush.bf16.msra.mxu0 0
        %4580 = vmatpush.bf16.msra.mxu0 0
        %4581 = vmatpush.bf16.msra.mxu0 0
        %4582 = vmatpush.bf16.msra.mxu0 %v4548
        %4583 = vmatpush.bf16.msra.mxu0 %v4547
        %4584 = vmatmul.bf16.gmra.mxu0 %v4553
        %v4585 = vpop.f32.mrf.mxu0
        %v4586 = vadd.f32 %v4537, %v4585
        %v4587 = vpop.f32.mrf.mxu0
        %v4588 = vadd.f32 %v4537, %v4587
        %4589 = vmatmul.bf16.gmra.mxu0 %v4556
        %v4590 = vpop.f32.mrf.mxu0
        %v4591 = vadd.f32 %v4537, %v4590
        %v4592 = vpop.f32.mrf.mxu0
        %v4593 = vadd.f32 %v4537, %v4592
        %4594 = vmatmul.bf16.gmra.mxu0 %v4559
        %v4595 = vpop.f32.mrf.mxu0
        %v4596 = vadd.f32 %v4537, %v4595
        %v4597 = vpop.f32.mrf.mxu0
        %v4598 = vadd.f32 %v4537, %v4597
        %4599 = vmatmul.bf16.gmra.mxu0 %v4562
        %v4600 = vpop.f32.mrf.mxu0
        %v4601 = vadd.f32 %v4537, %v4600
        %v4602 = vpop.f32.mrf.mxu0
        %v4603 = vadd.f32 %v4537, %v4602
        %4604 = vmatmul.bf16.gmra.mxu0 %v4565
        %v4605 = vpop.f32.mrf.mxu0
        %v4606 = vadd.f32 %v4537, %v4605
        %v4607 = vpop.f32.mrf.mxu0
        %v4608 = vadd.f32 %v4537, %v4607
        %4609 = vmatmul.bf16.gmra.mxu0 %v4568
        %v4610 = vpop.f32.mrf.mxu0
        %v4611 = vadd.f32 %v4537, %v4610
        %v4612 = vpop.f32.mrf.mxu0
        %v4613 = vadd.f32 %v4537, %v4612
        %4614 = vmatmul.bf16.gmra.mxu0 %v4571
        %v4615 = vpop.f32.mrf.mxu0
        %v4616 = vadd.f32 %v4537, %v4615
        %v4617 = vpop.f32.mrf.mxu0
        %v4618 = vadd.f32 %v4537, %v4617
        %4619 = vmatmul.bf16.gmra.mxu0 %v4574
        %v4620 = vpop.f32.mrf.mxu0
        %v4621 = vadd.f32 %v4537, %v4620
        %v4622 = vpop.f32.mrf.mxu0
        %v4623 = vadd.f32 %v4537, %v4622
        %4624 = vdwg.mxu0
        %v4625 = vlaneseq
        %v4626 = vand.u32 %v4625, 127
        %vm4627 = vcmp.lt.s32.totalorder %v4626, 2
        %v4628 = vsel %vm4627, %v4586, -1e+30
        %v4629 = vsel %vm4627, %v4588, -1e+30
        %v4630 = vsel %vm4627, %v4591, -1e+30
        %v4631 = vsel %vm4627, %v4593, -1e+30
        %v4632 = vsel %vm4627, %v4596, -1e+30
        %v4633 = vsel %vm4627, %v4598, -1e+30
        %v4634 = vsel %vm4627, %v4601, -1e+30
        %v4635 = vsel %vm4627, %v4603, -1e+30
        %v4636 = vsel %vm4627, %v4606, -1e+30
        %v4637 = vsel %vm4627, %v4608, -1e+30
        %v4638 = vsel %vm4627, %v4611, -1e+30
        %v4639 = vsel %vm4627, %v4613, -1e+30
        %v4640 = vsel %vm4627, %v4616, -1e+30
        %v4641 = vsel %vm4627, %v4618, -1e+30
        %v4642 = vsel %vm4627, %v4621, -1e+30
        %v4643 = vsel %vm4627, %v4623, -1e+30
        %4644 = vmax.xlane.f32.xlu0 %v4628
        %v4645 = vpop.xlane.xlu0 %4644
        %4646 = vmax.xlane.f32.xlu0 %v4629
        %v4647 = vpop.xlane.xlu0 %4646
        %4648 = vmax.xlane.f32.xlu0 %v4630
        %v4649 = vpop.xlane.xlu0 %4648
        %4650 = vmax.xlane.f32.xlu0 %v4631
        %v4651 = vpop.xlane.xlu0 %4650
        %4652 = vmax.xlane.f32.xlu0 %v4632
        %v4653 = vpop.xlane.xlu0 %4652
        %4654 = vmax.xlane.f32.xlu0 %v4633
        %v4655 = vpop.xlane.xlu0 %4654
        %4656 = vmax.xlane.f32.xlu0 %v4634
        %v4657 = vpop.xlane.xlu0 %4656
        %4658 = vmax.xlane.f32.xlu0 %v4635
        %v4659 = vpop.xlane.xlu0 %4658
        %4660 = vmax.xlane.f32.xlu0 %v4636
        %v4661 = vpop.xlane.xlu0 %4660
        %4662 = vmax.xlane.f32.xlu0 %v4637
        %v4663 = vpop.xlane.xlu0 %4662
        %4664 = vmax.xlane.f32.xlu0 %v4638
        %v4665 = vpop.xlane.xlu0 %4664
        %4666 = vmax.xlane.f32.xlu0 %v4639
        %v4667 = vpop.xlane.xlu0 %4666
        %4668 = vmax.xlane.f32.xlu0 %v4640
        %v4669 = vpop.xlane.xlu0 %4668
        %4670 = vmax.xlane.f32.xlu0 %v4641
        %v4671 = vpop.xlane.xlu0 %4670
        %4672 = vmax.xlane.f32.xlu0 %v4642
        %v4673 = vpop.xlane.xlu0 %4672
        %4674 = vmax.xlane.f32.xlu0 %v4643
        %v4675 = vpop.xlane.xlu0 %4674
        %v4676 = vsub.f32 %v4628, %v4645
        %v4677 = vsub.f32 %v4629, %v4647
        %v4678 = vsub.f32 %v4630, %v4649
        %v4679 = vsub.f32 %v4631, %v4651
        %v4680 = vsub.f32 %v4632, %v4653
        %v4681 = vsub.f32 %v4633, %v4655
        %v4682 = vsub.f32 %v4634, %v4657
        %v4683 = vsub.f32 %v4635, %v4659
        %v4684 = vsub.f32 %v4636, %v4661
        %v4685 = vsub.f32 %v4637, %v4663
        %v4686 = vsub.f32 %v4638, %v4665
        %v4687 = vsub.f32 %v4639, %v4667
        %v4688 = vsub.f32 %v4640, %v4669
        %v4689 = vsub.f32 %v4641, %v4671
        %v4690 = vsub.f32 %v4642, %v4673
        %v4691 = vsub.f32 %v4643, %v4675
        %v4692 = vmul.f32 %v4676, 1.442695
        %v4693 = vpow.pop %v4692
        %v4694 = vmul.f32 %v4677, 1.442695
        %v4695 = vpow.pop %v4694
        %v4696 = vmul.f32 %v4678, 1.442695
        %v4697 = vpow.pop %v4696
        %v4698 = vmul.f32 %v4679, 1.442695
        %v4699 = vpow.pop %v4698
        %v4700 = vmul.f32 %v4680, 1.442695
        %v4701 = vpow.pop %v4700
        %v4702 = vmul.f32 %v4681, 1.442695
        %v4703 = vpow.pop %v4702
        %v4704 = vmul.f32 %v4682, 1.442695
        %v4705 = vpow.pop %v4704
        %v4706 = vmul.f32 %v4683, 1.442695
        %v4707 = vpow.pop %v4706
        %v4708 = vmul.f32 %v4684, 1.442695
        %v4709 = vpow.pop %v4708
        %v4710 = vmul.f32 %v4685, 1.442695
        %v4711 = vpow.pop %v4710
        %v4712 = vmul.f32 %v4686, 1.442695
        %v4713 = vpow.pop %v4712
        %v4714 = vmul.f32 %v4687, 1.442695
        %v4715 = vpow.pop %v4714
        %v4716 = vmul.f32 %v4688, 1.442695
        %v4717 = vpow.pop %v4716
        %v4718 = vmul.f32 %v4689, 1.442695
        %v4719 = vpow.pop %v4718
        %v4720 = vmul.f32 %v4690, 1.442695
        %v4721 = vpow.pop %v4720
        %v4722 = vmul.f32 %v4691, 1.442695
        %v4723 = vpow.pop %v4722
        %4724 = vadd.xlane.f32.xlu0 %v4693
        %v4725 = vpop.xlane.xlu0 %4724
        %4726 = vadd.xlane.f32.xlu0 %v4695
        %v4727 = vpop.xlane.xlu0 %4726
        %4728 = vadd.xlane.f32.xlu0 %v4697
        %v4729 = vpop.xlane.xlu0 %4728
        %4730 = vadd.xlane.f32.xlu0 %v4699
        %v4731 = vpop.xlane.xlu0 %4730
        %4732 = vadd.xlane.f32.xlu0 %v4701
        %v4733 = vpop.xlane.xlu0 %4732
        %4734 = vadd.xlane.f32.xlu0 %v4703
        %v4735 = vpop.xlane.xlu0 %4734
        %4736 = vadd.xlane.f32.xlu0 %v4705
        %v4737 = vpop.xlane.xlu0 %4736
        %4738 = vadd.xlane.f32.xlu0 %v4707
        %v4739 = vpop.xlane.xlu0 %4738
        %4740 = vadd.xlane.f32.xlu0 %v4709
        %v4741 = vpop.xlane.xlu0 %4740
        %4742 = vadd.xlane.f32.xlu0 %v4711
        %v4743 = vpop.xlane.xlu0 %4742
        %4744 = vadd.xlane.f32.xlu0 %v4713
        %v4745 = vpop.xlane.xlu0 %4744
        %4746 = vadd.xlane.f32.xlu0 %v4715
        %v4747 = vpop.xlane.xlu0 %4746
        %4748 = vadd.xlane.f32.xlu0 %v4717
        %v4749 = vpop.xlane.xlu0 %4748
        %4750 = vadd.xlane.f32.xlu0 %v4719
        %v4751 = vpop.xlane.xlu0 %4750
        %4752 = vadd.xlane.f32.xlu0 %v4721
        %v4753 = vpop.xlane.xlu0 %4752
        %4754 = vadd.xlane.f32.xlu0 %v4723
        %v4755 = vpop.xlane.xlu0 %4754
        %v4756 = vlog2.pop %v4725
        %v4757 = vmul.f32 %v4756, 0.6931472
        %v4758 = vlog2.pop %v4727
        %v4759 = vmul.f32 %v4758, 0.6931472
        %v4760 = vlog2.pop %v4729
        %v4761 = vmul.f32 %v4760, 0.6931472
        %v4762 = vlog2.pop %v4731
        %v4763 = vmul.f32 %v4762, 0.6931472
        %v4764 = vlog2.pop %v4733
        %v4765 = vmul.f32 %v4764, 0.6931472
        %v4766 = vlog2.pop %v4735
        %v4767 = vmul.f32 %v4766, 0.6931472
        %v4768 = vlog2.pop %v4737
        %v4769 = vmul.f32 %v4768, 0.6931472
        %v4770 = vlog2.pop %v4739
        %v4771 = vmul.f32 %v4770, 0.6931472
        %v4772 = vlog2.pop %v4741
        %v4773 = vmul.f32 %v4772, 0.6931472
        %v4774 = vlog2.pop %v4743
        %v4775 = vmul.f32 %v4774, 0.6931472
        %v4776 = vlog2.pop %v4745
        %v4777 = vmul.f32 %v4776, 0.6931472
        %v4778 = vlog2.pop %v4747
        %v4779 = vmul.f32 %v4778, 0.6931472
        %v4780 = vlog2.pop %v4749
        %v4781 = vmul.f32 %v4780, 0.6931472
        %v4782 = vlog2.pop %v4751
        %v4783 = vmul.f32 %v4782, 0.6931472
        %v4784 = vlog2.pop %v4753
        %v4785 = vmul.f32 %v4784, 0.6931472
        %v4786 = vlog2.pop %v4755
        %v4787 = vmul.f32 %v4786, 0.6931472
        %v4788 = vsub.f32 %v4676, %v4757
        %v4789 = vsub.f32 %v4677, %v4759
        %v4790 = vsub.f32 %v4678, %v4761
        %v4791 = vsub.f32 %v4679, %v4763
        %v4792 = vsub.f32 %v4680, %v4765
        %v4793 = vsub.f32 %v4681, %v4767
        %v4794 = vsub.f32 %v4682, %v4769
        %v4795 = vsub.f32 %v4683, %v4771
        %v4796 = vsub.f32 %v4684, %v4773
        %v4797 = vsub.f32 %v4685, %v4775
        %v4798 = vsub.f32 %v4686, %v4777
        %v4799 = vsub.f32 %v4687, %v4779
        %v4800 = vsub.f32 %v4688, %v4781
        %v4801 = vsub.f32 %v4689, %v4783
        %v4802 = vsub.f32 %v4690, %v4785
        %v4803 = vsub.f32 %v4691, %v4787
        %4804 = vst [vmem:[%s508] sm:$0xff] %v4788
        %4805 = vst [vmem:[%s508 + $0x8] sm:$0xff] %v4789
        %4806 = vst [vmem:[%s508 + $0x10] sm:$0xff] %v4790
        %4807 = vst [vmem:[%s508 + $0x18] sm:$0xff] %v4791
        %4808 = vst [vmem:[%s508 + $0x20] sm:$0xff] %v4792
        %4809 = vst [vmem:[%s508 + $0x28] sm:$0xff] %v4793
        %4810 = vst [vmem:[%s508 + $0x30] sm:$0xff] %v4794
        %4811 = vst [vmem:[%s508 + $0x38] sm:$0xff] %v4795
        %4812 = vst [vmem:[%s508 + $0x40] sm:$0xff] %v4796
        %4813 = vst [vmem:[%s508 + $0x48] sm:$0xff] %v4797
        %4814 = vst [vmem:[%s508 + $0x50] sm:$0xff] %v4798
        %4815 = vst [vmem:[%s508 + $0x58] sm:$0xff] %v4799
        %4816 = vst [vmem:[%s508 + $0x60] sm:$0xff] %v4800
        %4817 = vst [vmem:[%s508 + $0x68] sm:$0xff] %v4801
        %4818 = vst [vmem:[%s508 + $0x70] sm:$0xff] %v4802
        %4819 = vst [vmem:[%s508 + $0x78] sm:$0xff] %v4803
        %s4820 = sand.u32 %s362, 1
        %s4821 = scalar_lea.sflag [#allocation3], %s4820
        %s4822 = sand.u32 %s362, 1
        %s4823 = smul.addr %s4822, 128
        %s4824 = scalar_lea.vmem [#allocation2], %s4823
        // Predicated region
        $region81: #{tpu_custom_call.1} parent=79 // pred_check
          %p4825 = pneg %p372
        $region82: #{tpu_custom_call.1} parent=79 // pred_check_branch
          %4827 = sbr.rel (%p4825) target = $region84
        $region83: #{tpu_custom_call.1} parent=79 // pred_region
          %s4828 = smul.u32 2, %s29
          %4830 = vsyncadd %s4821, 0
          %s4831 = smul.addr %s4828, 8
          %s4832 = smul.addr %s4831, 8
          %s4833 = scalar_lea.hbm %s15, %s4832
          %s4834 = sshll.u32 %s4824, 4
          %s4835 = int_to_ptr.vmem [resolvable:$true] %s4834
          %s4836 = sshll.u32 %s4833, 4
          %s4837 = int_to_ptr.hbm [resolvable:$true] %s4836
          %4842 = dma.vmem_to_hbm [thread:$0]  %s4835, 2048, %s4837, %s4821, 128, 128, 8
        $region84: #{tpu_custom_call.1} parent=79 // pred_fallthru
          _
      $region80: #{tpu_custom_call.1} parent=5 // pred_fallthru
        _
      %p4843 = scmp.le.s32.totalorder 2, %s24
      // Predicated region
      $region85: #{tpu_custom_call.1} parent=5 // pred_check
        %p4844 = pneg %p4843
      $region86: #{tpu_custom_call.1} parent=5 // pred_check_branch
        %4846 = sbr.rel (%p4844) target = $region88
      $region87: #{tpu_custom_call.1} parent=5 // pred_region
        %s4847 = ssub.s32 %s24, 2
        // Predicated region
        $region89: #{tpu_custom_call.1} parent=87 // pred_check
          %p4848 = pneg %p378
        $region90: #{tpu_custom_call.1} parent=87 // pred_check_branch
          %4850 = sbr.rel (%p4848) target = $region92
        $region91: #{tpu_custom_call.1} parent=87 // pred_region
          %s4851 = sand.u32 %s363, 1
          %s4852 = scalar_lea.sflag [#allocation3], %s4851
          %s4853 = sand.u32 %s363, 1
          %s4854 = smul.addr %s4853, 128
          %s4855 = scalar_lea.vmem [#allocation2], %s4854
          %4857 = dma.done %s4852, 2048
        $region92: #{tpu_custom_call.1} parent=87 // pred_fallthru
          _
      $region88: #{tpu_custom_call.1} parent=5 // pred_fallthru
        _
    $region6: #{tpu_custom_call.1} parent=1 // loop_footer
      %s28 = sadd.s32 1, %s24
    $region7: #{tpu_custom_call.1} parent=1 // loop_footer_branch
      %23 = sbr.rel target = $region3
    $region8: #{tpu_custom_call.1} parent=1 // loop_exit
      _
    %4858 = vsyncpa [#allocation3], 1
    %s4859 = scalar_lea.sflag [#allocation3], 1
    %4860 = vsyncpa %s4859, 1

</llo_original>
